<compile_context>
chip_gen: v7x
topology: tpu7x:2x2x1
jax: 0.10.0
libtpu: 0.0.40
codegen_flags: <defaults>
</compile_context>

<pallas_src>
import math

import jax
import jax.numpy as jnp
from jax.experimental import pallas as pl
from jax.experimental.pallas import tpu as pltpu


# ----------------------------------------------------------------------------
# Hardware queries (guarded so the script never fails on API drift).
# ----------------------------------------------------------------------------
def _vmem_capacity_bytes():
    try:
        return int(pltpu.get_tpu_info().vmem_capacity_bytes)
    except Exception:
        return 64 * 2**20  # conservative fallback == v7x per-TC VMEM


def _bf16_vector_math_ok():
    """bf16 VPU/EUP exists on v6e/v7x; v5e and older are f32-only."""
    try:
        kind = jax.devices()[0].device_kind.lower()
    except Exception:
        return False
    return not any(tag in kind for tag in ("v2", "v3", "v4", "v5"))


# ----------------------------------------------------------------------------
# Pallas kernel: one full TransformerBlock for a (batch_tile, S, D) slab.
# ----------------------------------------------------------------------------
def make_block_kernel(*, bt, seq, d_model, num_heads, softmax_bf16, eps=1e-5):
    hd = d_model // num_heads
    rows = bt * seq
    nt_dims = (((1,), (1,)), ((), ()))  # contract head_dim of q and k (q @ k.T)

    def kernel(x_ref,
               wqkv_ref, bqkv_ref, wo_ref, bo_ref,
               g1_ref, beta1_ref,
               w1_ref, b1_ref, w2_ref, b2_ref,
               g2_ref, beta2_ref,
               o_ref, ctx_ref):
        # (bt, S, D) -> (bt*S, D): fold batch into the matmul M dimension.
        x = x_ref[...].reshape(rows, d_model)                     # f32
        xb = x.astype(jnp.bfloat16)

        # --- fused QKV projection: one MXU matmul with N = 3*D ---------------
        # (1/sqrt(head_dim) is already folded into the Q columns + Q bias.)
        qkv = jnp.dot(xb, wqkv_ref[...],
                      preferred_element_type=jnp.float32) + bqkv_ref[...]
        qkv_bf = qkv.astype(jnp.bfloat16)

        # --- multi-head self-attention ----------------------------------------
        # Static unroll is fine for small bt*num_heads (example: 4 heads).
        for b in range(bt):
            r0 = b * seq
            for h in range(num_heads):
                c0 = h * hd
                qh = qkv_bf[r0:r0 + seq, c0:c0 + hd]
                kh = qkv_bf[r0:r0 + seq, d_model + c0:d_model + c0 + hd]
                vh = qkv_bf[r0:r0 + seq, 2 * d_model + c0:2 * d_model + c0 + hd]

                # scores = (q / sqrt(hd)) @ k.T without an explicit transpose.
                s = jax.lax.dot_general(
                    qh, kh, dimension_numbers=nt_dims,
                    preferred_element_type=jnp.float32)
                m = jnp.max(s, axis=-1, keepdims=True)
                if softmax_bf16:
                    p = jnp.exp((s - m).astype(jnp.bfloat16))      # bf16 EUP
                    denom = jnp.sum(p.astype(jnp.float32), axis=-1,
                                    keepdims=True)
                    p_mm = p
                else:
                    p = jnp.exp(s - m)                             # f32 (v5e)
                    denom = jnp.sum(p, axis=-1, keepdims=True)
                    p_mm = p.astype(jnp.bfloat16)
                ctx = jnp.dot(p_mm, vh,
                              preferred_element_type=jnp.float32)  # (S, hd)
                # Normalize the (S, hd) context (cheaper than the (S, S) probs)
                # and write straight into the full-width ctx scratch.
                ctx_ref[r0:r0 + seq, c0:c0 + hd] = (
                    ctx * pl.reciprocal(denom, approx=True))

        # Single full-K W_o matmul (feeds the 256-wide MXU on v6e/v7x).
        attn = jnp.dot(ctx_ref[...].astype(jnp.bfloat16), wo_ref[...],
                       preferred_element_type=jnp.float32) + bo_ref[...]

        # --- residual + LayerNorm 1 (one-pass stats; dropout == identity) ----
        h1 = x + attn
        mu1 = jnp.mean(h1, axis=-1, keepdims=True)
        var1 = jnp.maximum(
            jnp.mean(h1 * h1, axis=-1, keepdims=True) - mu1 * mu1, 0.0)
        h1n = (h1 - mu1) * jax.lax.rsqrt(var1 + eps) * g1_ref[...] + beta1_ref[...]

        # --- feed-forward network (bf16 MXU operands, f32 accumulation) -------
        f = jnp.dot(h1n.astype(jnp.bfloat16), w1_ref[...],
                    preferred_element_type=jnp.float32) + b1_ref[...]
        f = jnp.maximum(f, 0.0)
        f = jnp.dot(f.astype(jnp.bfloat16), w2_ref[...],
                    preferred_element_type=jnp.float32) + b2_ref[...]

        # --- residual + LayerNorm 2 -------------------------------------------
        h2 = h1n + f
        mu2 = jnp.mean(h2, axis=-1, keepdims=True)
        var2 = jnp.maximum(
            jnp.mean(h2 * h2, axis=-1, keepdims=True) - mu2 * mu2, 0.0)
        out = (h2 - mu2) * jax.lax.rsqrt(var2 + eps) * g2_ref[...] + beta2_ref[...]

        o_ref[...] = out.reshape(bt, seq, d_model)

    return kernel


# ----------------------------------------------------------------------------
# VMEM budgeting + tile selection
# ----------------------------------------------------------------------------
def _estimate_vmem_bytes(bt, S, D, ff_dim, weight_bytes, weight_bufs):
    """Budget the in-kernel footprint: double-buffered I/O blocks, QKV f32+bf16
    copies, ctx scratch (+bf16 cast), one head's (S,S) scores, FFN hidden, a
    few (rows,D) f32 intermediates, resident weights, plus headroom."""
    rows = bt * S
    f32, bf16 = 4, 2
    act_io = 2 * 2 * rows * D * f32            # x-in + out blocks, double-buffered
    qkv = rows * 3 * D * (f32 + bf16)
    ctx = rows * D * (f32 + bf16)
    scores = S * S * (f32 + bf16)
    ffn = rows * ff_dim * (f32 + bf16)
    misc = 3 * rows * D * f32                  # attn / h1 / h1n style temps
    return (act_io + qkv + ctx + scores + ffn + misc
            + weight_bufs * weight_bytes + (4 << 20))


def _pick_batch_tile(B, S, D, ff_dim, weight_bytes, vmem_cap):
    """Largest divisor of B whose slab fits ~75% of the chip's VMEM budget;
    prefers >=2 grid steps (keeps both v7x TensorCores busy)."""
    if S % 8 != 0:
        return 1  # keep the (bt,S,D)->(bt*S,D) reshape sublane-aligned
    max_rows = 2048 if vmem_cap >= (100 << 20) else 1024
    budget = int(0.75 * vmem_cap)
    divisors = [bt for bt in range(1, B + 1) if B % bt == 0]
    feasible = [bt for bt in divisors
                if bt * S <= max_rows
                and _estimate_vmem_bytes(bt, S, D, ff_dim, weight_bytes, 1)
                <= budget]
    if not feasible:
        return 1
    multi = [bt for bt in feasible if B // bt >= 2]
    pool = multi if multi else feasible
    return max(pool)


# ----------------------------------------------------------------------------
# Wrapper
# ----------------------------------------------------------------------------
def _prepare_operands(p, num_heads):
    """Fuse QKV weights, fold the attention scale into Q (weights + bias) and
    cast matmul weights to bf16. Biases / LayerNorm params stay f32."""
    bf16 = jnp.bfloat16
    d_model = p["wq"].shape[0]
    scale = 1.0 / math.sqrt(d_model // num_heads)
    wqkv = jnp.concatenate(
        [p["wq"] * scale, p["wk"], p["wv"]], axis=1).astype(bf16)
    bqkv = jnp.concatenate([p["bq"] * scale, p["bk"], p["bv"]], axis=1)
    return (wqkv, bqkv,
            p["wo"].astype(bf16), p["bo"],
            p["g1"], p["beta1"],
            p["w1"].astype(bf16), p["b1"],
            p["w2"].astype(bf16), p["b2"],
            p["g2"], p["beta2"])


def _build_call(ops, kernel, B, S, D, bt, vmem_limit, single_buffer_weights):
    rows = bt * S
    x_spec = pl.BlockSpec((bt, S, D), lambda b: (b, 0, 0))
    # Weights/biases are grid-invariant (constant index_map) -> stay resident.
    if single_buffer_weights:
        param_specs = [pl.BlockSpec(p.shape, lambda b: (0, 0),
                                    pipeline_mode=pl.Buffered(1)) for p in ops]
    else:
        param_specs = [pl.BlockSpec(p.shape, lambda b: (0, 0)) for p in ops]
    out_spec = pl.BlockSpec((bt, S, D), lambda b: (b, 0, 0))
    return pl.pallas_call(
        kernel,
        out_shape=jax.ShapeDtypeStruct((B, S, D), jnp.float32),
        grid_spec=pltpu.PrefetchScalarGridSpec(
            num_scalar_prefetch=0,
            grid=(B // bt,),
            in_specs=[x_spec] + param_specs,
            out_specs=out_spec,
            scratch_shapes=[pltpu.VMEM((rows, D), jnp.float32)],
        ),
        compiler_params=pltpu.CompilerParams(
            dimension_semantics=("parallel",),   # batch tiles are independent
            vmem_limit_bytes=vmem_limit,
        ),
    )


def transformer_block_pallas(x, params, num_heads, *, batch_tile=None):
    """x: (B, S, D) float32; params: dict of f32 weights (see init_params)."""
    B, S, D = x.shape
    assert D % num_heads == 0
    ff_dim = params["w1"].shape[1]

    ops = _prepare_operands(params, num_heads)
    weight_bytes = sum(int(p.size) * p.dtype.itemsize for p in ops)
    vmem_cap = _vmem_capacity_bytes()

    bt = (batch_tile if batch_tile is not None
          else _pick_batch_tile(B, S, D, ff_dim, weight_bytes, vmem_cap))
    assert B % bt == 0

    est = _estimate_vmem_bytes(bt, S, D, ff_dim, weight_bytes, weight_bufs=1)
    # Clamp the scoped limit to the chip's physical VMEM (leave DMA headroom);
    # on v7x this lands in the ~58 MiB range instead of an invalid 100 MiB.
    vmem_limit = int(min(vmem_cap - (6 << 20), max(32 << 20, est)))
    vmem_limit = max(vmem_limit, 16 << 20)

    kernel = make_block_kernel(bt=bt, seq=S, d_model=D, num_heads=num_heads,
                               softmax_bf16=_bf16_vector_math_ok())
    try:
        fn = _build_call(ops, kernel, B, S, D, bt, vmem_limit,
                         single_buffer_weights=True)
        return jax.block_until_ready(fn(x, *ops))
    except Exception:
        # Fallback if pl.Buffered(1) is rejected by this jax/Mosaic version:
        # default double-buffered weight specs.
        fn = _build_call(ops, kernel, B, S, D, bt, vmem_limit,
                         single_buffer_weights=False)
        return fn(x, *ops)


# ----------------------------------------------------------------------------
# Parameter init (mirrors nn.Linear / nn.LayerNorm defaults) + reference.
# ----------------------------------------------------------------------------
def init_params(key, d_model, num_heads, ff_dim):
    def linear(k, fan_in, fan_out):
        bound = 1.0 / math.sqrt(fan_in)
        kw, kb = jax.random.split(k)
        w = jax.random.uniform(kw, (fan_in, fan_out), jnp.float32, -bound, bound)
        b = jax.random.uniform(kb, (1, fan_out), jnp.float32, -bound, bound)
        return w, b

    ks = jax.random.split(key, 6)
    p = {}
    p["wq"], p["bq"] = linear(ks[0], d_model, d_model)
    p["wk"], p["bk"] = linear(ks[1], d_model, d_model)
    p["wv"], p["bv"] = linear(ks[2], d_model, d_model)
    p["wo"], p["bo"] = linear(ks[3], d_model, d_model)
    p["g1"] = jnp.ones((1, d_model), jnp.float32)
    p["beta1"] = jnp.zeros((1, d_model), jnp.float32)
    p["w1"], p["b1"] = linear(ks[4], d_model, ff_dim)
    p["w2"], p["b2"] = linear(ks[5], ff_dim, d_model)
    p["g2"] = jnp.ones((1, d_model), jnp.float32)
    p["beta2"] = jnp.zeros((1, d_model), jnp.float32)
    return p


def reference_forward(x, p, num_heads, eps=1e-5):
    """Pure-JAX f32 mirror of the PyTorch TransformerBlock forward (eval)."""
    B, S, D = x.shape
    hd = D // num_heads

    def ln(h, g, b):
        mu = jnp.mean(h, axis=-1, keepdims=True)
        var = jnp.mean((h - mu) ** 2, axis=-1, keepdims=True)
        return (h - mu) / jnp.sqrt(var + eps) * g + b

    q = (x @ p["wq"] + p["bq"]).reshape(B, S, num_heads, hd).transpose(0, 2, 1, 3)
    k = (x @ p["wk"] + p["bk"]).reshape(B, S, num_heads, hd).transpose(0, 2, 1, 3)
    v = (x @ p["wv"] + p["bv"]).reshape(B, S, num_heads, hd).transpose(0, 2, 1, 3)
    scores = jnp.einsum("bhqd,bhkd->bhqk", q, k) / math.sqrt(hd)
    attn = jax.nn.softmax(scores, axis=-1)
    out = jnp.einsum("bhqk,bhkd->bhqd", attn, v).transpose(0, 2, 1, 3).reshape(B, S, D)
    out = out @ p["wo"] + p["bo"]
    h1 = ln(x + out, p["g1"], p["beta1"])
    f = jnp.maximum(h1 @ p["w1"] + p["b1"], 0.0) @ p["w2"] + p["b2"]
    return ln(h1 + f, p["g2"], p["beta2"])


if __name__ == "__main__":
    d_model, num_heads, ff_dim = 32, 4, 64
    B, S = 2, 8

    key = jax.random.PRNGKey(0)
    kp, kx = jax.random.split(key)
    params = init_params(kp, d_model, num_heads, ff_dim)
    x = jax.random.normal(kx, (B, S, d_model), jnp.float32)

    out = transformer_block_pallas(x, params, num_heads)
    out = jax.block_until_ready(out)

    ref = reference_forward(x, params, num_heads)
    assert out.shape == (B, S, d_model)
    # bf16 MXU operands + approx reciprocal => looser tolerance than pure f32.
    assert jnp.allclose(out, ref, atol=5e-2, rtol=5e-2), (
        "mismatch vs reference: max abs diff = "
        f"{float(jnp.max(jnp.abs(out - ref)))}")
    print("KERNEL_OK")
</pallas_src>

<mosaic_0001>
module attributes {stable_mosaic.version = 11 : i64} {
  func.func @kernel(%arg0: i32, %arg1: memref<1x8x32xf32, #tpu.memory_space<vmem>>, %arg2: memref<32x96xbf16, #tpu.memory_space<vmem>>, %arg3: memref<1x96xf32, #tpu.memory_space<vmem>>, %arg4: memref<32x32xbf16, #tpu.memory_space<vmem>>, %arg5: memref<1x32xf32, #tpu.memory_space<vmem>>, %arg6: memref<1x32xf32, #tpu.memory_space<vmem>>, %arg7: memref<1x32xf32, #tpu.memory_space<vmem>>, %arg8: memref<32x64xbf16, #tpu.memory_space<vmem>>, %arg9: memref<1x64xf32, #tpu.memory_space<vmem>>, %arg10: memref<64x32xbf16, #tpu.memory_space<vmem>>, %arg11: memref<1x32xf32, #tpu.memory_space<vmem>>, %arg12: memref<1x32xf32, #tpu.memory_space<vmem>>, %arg13: memref<1x32xf32, #tpu.memory_space<vmem>>, %arg14: memref<1x8x32xf32, #tpu.memory_space<vmem>>, %arg15: memref<8x32xf32, #tpu.memory_space<vmem>>) attributes {dimension_semantics = [#tpu.dimension_semantics<parallel>], iteration_bounds = array<i64: 2>, scalar_prefetch = 0 : i64, scratch_operands = 1 : i64, tpu.core_type = #tpu.core_type<tc>, window_params = [{transform_indices = @transform_0, window_bounds = array<i64: 1, 8, 32>}, {pipeline_mode = #tpu.pipeline_mode<synchronous>, transform_indices = @transform_1, window_bounds = array<i64: 32, 96>}, {pipeline_mode = #tpu.pipeline_mode<synchronous>, transform_indices = @transform_2, window_bounds = array<i64: 1, 96>}, {pipeline_mode = #tpu.pipeline_mode<synchronous>, transform_indices = @transform_3, window_bounds = array<i64: 32, 32>}, {pipeline_mode = #tpu.pipeline_mode<synchronous>, transform_indices = @transform_4, window_bounds = array<i64: 1, 32>}, {pipeline_mode = #tpu.pipeline_mode<synchronous>, transform_indices = @transform_5, window_bounds = array<i64: 1, 32>}, {pipeline_mode = #tpu.pipeline_mode<synchronous>, transform_indices = @transform_6, window_bounds = array<i64: 1, 32>}, {pipeline_mode = #tpu.pipeline_mode<synchronous>, transform_indices = @transform_7, window_bounds = array<i64: 32, 64>}, {pipeline_mode = #tpu.pipeline_mode<synchronous>, transform_indices = @transform_8, window_bounds = array<i64: 1, 64>}, {pipeline_mode = #tpu.pipeline_mode<synchronous>, transform_indices = @transform_9, window_bounds = array<i64: 64, 32>}, {pipeline_mode = #tpu.pipeline_mode<synchronous>, transform_indices = @transform_10, window_bounds = array<i64: 1, 32>}, {pipeline_mode = #tpu.pipeline_mode<synchronous>, transform_indices = @transform_11, window_bounds = array<i64: 1, 32>}, {pipeline_mode = #tpu.pipeline_mode<synchronous>, transform_indices = @transform_12, window_bounds = array<i64: 1, 32>}, {transform_indices = @transform_13, window_bounds = array<i64: 1, 8, 32>}]} {
    %c0 = arith.constant 0 : index
    %c0_0 = arith.constant 0 : index
    %c0_1 = arith.constant 0 : index
    %0 = vector.load %arg1[%c0, %c0_0, %c0_1] : memref<1x8x32xf32, #tpu.memory_space<vmem>>, vector<1x8x32xf32>
    %1 = vector.shape_cast %0 : vector<1x8x32xf32> to vector<8x32xf32>
    %2 = arith.truncf %1 : vector<8x32xf32> to vector<8x32xbf16>
    %c0_2 = arith.constant 0 : index
    %c0_3 = arith.constant 0 : index
    %3 = vector.load %arg2[%c0_2, %c0_3] : memref<32x96xbf16, #tpu.memory_space<vmem>>, vector<32x96xbf16>
    %cst = arith.constant dense<0.000000e+00> : vector<8x96xf32>
    %4 = tpu.matmul %2, %3, %cst {dimension_numbers = #tpu.dot_dimension_numbers<[1], [0], [0], [1], [0, 0, 1, 1], [], []>} : vector<8x32xbf16>, vector<32x96xbf16>, vector<8x96xf32> -> vector<8x96xf32>
    %c0_4 = arith.constant 0 : index
    %c0_5 = arith.constant 0 : index
    %5 = vector.load %arg3[%c0_4, %c0_5] : memref<1x96xf32, #tpu.memory_space<vmem>>, vector<1x96xf32>
    %6 = vector.broadcast %5 : vector<1x96xf32> to vector<8x96xf32>
    %7 = arith.addf %4, %6 : vector<8x96xf32>
    %8 = arith.truncf %7 : vector<8x96xf32> to vector<8x96xbf16>
    %9 = vector.extract_strided_slice %8 {offsets = [0, 0], sizes = [8, 8], strides = [1, 1]} : vector<8x96xbf16> to vector<8x8xbf16>
    %10 = vector.extract_strided_slice %8 {offsets = [0, 32], sizes = [8, 8], strides = [1, 1]} : vector<8x96xbf16> to vector<8x8xbf16>
    %11 = vector.extract_strided_slice %8 {offsets = [0, 64], sizes = [8, 8], strides = [1, 1]} : vector<8x96xbf16> to vector<8x8xbf16>
    %cst_6 = arith.constant dense<0.000000e+00> : vector<8x8xf32>
    %12 = tpu.matmul %9, %10, %cst_6 {dimension_numbers = #tpu.dot_dimension_numbers<[1], [1], [0], [0], [0, 0, 1, 0], [], []>} : vector<8x8xbf16>, vector<8x8xbf16>, vector<8x8xf32> -> vector<8x8xf32>
    %cst_7 = arith.constant dense<0xFF800000> : vector<8xf32>
    %13 = vector.multi_reduction <maximumf>, %12, %cst_7 [1] : vector<8x8xf32> to vector<8xf32>
    %14 = vector.shape_cast %13 : vector<8xf32> to vector<8x1xf32>
    %15 = vector.broadcast %14 : vector<8x1xf32> to vector<8x8xf32>
    %16 = arith.subf %12, %15 : vector<8x8xf32>
    %17 = arith.truncf %16 : vector<8x8xf32> to vector<8x8xbf16>
    %18 = math.exp %17 : vector<8x8xbf16>
    %19 = arith.extf %18 : vector<8x8xbf16> to vector<8x8xf32>
    %cst_8 = arith.constant dense<0.000000e+00> : vector<8xf32>
    %20 = vector.multi_reduction <add>, %19, %cst_8 [1] : vector<8x8xf32> to vector<8xf32>
    %21 = vector.shape_cast %20 : vector<8xf32> to vector<8x1xf32>
    %cst_9 = arith.constant dense<0.000000e+00> : vector<8x8xf32>
    %22 = tpu.matmul %18, %11, %cst_9 {dimension_numbers = #tpu.dot_dimension_numbers<[1], [0], [0], [1], [0, 0, 1, 1], [], []>} : vector<8x8xbf16>, vector<8x8xbf16>, vector<8x8xf32> -> vector<8x8xf32>
    %23 = tpu.reciprocal %21 {approx = true} : vector<8x1xf32> -> vector<8x1xf32>
    %24 = vector.broadcast %23 : vector<8x1xf32> to vector<8x8xf32>
    %25 = arith.mulf %22, %24 : vector<8x8xf32>
    %c0_10 = arith.constant 0 : index
    %c0_11 = arith.constant 0 : index
    %26 = vector.load %arg15[%c0_10, %c0_11] : memref<8x32xf32, #tpu.memory_space<vmem>>, vector<8x8xf32>
    tpu.vector_store %arg15[%c0_10, %c0_11], %25 {strides = array<i32>} : memref<8x32xf32, #tpu.memory_space<vmem>>, vector<8x8xf32>,
    %27 = vector.extract_strided_slice %8 {offsets = [0, 8], sizes = [8, 8], strides = [1, 1]} : vector<8x96xbf16> to vector<8x8xbf16>
    %28 = vector.extract_strided_slice %8 {offsets = [0, 40], sizes = [8, 8], strides = [1, 1]} : vector<8x96xbf16> to vector<8x8xbf16>
    %29 = vector.extract_strided_slice %8 {offsets = [0, 72], sizes = [8, 8], strides = [1, 1]} : vector<8x96xbf16> to vector<8x8xbf16>
    %cst_12 = arith.constant dense<0.000000e+00> : vector<8x8xf32>
    %30 = tpu.matmul %27, %28, %cst_12 {dimension_numbers = #tpu.dot_dimension_numbers<[1], [1], [0], [0], [0, 0, 1, 0], [], []>} : vector<8x8xbf16>, vector<8x8xbf16>, vector<8x8xf32> -> vector<8x8xf32>
    %cst_13 = arith.constant dense<0xFF800000> : vector<8xf32>
    %31 = vector.multi_reduction <maximumf>, %30, %cst_13 [1] : vector<8x8xf32> to vector<8xf32>
    %32 = vector.shape_cast %31 : vector<8xf32> to vector<8x1xf32>
    %33 = vector.broadcast %32 : vector<8x1xf32> to vector<8x8xf32>
    %34 = arith.subf %30, %33 : vector<8x8xf32>
    %35 = arith.truncf %34 : vector<8x8xf32> to vector<8x8xbf16>
    %36 = math.exp %35 : vector<8x8xbf16>
    %37 = arith.extf %36 : vector<8x8xbf16> to vector<8x8xf32>
    %cst_14 = arith.constant dense<0.000000e+00> : vector<8xf32>
    %38 = vector.multi_reduction <add>, %37, %cst_14 [1] : vector<8x8xf32> to vector<8xf32>
    %39 = vector.shape_cast %38 : vector<8xf32> to vector<8x1xf32>
    %cst_15 = arith.constant dense<0.000000e+00> : vector<8x8xf32>
    %40 = tpu.matmul %36, %29, %cst_15 {dimension_numbers = #tpu.dot_dimension_numbers<[1], [0], [0], [1], [0, 0, 1, 1], [], []>} : vector<8x8xbf16>, vector<8x8xbf16>, vector<8x8xf32> -> vector<8x8xf32>
    %41 = tpu.reciprocal %39 {approx = true} : vector<8x1xf32> -> vector<8x1xf32>
    %42 = vector.broadcast %41 : vector<8x1xf32> to vector<8x8xf32>
    %43 = arith.mulf %40, %42 : vector<8x8xf32>
    %c0_16 = arith.constant 0 : index
    %c8 = arith.constant 8 : index
    %44 = vector.load %arg15[%c0_16, %c8] : memref<8x32xf32, #tpu.memory_space<vmem>>, vector<8x8xf32>
    tpu.vector_store %arg15[%c0_16, %c8], %43 {strides = array<i32>} : memref<8x32xf32, #tpu.memory_space<vmem>>, vector<8x8xf32>,
    %45 = vector.extract_strided_slice %8 {offsets = [0, 16], sizes = [8, 8], strides = [1, 1]} : vector<8x96xbf16> to vector<8x8xbf16>
    %46 = vector.extract_strided_slice %8 {offsets = [0, 48], sizes = [8, 8], strides = [1, 1]} : vector<8x96xbf16> to vector<8x8xbf16>
    %47 = vector.extract_strided_slice %8 {offsets = [0, 80], sizes = [8, 8], strides = [1, 1]} : vector<8x96xbf16> to vector<8x8xbf16>
    %cst_17 = arith.constant dense<0.000000e+00> : vector<8x8xf32>
    %48 = tpu.matmul %45, %46, %cst_17 {dimension_numbers = #tpu.dot_dimension_numbers<[1], [1], [0], [0], [0, 0, 1, 0], [], []>} : vector<8x8xbf16>, vector<8x8xbf16>, vector<8x8xf32> -> vector<8x8xf32>
    %cst_18 = arith.constant dense<0xFF800000> : vector<8xf32>
    %49 = vector.multi_reduction <maximumf>, %48, %cst_18 [1] : vector<8x8xf32> to vector<8xf32>
    %50 = vector.shape_cast %49 : vector<8xf32> to vector<8x1xf32>
    %51 = vector.broadcast %50 : vector<8x1xf32> to vector<8x8xf32>
    %52 = arith.subf %48, %51 : vector<8x8xf32>
    %53 = arith.truncf %52 : vector<8x8xf32> to vector<8x8xbf16>
    %54 = math.exp %53 : vector<8x8xbf16>
    %55 = arith.extf %54 : vector<8x8xbf16> to vector<8x8xf32>
    %cst_19 = arith.constant dense<0.000000e+00> : vector<8xf32>
    %56 = vector.multi_reduction <add>, %55, %cst_19 [1] : vector<8x8xf32> to vector<8xf32>
    %57 = vector.shape_cast %56 : vector<8xf32> to vector<8x1xf32>
    %cst_20 = arith.constant dense<0.000000e+00> : vector<8x8xf32>
    %58 = tpu.matmul %54, %47, %cst_20 {dimension_numbers = #tpu.dot_dimension_numbers<[1], [0], [0], [1], [0, 0, 1, 1], [], []>} : vector<8x8xbf16>, vector<8x8xbf16>, vector<8x8xf32> -> vector<8x8xf32>
    %59 = tpu.reciprocal %57 {approx = true} : vector<8x1xf32> -> vector<8x1xf32>
    %60 = vector.broadcast %59 : vector<8x1xf32> to vector<8x8xf32>
    %61 = arith.mulf %58, %60 : vector<8x8xf32>
    %c0_21 = arith.constant 0 : index
    %c16 = arith.constant 16 : index
    %62 = vector.load %arg15[%c0_21, %c16] : memref<8x32xf32, #tpu.memory_space<vmem>>, vector<8x8xf32>
    tpu.vector_store %arg15[%c0_21, %c16], %61 {strides = array<i32>} : memref<8x32xf32, #tpu.memory_space<vmem>>, vector<8x8xf32>,
    %63 = vector.extract_strided_slice %8 {offsets = [0, 24], sizes = [8, 8], strides = [1, 1]} : vector<8x96xbf16> to vector<8x8xbf16>
    %64 = vector.extract_strided_slice %8 {offsets = [0, 56], sizes = [8, 8], strides = [1, 1]} : vector<8x96xbf16> to vector<8x8xbf16>
    %65 = vector.extract_strided_slice %8 {offsets = [0, 88], sizes = [8, 8], strides = [1, 1]} : vector<8x96xbf16> to vector<8x8xbf16>
    %cst_22 = arith.constant dense<0.000000e+00> : vector<8x8xf32>
    %66 = tpu.matmul %63, %64, %cst_22 {dimension_numbers = #tpu.dot_dimension_numbers<[1], [1], [0], [0], [0, 0, 1, 0], [], []>} : vector<8x8xbf16>, vector<8x8xbf16>, vector<8x8xf32> -> vector<8x8xf32>
    %cst_23 = arith.constant dense<0xFF800000> : vector<8xf32>
    %67 = vector.multi_reduction <maximumf>, %66, %cst_23 [1] : vector<8x8xf32> to vector<8xf32>
    %68 = vector.shape_cast %67 : vector<8xf32> to vector<8x1xf32>
    %69 = vector.broadcast %68 : vector<8x1xf32> to vector<8x8xf32>
    %70 = arith.subf %66, %69 : vector<8x8xf32>
    %71 = arith.truncf %70 : vector<8x8xf32> to vector<8x8xbf16>
    %72 = math.exp %71 : vector<8x8xbf16>
    %73 = arith.extf %72 : vector<8x8xbf16> to vector<8x8xf32>
    %cst_24 = arith.constant dense<0.000000e+00> : vector<8xf32>
    %74 = vector.multi_reduction <add>, %73, %cst_24 [1] : vector<8x8xf32> to vector<8xf32>
    %75 = vector.shape_cast %74 : vector<8xf32> to vector<8x1xf32>
    %cst_25 = arith.constant dense<0.000000e+00> : vector<8x8xf32>
    %76 = tpu.matmul %72, %65, %cst_25 {dimension_numbers = #tpu.dot_dimension_numbers<[1], [0], [0], [1], [0, 0, 1, 1], [], []>} : vector<8x8xbf16>, vector<8x8xbf16>, vector<8x8xf32> -> vector<8x8xf32>
    %77 = tpu.reciprocal %75 {approx = true} : vector<8x1xf32> -> vector<8x1xf32>
    %78 = vector.broadcast %77 : vector<8x1xf32> to vector<8x8xf32>
    %79 = arith.mulf %76, %78 : vector<8x8xf32>
    %c0_26 = arith.constant 0 : index
    %c24 = arith.constant 24 : index
    %80 = vector.load %arg15[%c0_26, %c24] : memref<8x32xf32, #tpu.memory_space<vmem>>, vector<8x8xf32>
    tpu.vector_store %arg15[%c0_26, %c24], %79 {strides = array<i32>} : memref<8x32xf32, #tpu.memory_space<vmem>>, vector<8x8xf32>,
    %c0_27 = arith.constant 0 : index
    %c0_28 = arith.constant 0 : index
    %81 = vector.load %arg15[%c0_27, %c0_28] : memref<8x32xf32, #tpu.memory_space<vmem>>, vector<8x32xf32>
    %82 = arith.truncf %81 : vector<8x32xf32> to vector<8x32xbf16>
    %c0_29 = arith.constant 0 : index
    %c0_30 = arith.constant 0 : index
    %83 = vector.load %arg4[%c0_29, %c0_30] : memref<32x32xbf16, #tpu.memory_space<vmem>>, vector<32x32xbf16>
    %cst_31 = arith.constant dense<0.000000e+00> : vector<8x32xf32>
    %84 = tpu.matmul %82, %83, %cst_31 {dimension_numbers = #tpu.dot_dimension_numbers<[1], [0], [0], [1], [0, 0, 1, 1], [], []>} : vector<8x32xbf16>, vector<32x32xbf16>, vector<8x32xf32> -> vector<8x32xf32>
    %c0_32 = arith.constant 0 : index
    %c0_33 = arith.constant 0 : index
    %85 = vector.load %arg5[%c0_32, %c0_33] : memref<1x32xf32, #tpu.memory_space<vmem>>, vector<1x32xf32>
    %86 = vector.broadcast %85 : vector<1x32xf32> to vector<8x32xf32>
    %87 = arith.addf %84, %86 : vector<8x32xf32>
    %88 = arith.addf %1, %87 : vector<8x32xf32>
    %cst_34 = arith.constant dense<0.000000e+00> : vector<8xf32>
    %89 = vector.multi_reduction <add>, %88, %cst_34 [1] : vector<8x32xf32> to vector<8xf32>
    %90 = vector.shape_cast %89 : vector<8xf32> to vector<8x1xf32>
    %cst_35 = arith.constant 3.200000e+01 : f32
    %91 = vector.broadcast %cst_35 : f32 to vector<8x1xf32>
    %92 = arith.divf %90, %91 : vector<8x1xf32>
    %93 = arith.mulf %88, %88 : vector<8x32xf32>
    %cst_36 = arith.constant dense<0.000000e+00> : vector<8xf32>
    %94 = vector.multi_reduction <add>, %93, %cst_36 [1] : vector<8x32xf32> to vector<8xf32>
    %95 = vector.shape_cast %94 : vector<8xf32> to vector<8x1xf32>
    %cst_37 = arith.constant 3.200000e+01 : f32
    %96 = vector.broadcast %cst_37 : f32 to vector<8x1xf32>
    %97 = arith.divf %95, %96 : vector<8x1xf32>
    %98 = arith.mulf %92, %92 : vector<8x1xf32>
    %99 = arith.subf %97, %98 : vector<8x1xf32>
    %cst_38 = arith.constant 0.000000e+00 : f32
    %100 = vector.broadcast %cst_38 : f32 to vector<8x1xf32>
    %101 = arith.maximumf %99, %100 : vector<8x1xf32>
    %102 = vector.broadcast %92 : vector<8x1xf32> to vector<8x32xf32>
    %103 = arith.subf %88, %102 : vector<8x32xf32>
    %cst_39 = arith.constant 9.99999974E-6 : f32
    %104 = vector.broadcast %cst_39 : f32 to vector<8x1xf32>
    %105 = arith.addf %101, %104 : vector<8x1xf32>
    %106 = math.rsqrt %105 : vector<8x1xf32>
    %107 = vector.broadcast %106 : vector<8x1xf32> to vector<8x32xf32>
    %108 = arith.mulf %103, %107 : vector<8x32xf32>
    %c0_40 = arith.constant 0 : index
    %c0_41 = arith.constant 0 : index
    %109 = vector.load %arg6[%c0_40, %c0_41] : memref<1x32xf32, #tpu.memory_space<vmem>>, vector<1x32xf32>
    %110 = vector.broadcast %109 : vector<1x32xf32> to vector<8x32xf32>
    %111 = arith.mulf %108, %110 : vector<8x32xf32>
    %c0_42 = arith.constant 0 : index
    %c0_43 = arith.constant 0 : index
    %112 = vector.load %arg7[%c0_42, %c0_43] : memref<1x32xf32, #tpu.memory_space<vmem>>, vector<1x32xf32>
    %113 = vector.broadcast %112 : vector<1x32xf32> to vector<8x32xf32>
    %114 = arith.addf %111, %113 : vector<8x32xf32>
    %115 = arith.truncf %114 : vector<8x32xf32> to vector<8x32xbf16>
    %c0_44 = arith.constant 0 : index
    %c0_45 = arith.constant 0 : index
    %116 = vector.load %arg8[%c0_44, %c0_45] : memref<32x64xbf16, #tpu.memory_space<vmem>>, vector<32x64xbf16>
    %cst_46 = arith.constant dense<0.000000e+00> : vector<8x64xf32>
    %117 = tpu.matmul %115, %116, %cst_46 {dimension_numbers = #tpu.dot_dimension_numbers<[1], [0], [0], [1], [0, 0, 1, 1], [], []>} : vector<8x32xbf16>, vector<32x64xbf16>, vector<8x64xf32> -> vector<8x64xf32>
    %c0_47 = arith.constant 0 : index
    %c0_48 = arith.constant 0 : index
    %118 = vector.load %arg9[%c0_47, %c0_48] : memref<1x64xf32, #tpu.memory_space<vmem>>, vector<1x64xf32>
    %119 = vector.broadcast %118 : vector<1x64xf32> to vector<8x64xf32>
    %120 = arith.addf %117, %119 : vector<8x64xf32>
    %cst_49 = arith.constant 0.000000e+00 : f32
    %121 = vector.broadcast %cst_49 : f32 to vector<8x64xf32>
    %122 = arith.maximumf %120, %121 : vector<8x64xf32>
    %123 = arith.truncf %122 : vector<8x64xf32> to vector<8x64xbf16>
    %c0_50 = arith.constant 0 : index
    %c0_51 = arith.constant 0 : index
    %124 = vector.load %arg10[%c0_50, %c0_51] : memref<64x32xbf16, #tpu.memory_space<vmem>>, vector<64x32xbf16>
    %cst_52 = arith.constant dense<0.000000e+00> : vector<8x32xf32>
    %125 = tpu.matmul %123, %124, %cst_52 {dimension_numbers = #tpu.dot_dimension_numbers<[1], [0], [0], [1], [0, 0, 1, 1], [], []>} : vector<8x64xbf16>, vector<64x32xbf16>, vector<8x32xf32> -> vector<8x32xf32>
    %c0_53 = arith.constant 0 : index
    %c0_54 = arith.constant 0 : index
    %126 = vector.load %arg11[%c0_53, %c0_54] : memref<1x32xf32, #tpu.memory_space<vmem>>, vector<1x32xf32>
    %127 = vector.broadcast %126 : vector<1x32xf32> to vector<8x32xf32>
    %128 = arith.addf %125, %127 : vector<8x32xf32>
    %129 = arith.addf %114, %128 : vector<8x32xf32>
    %cst_55 = arith.constant dense<0.000000e+00> : vector<8xf32>
    %130 = vector.multi_reduction <add>, %129, %cst_55 [1] : vector<8x32xf32> to vector<8xf32>
    %131 = vector.shape_cast %130 : vector<8xf32> to vector<8x1xf32>
    %cst_56 = arith.constant 3.200000e+01 : f32
    %132 = vector.broadcast %cst_56 : f32 to vector<8x1xf32>
    %133 = arith.divf %131, %132 : vector<8x1xf32>
    %134 = arith.mulf %129, %129 : vector<8x32xf32>
    %cst_57 = arith.constant dense<0.000000e+00> : vector<8xf32>
    %135 = vector.multi_reduction <add>, %134, %cst_57 [1] : vector<8x32xf32> to vector<8xf32>
    %136 = vector.shape_cast %135 : vector<8xf32> to vector<8x1xf32>
    %cst_58 = arith.constant 3.200000e+01 : f32
    %137 = vector.broadcast %cst_58 : f32 to vector<8x1xf32>
    %138 = arith.divf %136, %137 : vector<8x1xf32>
    %139 = arith.mulf %133, %133 : vector<8x1xf32>
    %140 = arith.subf %138, %139 : vector<8x1xf32>
    %cst_59 = arith.constant 0.000000e+00 : f32
    %141 = vector.broadcast %cst_59 : f32 to vector<8x1xf32>
    %142 = arith.maximumf %140, %141 : vector<8x1xf32>
    %143 = vector.broadcast %133 : vector<8x1xf32> to vector<8x32xf32>
    %144 = arith.subf %129, %143 : vector<8x32xf32>
    %cst_60 = arith.constant 9.99999974E-6 : f32
    %145 = vector.broadcast %cst_60 : f32 to vector<8x1xf32>
    %146 = arith.addf %142, %145 : vector<8x1xf32>
    %147 = math.rsqrt %146 : vector<8x1xf32>
    %148 = vector.broadcast %147 : vector<8x1xf32> to vector<8x32xf32>
    %149 = arith.mulf %144, %148 : vector<8x32xf32>
    %c0_61 = arith.constant 0 : index
    %c0_62 = arith.constant 0 : index
    %150 = vector.load %arg12[%c0_61, %c0_62] : memref<1x32xf32, #tpu.memory_space<vmem>>, vector<1x32xf32>
    %151 = vector.broadcast %150 : vector<1x32xf32> to vector<8x32xf32>
    %152 = arith.mulf %149, %151 : vector<8x32xf32>
    %c0_63 = arith.constant 0 : index
    %c0_64 = arith.constant 0 : index
    %153 = vector.load %arg13[%c0_63, %c0_64] : memref<1x32xf32, #tpu.memory_space<vmem>>, vector<1x32xf32>
    %154 = vector.broadcast %153 : vector<1x32xf32> to vector<8x32xf32>
    %155 = arith.addf %152, %154 : vector<8x32xf32>
    %156 = vector.shape_cast %155 : vector<8x32xf32> to vector<1x8x32xf32>
    %c0_65 = arith.constant 0 : index
    %c0_66 = arith.constant 0 : index
    %c0_67 = arith.constant 0 : index
    %157 = vector.load %arg14[%c0_65, %c0_66, %c0_67] : memref<1x8x32xf32, #tpu.memory_space<vmem>>, vector<1x8x32xf32>
    tpu.vector_store %arg14[%c0_65, %c0_66, %c0_67], %156 {strides = array<i32>} : memref<1x8x32xf32, #tpu.memory_space<vmem>>, vector<1x8x32xf32>,
    return
  }
  func.func @transform_0(%arg0: i32) -> (i32, i32, i32) {
    %c0_i32 = arith.constant 0 : i32
    %c0_i32_0 = arith.constant 0 : i32
    %c0_i32_1 = arith.constant 0 : i32
    return %arg0, %c0_i32, %c0_i32_0 : i32, i32, i32
  }
  func.func @transform_1(%arg0: i32) -> (i32, i32) {
    %c0_i32 = arith.constant 0 : i32
    %c0_i32_0 = arith.constant 0 : i32
    %c0_i32_1 = arith.constant 0 : i32
    return %c0_i32, %c0_i32_0 : i32, i32
  }
  func.func @transform_2(%arg0: i32) -> (i32, i32) {
    %c0_i32 = arith.constant 0 : i32
    %c0_i32_0 = arith.constant 0 : i32
    %c0_i32_1 = arith.constant 0 : i32
    return %c0_i32, %c0_i32_0 : i32, i32
  }
  func.func @transform_3(%arg0: i32) -> (i32, i32) {
    %c0_i32 = arith.constant 0 : i32
    %c0_i32_0 = arith.constant 0 : i32
    %c0_i32_1 = arith.constant 0 : i32
    return %c0_i32, %c0_i32_0 : i32, i32
  }
  func.func @transform_4(%arg0: i32) -> (i32, i32) {
    %c0_i32 = arith.constant 0 : i32
    %c0_i32_0 = arith.constant 0 : i32
    %c0_i32_1 = arith.constant 0 : i32
    return %c0_i32, %c0_i32_0 : i32, i32
  }
  func.func @transform_5(%arg0: i32) -> (i32, i32) {
    %c0_i32 = arith.constant 0 : i32
    %c0_i32_0 = arith.constant 0 : i32
    %c0_i32_1 = arith.constant 0 : i32
    return %c0_i32, %c0_i32_0 : i32, i32
  }
  func.func @transform_6(%arg0: i32) -> (i32, i32) {
    %c0_i32 = arith.constant 0 : i32
    %c0_i32_0 = arith.constant 0 : i32
    %c0_i32_1 = arith.constant 0 : i32
    return %c0_i32, %c0_i32_0 : i32, i32
  }
  func.func @transform_7(%arg0: i32) -> (i32, i32) {
    %c0_i32 = arith.constant 0 : i32
    %c0_i32_0 = arith.constant 0 : i32
    %c0_i32_1 = arith.constant 0 : i32
    return %c0_i32, %c0_i32_0 : i32, i32
  }
  func.func @transform_8(%arg0: i32) -> (i32, i32) {
    %c0_i32 = arith.constant 0 : i32
    %c0_i32_0 = arith.constant 0 : i32
    %c0_i32_1 = arith.constant 0 : i32
    return %c0_i32, %c0_i32_0 : i32, i32
  }
  func.func @transform_9(%arg0: i32) -> (i32, i32) {
    %c0_i32 = arith.constant 0 : i32
    %c0_i32_0 = arith.constant 0 : i32
    %c0_i32_1 = arith.constant 0 : i32
    return %c0_i32, %c0_i32_0 : i32, i32
  }
  func.func @transform_10(%arg0: i32) -> (i32, i32) {
    %c0_i32 = arith.constant 0 : i32
    %c0_i32_0 = arith.constant 0 : i32
    %c0_i32_1 = arith.constant 0 : i32
    return %c0_i32, %c0_i32_0 : i32, i32
  }
  func.func @transform_11(%arg0: i32) -> (i32, i32) {
    %c0_i32 = arith.constant 0 : i32
    %c0_i32_0 = arith.constant 0 : i32
    %c0_i32_1 = arith.constant 0 : i32
    return %c0_i32, %c0_i32_0 : i32, i32
  }
  func.func @transform_12(%arg0: i32) -> (i32, i32) {
    %c0_i32 = arith.constant 0 : i32
    %c0_i32_0 = arith.constant 0 : i32
    %c0_i32_1 = arith.constant 0 : i32
    return %c0_i32, %c0_i32_0 : i32, i32
  }
  func.func @transform_13(%arg0: i32) -> (i32, i32, i32) {
    %c0_i32 = arith.constant 0 : i32
    %c0_i32_0 = arith.constant 0 : i32
    %c0_i32_1 = arith.constant 0 : i32
    return %arg0, %c0_i32, %c0_i32_0 : i32, i32, i32
  }
}

module attributes {stable_mosaic.version = 11 : i64} {
  func.func @kernel(%arg0: i32, %arg1: memref<1x8x32xf32, #tpu.memory_space<vmem>>, %arg2: memref<32x96xbf16, #tpu.memory_space<vmem>>, %arg3: memref<1x96xf32, #tpu.memory_space<vmem>>, %arg4: memref<32x32xbf16, #tpu.memory_space<vmem>>, %arg5: memref<1x32xf32, #tpu.memory_space<vmem>>, %arg6: memref<1x32xf32, #tpu.memory_space<vmem>>, %arg7: memref<1x32xf32, #tpu.memory_space<vmem>>, %arg8: memref<32x64xbf16, #tpu.memory_space<vmem>>, %arg9: memref<1x64xf32, #tpu.memory_space<vmem>>, %arg10: memref<64x32xbf16, #tpu.memory_space<vmem>>, %arg11: memref<1x32xf32, #tpu.memory_space<vmem>>, %arg12: memref<1x32xf32, #tpu.memory_space<vmem>>, %arg13: memref<1x32xf32, #tpu.memory_space<vmem>>, %arg14: memref<1x8x32xf32, #tpu.memory_space<vmem>>, %arg15: memref<8x32xf32, #tpu.memory_space<vmem>>) attributes {dimension_semantics = [#tpu.dimension_semantics<parallel>], iteration_bounds = array<i64: 2>, scalar_prefetch = 0 : i64, scratch_operands = 1 : i64, tpu.core_type = #tpu.core_type<tc>, window_params = [{transform_indices = @transform_0, window_bounds = array<i64: 1, 8, 32>}, {pipeline_mode = #tpu.pipeline_mode<synchronous>, transform_indices = @transform_1, window_bounds = array<i64: 32, 96>}, {pipeline_mode = #tpu.pipeline_mode<synchronous>, transform_indices = @transform_2, window_bounds = array<i64: 1, 96>}, {pipeline_mode = #tpu.pipeline_mode<synchronous>, transform_indices = @transform_3, window_bounds = array<i64: 32, 32>}, {pipeline_mode = #tpu.pipeline_mode<synchronous>, transform_indices = @transform_4, window_bounds = array<i64: 1, 32>}, {pipeline_mode = #tpu.pipeline_mode<synchronous>, transform_indices = @transform_5, window_bounds = array<i64: 1, 32>}, {pipeline_mode = #tpu.pipeline_mode<synchronous>, transform_indices = @transform_6, window_bounds = array<i64: 1, 32>}, {pipeline_mode = #tpu.pipeline_mode<synchronous>, transform_indices = @transform_7, window_bounds = array<i64: 32, 64>}, {pipeline_mode = #tpu.pipeline_mode<synchronous>, transform_indices = @transform_8, window_bounds = array<i64: 1, 64>}, {pipeline_mode = #tpu.pipeline_mode<synchronous>, transform_indices = @transform_9, window_bounds = array<i64: 64, 32>}, {pipeline_mode = #tpu.pipeline_mode<synchronous>, transform_indices = @transform_10, window_bounds = array<i64: 1, 32>}, {pipeline_mode = #tpu.pipeline_mode<synchronous>, transform_indices = @transform_11, window_bounds = array<i64: 1, 32>}, {pipeline_mode = #tpu.pipeline_mode<synchronous>, transform_indices = @transform_12, window_bounds = array<i64: 1, 32>}, {transform_indices = @transform_13, window_bounds = array<i64: 1, 8, 32>}]} {
    %c0 = arith.constant 0 : index
    %c0_0 = arith.constant 0 : index
    %c0_1 = arith.constant 0 : index
    %0 = vector.load %arg1[%c0, %c0_0, %c0_1] : memref<1x8x32xf32, #tpu.memory_space<vmem>>, vector<1x8x32xf32>
    %1 = vector.shape_cast %0 : vector<1x8x32xf32> to vector<8x32xf32>
    %2 = arith.truncf %1 : vector<8x32xf32> to vector<8x32xbf16>
    %c0_2 = arith.constant 0 : index
    %c0_3 = arith.constant 0 : index
    %3 = vector.load %arg2[%c0_2, %c0_3] : memref<32x96xbf16, #tpu.memory_space<vmem>>, vector<32x96xbf16>
    %cst = arith.constant dense<0.000000e+00> : vector<8x96xf32>
    %4 = tpu.matmul %2, %3, %cst {dimension_numbers = #tpu.dot_dimension_numbers<[1], [0], [0], [1], [0, 0, 1, 1], [], []>} : vector<8x32xbf16>, vector<32x96xbf16>, vector<8x96xf32> -> vector<8x96xf32>
    %c0_4 = arith.constant 0 : index
    %c0_5 = arith.constant 0 : index
    %5 = vector.load %arg3[%c0_4, %c0_5] : memref<1x96xf32, #tpu.memory_space<vmem>>, vector<1x96xf32>
    %6 = vector.broadcast %5 : vector<1x96xf32> to vector<8x96xf32>
    %7 = arith.addf %4, %6 : vector<8x96xf32>
    %8 = arith.truncf %7 : vector<8x96xf32> to vector<8x96xbf16>
    %9 = vector.extract_strided_slice %8 {offsets = [0, 0], sizes = [8, 8], strides = [1, 1]} : vector<8x96xbf16> to vector<8x8xbf16>
    %10 = vector.extract_strided_slice %8 {offsets = [0, 32], sizes = [8, 8], strides = [1, 1]} : vector<8x96xbf16> to vector<8x8xbf16>
    %11 = vector.extract_strided_slice %8 {offsets = [0, 64], sizes = [8, 8], strides = [1, 1]} : vector<8x96xbf16> to vector<8x8xbf16>
    %cst_6 = arith.constant dense<0.000000e+00> : vector<8x8xf32>
    %12 = tpu.matmul %9, %10, %cst_6 {dimension_numbers = #tpu.dot_dimension_numbers<[1], [1], [0], [0], [0, 0, 1, 0], [], []>} : vector<8x8xbf16>, vector<8x8xbf16>, vector<8x8xf32> -> vector<8x8xf32>
    %cst_7 = arith.constant dense<0xFF800000> : vector<8xf32>
    %13 = vector.multi_reduction <maximumf>, %12, %cst_7 [1] : vector<8x8xf32> to vector<8xf32>
    %14 = vector.shape_cast %13 : vector<8xf32> to vector<8x1xf32>
    %15 = vector.broadcast %14 : vector<8x1xf32> to vector<8x8xf32>
    %16 = arith.subf %12, %15 : vector<8x8xf32>
    %17 = arith.truncf %16 : vector<8x8xf32> to vector<8x8xbf16>
    %18 = math.exp %17 : vector<8x8xbf16>
    %19 = arith.extf %18 : vector<8x8xbf16> to vector<8x8xf32>
    %cst_8 = arith.constant dense<0.000000e+00> : vector<8xf32>
    %20 = vector.multi_reduction <add>, %19, %cst_8 [1] : vector<8x8xf32> to vector<8xf32>
    %21 = vector.shape_cast %20 : vector<8xf32> to vector<8x1xf32>
    %cst_9 = arith.constant dense<0.000000e+00> : vector<8x8xf32>
    %22 = tpu.matmul %18, %11, %cst_9 {dimension_numbers = #tpu.dot_dimension_numbers<[1], [0], [0], [1], [0, 0, 1, 1], [], []>} : vector<8x8xbf16>, vector<8x8xbf16>, vector<8x8xf32> -> vector<8x8xf32>
    %23 = tpu.reciprocal %21 {approx = true} : vector<8x1xf32> -> vector<8x1xf32>
    %24 = vector.broadcast %23 : vector<8x1xf32> to vector<8x8xf32>
    %25 = arith.mulf %22, %24 : vector<8x8xf32>
    %c0_10 = arith.constant 0 : index
    %c0_11 = arith.constant 0 : index
    %26 = vector.load %arg15[%c0_10, %c0_11] : memref<8x32xf32, #tpu.memory_space<vmem>>, vector<8x8xf32>
    tpu.vector_store %arg15[%c0_10, %c0_11], %25 {strides = array<i32>} : memref<8x32xf32, #tpu.memory_space<vmem>>, vector<8x8xf32>,
    %27 = vector.extract_strided_slice %8 {offsets = [0, 8], sizes = [8, 8], strides = [1, 1]} : vector<8x96xbf16> to vector<8x8xbf16>
    %28 = vector.extract_strided_slice %8 {offsets = [0, 40], sizes = [8, 8], strides = [1, 1]} : vector<8x96xbf16> to vector<8x8xbf16>
    %29 = vector.extract_strided_slice %8 {offsets = [0, 72], sizes = [8, 8], strides = [1, 1]} : vector<8x96xbf16> to vector<8x8xbf16>
    %cst_12 = arith.constant dense<0.000000e+00> : vector<8x8xf32>
    %30 = tpu.matmul %27, %28, %cst_12 {dimension_numbers = #tpu.dot_dimension_numbers<[1], [1], [0], [0], [0, 0, 1, 0], [], []>} : vector<8x8xbf16>, vector<8x8xbf16>, vector<8x8xf32> -> vector<8x8xf32>
    %cst_13 = arith.constant dense<0xFF800000> : vector<8xf32>
    %31 = vector.multi_reduction <maximumf>, %30, %cst_13 [1] : vector<8x8xf32> to vector<8xf32>
    %32 = vector.shape_cast %31 : vector<8xf32> to vector<8x1xf32>
    %33 = vector.broadcast %32 : vector<8x1xf32> to vector<8x8xf32>
    %34 = arith.subf %30, %33 : vector<8x8xf32>
    %35 = arith.truncf %34 : vector<8x8xf32> to vector<8x8xbf16>
    %36 = math.exp %35 : vector<8x8xbf16>
    %37 = arith.extf %36 : vector<8x8xbf16> to vector<8x8xf32>
    %cst_14 = arith.constant dense<0.000000e+00> : vector<8xf32>
    %38 = vector.multi_reduction <add>, %37, %cst_14 [1] : vector<8x8xf32> to vector<8xf32>
    %39 = vector.shape_cast %38 : vector<8xf32> to vector<8x1xf32>
    %cst_15 = arith.constant dense<0.000000e+00> : vector<8x8xf32>
    %40 = tpu.matmul %36, %29, %cst_15 {dimension_numbers = #tpu.dot_dimension_numbers<[1], [0], [0], [1], [0, 0, 1, 1], [], []>} : vector<8x8xbf16>, vector<8x8xbf16>, vector<8x8xf32> -> vector<8x8xf32>
    %41 = tpu.reciprocal %39 {approx = true} : vector<8x1xf32> -> vector<8x1xf32>
    %42 = vector.broadcast %41 : vector<8x1xf32> to vector<8x8xf32>
    %43 = arith.mulf %40, %42 : vector<8x8xf32>
    %c0_16 = arith.constant 0 : index
    %c8 = arith.constant 8 : index
    %44 = vector.load %arg15[%c0_16, %c8] : memref<8x32xf32, #tpu.memory_space<vmem>>, vector<8x8xf32>
    tpu.vector_store %arg15[%c0_16, %c8], %43 {strides = array<i32>} : memref<8x32xf32, #tpu.memory_space<vmem>>, vector<8x8xf32>,
    %45 = vector.extract_strided_slice %8 {offsets = [0, 16], sizes = [8, 8], strides = [1, 1]} : vector<8x96xbf16> to vector<8x8xbf16>
    %46 = vector.extract_strided_slice %8 {offsets = [0, 48], sizes = [8, 8], strides = [1, 1]} : vector<8x96xbf16> to vector<8x8xbf16>
    %47 = vector.extract_strided_slice %8 {offsets = [0, 80], sizes = [8, 8], strides = [1, 1]} : vector<8x96xbf16> to vector<8x8xbf16>
    %cst_17 = arith.constant dense<0.000000e+00> : vector<8x8xf32>
    %48 = tpu.matmul %45, %46, %cst_17 {dimension_numbers = #tpu.dot_dimension_numbers<[1], [1], [0], [0], [0, 0, 1, 0], [], []>} : vector<8x8xbf16>, vector<8x8xbf16>, vector<8x8xf32> -> vector<8x8xf32>
    %cst_18 = arith.constant dense<0xFF800000> : vector<8xf32>
    %49 = vector.multi_reduction <maximumf>, %48, %cst_18 [1] : vector<8x8xf32> to vector<8xf32>
    %50 = vector.shape_cast %49 : vector<8xf32> to vector<8x1xf32>
    %51 = vector.broadcast %50 : vector<8x1xf32> to vector<8x8xf32>
    %52 = arith.subf %48, %51 : vector<8x8xf32>
    %53 = arith.truncf %52 : vector<8x8xf32> to vector<8x8xbf16>
    %54 = math.exp %53 : vector<8x8xbf16>
    %55 = arith.extf %54 : vector<8x8xbf16> to vector<8x8xf32>
    %cst_19 = arith.constant dense<0.000000e+00> : vector<8xf32>
    %56 = vector.multi_reduction <add>, %55, %cst_19 [1] : vector<8x8xf32> to vector<8xf32>
    %57 = vector.shape_cast %56 : vector<8xf32> to vector<8x1xf32>
    %cst_20 = arith.constant dense<0.000000e+00> : vector<8x8xf32>
    %58 = tpu.matmul %54, %47, %cst_20 {dimension_numbers = #tpu.dot_dimension_numbers<[1], [0], [0], [1], [0, 0, 1, 1], [], []>} : vector<8x8xbf16>, vector<8x8xbf16>, vector<8x8xf32> -> vector<8x8xf32>
    %59 = tpu.reciprocal %57 {approx = true} : vector<8x1xf32> -> vector<8x1xf32>
    %60 = vector.broadcast %59 : vector<8x1xf32> to vector<8x8xf32>
    %61 = arith.mulf %58, %60 : vector<8x8xf32>
    %c0_21 = arith.constant 0 : index
    %c16 = arith.constant 16 : index
    %62 = vector.load %arg15[%c0_21, %c16] : memref<8x32xf32, #tpu.memory_space<vmem>>, vector<8x8xf32>
    tpu.vector_store %arg15[%c0_21, %c16], %61 {strides = array<i32>} : memref<8x32xf32, #tpu.memory_space<vmem>>, vector<8x8xf32>,
    %63 = vector.extract_strided_slice %8 {offsets = [0, 24], sizes = [8, 8], strides = [1, 1]} : vector<8x96xbf16> to vector<8x8xbf16>
    %64 = vector.extract_strided_slice %8 {offsets = [0, 56], sizes = [8, 8], strides = [1, 1]} : vector<8x96xbf16> to vector<8x8xbf16>
    %65 = vector.extract_strided_slice %8 {offsets = [0, 88], sizes = [8, 8], strides = [1, 1]} : vector<8x96xbf16> to vector<8x8xbf16>
    %cst_22 = arith.constant dense<0.000000e+00> : vector<8x8xf32>
    %66 = tpu.matmul %63, %64, %cst_22 {dimension_numbers = #tpu.dot_dimension_numbers<[1], [1], [0], [0], [0, 0, 1, 0], [], []>} : vector<8x8xbf16>, vector<8x8xbf16>, vector<8x8xf32> -> vector<8x8xf32>
    %cst_23 = arith.constant dense<0xFF800000> : vector<8xf32>
    %67 = vector.multi_reduction <maximumf>, %66, %cst_23 [1] : vector<8x8xf32> to vector<8xf32>
    %68 = vector.shape_cast %67 : vector<8xf32> to vector<8x1xf32>
    %69 = vector.broadcast %68 : vector<8x1xf32> to vector<8x8xf32>
    %70 = arith.subf %66, %69 : vector<8x8xf32>
    %71 = arith.truncf %70 : vector<8x8xf32> to vector<8x8xbf16>
    %72 = math.exp %71 : vector<8x8xbf16>
    %73 = arith.extf %72 : vector<8x8xbf16> to vector<8x8xf32>
    %cst_24 = arith.constant dense<0.000000e+00> : vector<8xf32>
    %74 = vector.multi_reduction <add>, %73, %cst_24 [1] : vector<8x8xf32> to vector<8xf32>
    %75 = vector.shape_cast %74 : vector<8xf32> to vector<8x1xf32>
    %cst_25 = arith.constant dense<0.000000e+00> : vector<8x8xf32>
    %76 = tpu.matmul %72, %65, %cst_25 {dimension_numbers = #tpu.dot_dimension_numbers<[1], [0], [0], [1], [0, 0, 1, 1], [], []>} : vector<8x8xbf16>, vector<8x8xbf16>, vector<8x8xf32> -> vector<8x8xf32>
    %77 = tpu.reciprocal %75 {approx = true} : vector<8x1xf32> -> vector<8x1xf32>
    %78 = vector.broadcast %77 : vector<8x1xf32> to vector<8x8xf32>
    %79 = arith.mulf %76, %78 : vector<8x8xf32>
    %c0_26 = arith.constant 0 : index
    %c24 = arith.constant 24 : index
    %80 = vector.load %arg15[%c0_26, %c24] : memref<8x32xf32, #tpu.memory_space<vmem>>, vector<8x8xf32>
    tpu.vector_store %arg15[%c0_26, %c24], %79 {strides = array<i32>} : memref<8x32xf32, #tpu.memory_space<vmem>>, vector<8x8xf32>,
    %c0_27 = arith.constant 0 : index
    %c0_28 = arith.constant 0 : index
    %81 = vector.load %arg15[%c0_27, %c0_28] : memref<8x32xf32, #tpu.memory_space<vmem>>, vector<8x32xf32>
    %82 = arith.truncf %81 : vector<8x32xf32> to vector<8x32xbf16>
    %c0_29 = arith.constant 0 : index
    %c0_30 = arith.constant 0 : index
    %83 = vector.load %arg4[%c0_29, %c0_30] : memref<32x32xbf16, #tpu.memory_space<vmem>>, vector<32x32xbf16>
    %cst_31 = arith.constant dense<0.000000e+00> : vector<8x32xf32>
    %84 = tpu.matmul %82, %83, %cst_31 {dimension_numbers = #tpu.dot_dimension_numbers<[1], [0], [0], [1], [0, 0, 1, 1], [], []>} : vector<8x32xbf16>, vector<32x32xbf16>, vector<8x32xf32> -> vector<8x32xf32>
    %c0_32 = arith.constant 0 : index
    %c0_33 = arith.constant 0 : index
    %85 = vector.load %arg5[%c0_32, %c0_33] : memref<1x32xf32, #tpu.memory_space<vmem>>, vector<1x32xf32>
    %86 = vector.broadcast %85 : vector<1x32xf32> to vector<8x32xf32>
    %87 = arith.addf %84, %86 : vector<8x32xf32>
    %88 = arith.addf %1, %87 : vector<8x32xf32>
    %cst_34 = arith.constant dense<0.000000e+00> : vector<8xf32>
    %89 = vector.multi_reduction <add>, %88, %cst_34 [1] : vector<8x32xf32> to vector<8xf32>
    %90 = vector.shape_cast %89 : vector<8xf32> to vector<8x1xf32>
    %cst_35 = arith.constant 3.200000e+01 : f32
    %91 = vector.broadcast %cst_35 : f32 to vector<8x1xf32>
    %92 = arith.divf %90, %91 : vector<8x1xf32>
    %93 = arith.mulf %88, %88 : vector<8x32xf32>
    %cst_36 = arith.constant dense<0.000000e+00> : vector<8xf32>
    %94 = vector.multi_reduction <add>, %93, %cst_36 [1] : vector<8x32xf32> to vector<8xf32>
    %95 = vector.shape_cast %94 : vector<8xf32> to vector<8x1xf32>
    %cst_37 = arith.constant 3.200000e+01 : f32
    %96 = vector.broadcast %cst_37 : f32 to vector<8x1xf32>
    %97 = arith.divf %95, %96 : vector<8x1xf32>
    %98 = arith.mulf %92, %92 : vector<8x1xf32>
    %99 = arith.subf %97, %98 : vector<8x1xf32>
    %cst_38 = arith.constant 0.000000e+00 : f32
    %100 = vector.broadcast %cst_38 : f32 to vector<8x1xf32>
    %101 = arith.maximumf %99, %100 : vector<8x1xf32>
    %102 = vector.broadcast %92 : vector<8x1xf32> to vector<8x32xf32>
    %103 = arith.subf %88, %102 : vector<8x32xf32>
    %cst_39 = arith.constant 9.99999974E-6 : f32
    %104 = vector.broadcast %cst_39 : f32 to vector<8x1xf32>
    %105 = arith.addf %101, %104 : vector<8x1xf32>
    %106 = math.rsqrt %105 : vector<8x1xf32>
    %107 = vector.broadcast %106 : vector<8x1xf32> to vector<8x32xf32>
    %108 = arith.mulf %103, %107 : vector<8x32xf32>
    %c0_40 = arith.constant 0 : index
    %c0_41 = arith.constant 0 : index
    %109 = vector.load %arg6[%c0_40, %c0_41] : memref<1x32xf32, #tpu.memory_space<vmem>>, vector<1x32xf32>
    %110 = vector.broadcast %109 : vector<1x32xf32> to vector<8x32xf32>
    %111 = arith.mulf %108, %110 : vector<8x32xf32>
    %c0_42 = arith.constant 0 : index
    %c0_43 = arith.constant 0 : index
    %112 = vector.load %arg7[%c0_42, %c0_43] : memref<1x32xf32, #tpu.memory_space<vmem>>, vector<1x32xf32>
    %113 = vector.broadcast %112 : vector<1x32xf32> to vector<8x32xf32>
    %114 = arith.addf %111, %113 : vector<8x32xf32>
    %115 = arith.truncf %114 : vector<8x32xf32> to vector<8x32xbf16>
    %c0_44 = arith.constant 0 : index
    %c0_45 = arith.constant 0 : index
    %116 = vector.load %arg8[%c0_44, %c0_45] : memref<32x64xbf16, #tpu.memory_space<vmem>>, vector<32x64xbf16>
    %cst_46 = arith.constant dense<0.000000e+00> : vector<8x64xf32>
    %117 = tpu.matmul %115, %116, %cst_46 {dimension_numbers = #tpu.dot_dimension_numbers<[1], [0], [0], [1], [0, 0, 1, 1], [], []>} : vector<8x32xbf16>, vector<32x64xbf16>, vector<8x64xf32> -> vector<8x64xf32>
    %c0_47 = arith.constant 0 : index
    %c0_48 = arith.constant 0 : index
    %118 = vector.load %arg9[%c0_47, %c0_48] : memref<1x64xf32, #tpu.memory_space<vmem>>, vector<1x64xf32>
    %119 = vector.broadcast %118 : vector<1x64xf32> to vector<8x64xf32>
    %120 = arith.addf %117, %119 : vector<8x64xf32>
    %cst_49 = arith.constant 0.000000e+00 : f32
    %121 = vector.broadcast %cst_49 : f32 to vector<8x64xf32>
    %122 = arith.maximumf %120, %121 : vector<8x64xf32>
    %123 = arith.truncf %122 : vector<8x64xf32> to vector<8x64xbf16>
    %c0_50 = arith.constant 0 : index
    %c0_51 = arith.constant 0 : index
    %124 = vector.load %arg10[%c0_50, %c0_51] : memref<64x32xbf16, #tpu.memory_space<vmem>>, vector<64x32xbf16>
    %cst_52 = arith.constant dense<0.000000e+00> : vector<8x32xf32>
    %125 = tpu.matmul %123, %124, %cst_52 {dimension_numbers = #tpu.dot_dimension_numbers<[1], [0], [0], [1], [0, 0, 1, 1], [], []>} : vector<8x64xbf16>, vector<64x32xbf16>, vector<8x32xf32> -> vector<8x32xf32>
    %c0_53 = arith.constant 0 : index
    %c0_54 = arith.constant 0 : index
    %126 = vector.load %arg11[%c0_53, %c0_54] : memref<1x32xf32, #tpu.memory_space<vmem>>, vector<1x32xf32>
    %127 = vector.broadcast %126 : vector<1x32xf32> to vector<8x32xf32>
    %128 = arith.addf %125, %127 : vector<8x32xf32>
    %129 = arith.addf %114, %128 : vector<8x32xf32>
    %cst_55 = arith.constant dense<0.000000e+00> : vector<8xf32>
    %130 = vector.multi_reduction <add>, %129, %cst_55 [1] : vector<8x32xf32> to vector<8xf32>
    %131 = vector.shape_cast %130 : vector<8xf32> to vector<8x1xf32>
    %cst_56 = arith.constant 3.200000e+01 : f32
    %132 = vector.broadcast %cst_56 : f32 to vector<8x1xf32>
    %133 = arith.divf %131, %132 : vector<8x1xf32>
    %134 = arith.mulf %129, %129 : vector<8x32xf32>
    %cst_57 = arith.constant dense<0.000000e+00> : vector<8xf32>
    %135 = vector.multi_reduction <add>, %134, %cst_57 [1] : vector<8x32xf32> to vector<8xf32>
    %136 = vector.shape_cast %135 : vector<8xf32> to vector<8x1xf32>
    %cst_58 = arith.constant 3.200000e+01 : f32
    %137 = vector.broadcast %cst_58 : f32 to vector<8x1xf32>
    %138 = arith.divf %136, %137 : vector<8x1xf32>
    %139 = arith.mulf %133, %133 : vector<8x1xf32>
    %140 = arith.subf %138, %139 : vector<8x1xf32>
    %cst_59 = arith.constant 0.000000e+00 : f32
    %141 = vector.broadcast %cst_59 : f32 to vector<8x1xf32>
    %142 = arith.maximumf %140, %141 : vector<8x1xf32>
    %143 = vector.broadcast %133 : vector<8x1xf32> to vector<8x32xf32>
    %144 = arith.subf %129, %143 : vector<8x32xf32>
    %cst_60 = arith.constant 9.99999974E-6 : f32
    %145 = vector.broadcast %cst_60 : f32 to vector<8x1xf32>
    %146 = arith.addf %142, %145 : vector<8x1xf32>
    %147 = math.rsqrt %146 : vector<8x1xf32>
    %148 = vector.broadcast %147 : vector<8x1xf32> to vector<8x32xf32>
    %149 = arith.mulf %144, %148 : vector<8x32xf32>
    %c0_61 = arith.constant 0 : index
    %c0_62 = arith.constant 0 : index
    %150 = vector.load %arg12[%c0_61, %c0_62] : memref<1x32xf32, #tpu.memory_space<vmem>>, vector<1x32xf32>
    %151 = vector.broadcast %150 : vector<1x32xf32> to vector<8x32xf32>
    %152 = arith.mulf %149, %151 : vector<8x32xf32>
    %c0_63 = arith.constant 0 : index
    %c0_64 = arith.constant 0 : index
    %153 = vector.load %arg13[%c0_63, %c0_64] : memref<1x32xf32, #tpu.memory_space<vmem>>, vector<1x32xf32>
    %154 = vector.broadcast %153 : vector<1x32xf32> to vector<8x32xf32>
    %155 = arith.addf %152, %154 : vector<8x32xf32>
    %156 = vector.shape_cast %155 : vector<8x32xf32> to vector<1x8x32xf32>
    %c0_65 = arith.constant 0 : index
    %c0_66 = arith.constant 0 : index
    %c0_67 = arith.constant 0 : index
    %157 = vector.load %arg14[%c0_65, %c0_66, %c0_67] : memref<1x8x32xf32, #tpu.memory_space<vmem>>, vector<1x8x32xf32>
    tpu.vector_store %arg14[%c0_65, %c0_66, %c0_67], %156 {strides = array<i32>} : memref<1x8x32xf32, #tpu.memory_space<vmem>>, vector<1x8x32xf32>,
    return
  }
  func.func @transform_0(%arg0: i32) -> (i32, i32, i32) {
    %c0_i32 = arith.constant 0 : i32
    %c0_i32_0 = arith.constant 0 : i32
    %c0_i32_1 = arith.constant 0 : i32
    return %arg0, %c0_i32, %c0_i32_0 : i32, i32, i32
  }
  func.func @transform_1(%arg0: i32) -> (i32, i32) {
    %c0_i32 = arith.constant 0 : i32
    %c0_i32_0 = arith.constant 0 : i32
    %c0_i32_1 = arith.constant 0 : i32
    return %c0_i32, %c0_i32_0 : i32, i32
  }
  func.func @transform_2(%arg0: i32) -> (i32, i32) {
    %c0_i32 = arith.constant 0 : i32
    %c0_i32_0 = arith.constant 0 : i32
    %c0_i32_1 = arith.constant 0 : i32
    return %c0_i32, %c0_i32_0 : i32, i32
  }
  func.func @transform_3(%arg0: i32) -> (i32, i32) {
    %c0_i32 = arith.constant 0 : i32
    %c0_i32_0 = arith.constant 0 : i32
    %c0_i32_1 = arith.constant 0 : i32
    return %c0_i32, %c0_i32_0 : i32, i32
  }
  func.func @transform_4(%arg0: i32) -> (i32, i32) {
    %c0_i32 = arith.constant 0 : i32
    %c0_i32_0 = arith.constant 0 : i32
    %c0_i32_1 = arith.constant 0 : i32
    return %c0_i32, %c0_i32_0 : i32, i32
  }
  func.func @transform_5(%arg0: i32) -> (i32, i32) {
    %c0_i32 = arith.constant 0 : i32
    %c0_i32_0 = arith.constant 0 : i32
    %c0_i32_1 = arith.constant 0 : i32
    return %c0_i32, %c0_i32_0 : i32, i32
  }
  func.func @transform_6(%arg0: i32) -> (i32, i32) {
    %c0_i32 = arith.constant 0 : i32
    %c0_i32_0 = arith.constant 0 : i32
    %c0_i32_1 = arith.constant 0 : i32
    return %c0_i32, %c0_i32_0 : i32, i32
  }
  func.func @transform_7(%arg0: i32) -> (i32, i32) {
    %c0_i32 = arith.constant 0 : i32
    %c0_i32_0 = arith.constant 0 : i32
    %c0_i32_1 = arith.constant 0 : i32
    return %c0_i32, %c0_i32_0 : i32, i32
  }
  func.func @transform_8(%arg0: i32) -> (i32, i32) {
    %c0_i32 = arith.constant 0 : i32
    %c0_i32_0 = arith.constant 0 : i32
    %c0_i32_1 = arith.constant 0 : i32
    return %c0_i32, %c0_i32_0 : i32, i32
  }
  func.func @transform_9(%arg0: i32) -> (i32, i32) {
    %c0_i32 = arith.constant 0 : i32
    %c0_i32_0 = arith.constant 0 : i32
    %c0_i32_1 = arith.constant 0 : i32
    return %c0_i32, %c0_i32_0 : i32, i32
  }
  func.func @transform_10(%arg0: i32) -> (i32, i32) {
    %c0_i32 = arith.constant 0 : i32
    %c0_i32_0 = arith.constant 0 : i32
    %c0_i32_1 = arith.constant 0 : i32
    return %c0_i32, %c0_i32_0 : i32, i32
  }
  func.func @transform_11(%arg0: i32) -> (i32, i32) {
    %c0_i32 = arith.constant 0 : i32
    %c0_i32_0 = arith.constant 0 : i32
    %c0_i32_1 = arith.constant 0 : i32
    return %c0_i32, %c0_i32_0 : i32, i32
  }
  func.func @transform_12(%arg0: i32) -> (i32, i32) {
    %c0_i32 = arith.constant 0 : i32
    %c0_i32_0 = arith.constant 0 : i32
    %c0_i32_1 = arith.constant 0 : i32
    return %c0_i32, %c0_i32_0 : i32, i32
  }
  func.func @transform_13(%arg0: i32) -> (i32, i32, i32) {
    %c0_i32 = arith.constant 0 : i32
    %c0_i32_0 = arith.constant 0 : i32
    %c0_i32_1 = arith.constant 0 : i32
    return %arg0, %c0_i32, %c0_i32_0 : i32, i32, i32
  }
}

</mosaic_0001>

<llo_original>
// kernel: tpu_custom_call.1
$region0: #{tpu_custom_call.1}
  #allocation0 [shape = 'u32[]', space=smem, size = 0x4, offset = 0x4, fixed_abs, tag = 'smem constant byte address 0x4 - core index']
  #allocation1 [shape = 'u32[144,128]{1,0:T(1,128)}', space=vmem, size = 0x12000, scoped, tag = 'internal scratch']
  #allocation2 [shape = 'f32[8,32]{1,0:T(8,128)}', space=vmem, size = 0x1000, scoped, tag = 'scratch operand']
  %s0 = inlined_call_operand.vmem [shape: f32[2,8,32], index: 0, kind: input, shape index: {}]
  %s1 = inlined_call_operand.vmem [shape: bf16[32,96], index: 1, kind: input, shape index: {}]
  %s2 = inlined_call_operand.vmem [shape: f32[1,96], index: 2, kind: input, shape index: {}]
  %s3 = inlined_call_operand.vmem [shape: bf16[32,32], index: 3, kind: input, shape index: {}]
  %s4 = inlined_call_operand.vmem [shape: f32[1,32], index: 4, kind: input, shape index: {}]
  %s5 = inlined_call_operand.vmem [shape: f32[1,32], index: 5, kind: input, shape index: {}]
  %s6 = inlined_call_operand.vmem [shape: f32[1,32], index: 6, kind: input, shape index: {}]
  %s7 = inlined_call_operand.hbm [shape: bf16[32,64], index: 7, kind: input, shape index: {}]
  %s8 = inlined_call_operand.vmem [shape: f32[1,64], index: 8, kind: input, shape index: {}]
  %s9 = inlined_call_operand.vmem [shape: bf16[64,32], index: 9, kind: input, shape index: {}]
  %s10 = inlined_call_operand.vmem [shape: f32[1,32], index: 10, kind: input, shape index: {}]
  %s11 = inlined_call_operand.vmem [shape: f32[1,32], index: 11, kind: input, shape index: {}]
  %s12 = inlined_call_operand.vmem [shape: f32[1,32], index: 12, kind: input, shape index: {}]
  %s13 = inlined_call_operand.hbm [shape: f32[2,8,32], index: 13, kind: output, shape index: {}]
  %s14 = sld [smem:[#allocation0]]
  $region89: #{tpu_custom_call.1} parent=0
    _
  %s16 = ssub.s32 1, %s14
  %s17 = scalar_select 0, %s16, %s14
  $region1: #{tpu_custom_call.1} parent=0
    #allocation3 [shape = 'u8[8192]{0}', space=vmem, size = 0x2000, scoped, tag = 'input window, operand 7, single buffered']
    #allocation4 [shape = 's32[2]{0}', space=sflag, size = 0x8, scoped, tag = 'scoped memory for tpu_custom_call.1']
    #allocation5 [shape = 's32[2]{0}', space=sflag, size = 0x8, scoped, tag = 'scoped memory for tpu_custom_call.1']
    #allocation6 [shape = 'u8[8192]{0}', space=vmem, size = 0x2000, scoped, tag = 'output window, operand 0']
    %18 = vsyncpa [#allocation4], 0
    %19 = vsyncpa [#allocation5], 0
    %s20 = scalar_lea.sflag [#allocation5], 1
    %21 = vsyncpa %s20, 0
    loop: start=0, step=1, limit=4
    $region2: #{tpu_custom_call.1} parent=1 // loop_pre_header
      _
    $region3: #{tpu_custom_call.1} parent=1 // loop_header
      %s23 = sphi 0, %s27
      %p24 = scmp.ge.s32.totalorder %s23, 4
      %s33 = sphi 0, %s35
      %s36 = sphi 0, %s33
      %s37 = sphi 0, %s36
      %s53 = sphi 0, %s37
      %s57 = sphi 0, %s57
      %s59 = sphi 0, %s57
      %s60 = sphi 0, %s59
      %s74 = sphi 0, %s60
      %s78 = sphi 0, %s78
      %s80 = sphi 0, %s78
      %s81 = sphi 0, %s80
      %s95 = sphi 0, %s81
      %s99 = sphi 0, %s99
      %s101 = sphi 0, %s99
      %s102 = sphi 0, %s101
      %s116 = sphi 0, %s102
      %s120 = sphi 0, %s120
      %s122 = sphi 0, %s120
      %s123 = sphi 0, %s122
      %s137 = sphi 0, %s123
      %s141 = sphi 0, %s141
      %s143 = sphi 0, %s141
      %s144 = sphi 0, %s143
      %s158 = sphi 0, %s144
      %s162 = sphi 0, %s162
      %s164 = sphi 0, %s162
      %s165 = sphi 0, %s164
      %s179 = sphi 0, %s165
      %s183 = sphi 0, %s183
      %s185 = sphi 0, %s183
      %s186 = sphi 0, %s185
      %s200 = sphi 0, %s186
      %s204 = sphi 0, %s204
      %s206 = sphi 0, %s204
      %s207 = sphi 0, %s206
      %s221 = sphi 0, %s207
      %s225 = sphi 0, %s225
      %s227 = sphi 0, %s225
      %s228 = sphi 0, %s227
      %s242 = sphi 0, %s228
      %s246 = sphi 0, %s246
      %s248 = sphi 0, %s246
      %s249 = sphi 0, %s248
      %s263 = sphi 0, %s249
      %s267 = sphi 0, %s267
      %s269 = sphi 0, %s267
      %s270 = sphi 0, %s269
      %s284 = sphi 0, %s270
      %s288 = sphi 0, %s288
      %s290 = sphi 0, %s288
      %s291 = sphi 0, %s290
      %s305 = sphi 0, %s291
      %s311 = sphi 0, %s313
      %s314 = sphi 0, %s311
      %s315 = sphi 0, %s314
      %s331 = sphi 0, %s315
    $region4: #{tpu_custom_call.1} parent=1 // loop_header_branch
      %26 = sbr.rel (%p24) target = $region8
    $region5: #{tpu_custom_call.1} parent=1 // loop_body
      %s28 = ssub.s32 %s23, 1
      %s29 = ssub.s32 %s23, 2
      %s30 = sadd.s32 %s23, 1
      %s31 = ssub.s32 %s23, %s30
      %p32 = scmp.eq.s32.totalorder %s31, 0
      %s34 = sadd.s32 %s33, 1
      %s35 = scalar_select %p32, %s33, %s34
      %p38 = pneg %p32
      %p39 = scmp.eq.s32.totalorder %s23, 1
      %p40 = por %p38, %p39
      %p41 = scmp.ne.s32.totalorder %s33, %s36
      %p42 = scmp.eq.s32.totalorder %s23, 0
      %p43 = por %p41, %p42
      %p44 = scmp.ne.s32.totalorder %s33, %s36
      %p45 = scmp.eq.s32.totalorder %s28, 1
      %p46 = por %p44, %p45
      %p47 = scmp.ne.s32.totalorder %s36, %s37
      %p48 = scmp.eq.s32.totalorder %s28, 0
      %p49 = por %p47, %p48
      %p50 = scmp.ne.s32.totalorder %s36, %s37
      %p51 = scmp.eq.s32.totalorder %s29, 1
      %p52 = por %p50, %p51
      %p54 = scmp.ne.s32.totalorder %s37, %s53
      %p55 = scmp.eq.s32.totalorder %s29, 0
      %p56 = por %p54, %p55
      %s58 = sadd.s32 %s57, 1
      %p61 = scmp.eq.s32.totalorder %s23, 1
      %p62 = scmp.ne.s32.totalorder %s57, %s59
      %p63 = scmp.eq.s32.totalorder %s23, 0
      %p64 = por %p62, %p63
      %p65 = scmp.ne.s32.totalorder %s57, %s59
      %p66 = scmp.eq.s32.totalorder %s28, 1
      %p67 = por %p65, %p66
      %p68 = scmp.ne.s32.totalorder %s59, %s60
      %p69 = scmp.eq.s32.totalorder %s28, 0
      %p70 = por %p68, %p69
      %p71 = scmp.ne.s32.totalorder %s59, %s60
      %p72 = scmp.eq.s32.totalorder %s29, 1
      %p73 = por %p71, %p72
      %p75 = scmp.ne.s32.totalorder %s60, %s74
      %p76 = scmp.eq.s32.totalorder %s29, 0
      %p77 = por %p75, %p76
      %s79 = sadd.s32 %s78, 1
      %p82 = scmp.eq.s32.totalorder %s23, 1
      %p83 = scmp.ne.s32.totalorder %s78, %s80
      %p84 = scmp.eq.s32.totalorder %s23, 0
      %p85 = por %p83, %p84
      %p86 = scmp.ne.s32.totalorder %s78, %s80
      %p87 = scmp.eq.s32.totalorder %s28, 1
      %p88 = por %p86, %p87
      %p89 = scmp.ne.s32.totalorder %s80, %s81
      %p90 = scmp.eq.s32.totalorder %s28, 0
      %p91 = por %p89, %p90
      %p92 = scmp.ne.s32.totalorder %s80, %s81
      %p93 = scmp.eq.s32.totalorder %s29, 1
      %p94 = por %p92, %p93
      %p96 = scmp.ne.s32.totalorder %s81, %s95
      %p97 = scmp.eq.s32.totalorder %s29, 0
      %p98 = por %p96, %p97
      %s100 = sadd.s32 %s99, 1
      %p103 = scmp.eq.s32.totalorder %s23, 1
      %p104 = scmp.ne.s32.totalorder %s99, %s101
      %p105 = scmp.eq.s32.totalorder %s23, 0
      %p106 = por %p104, %p105
      %p107 = scmp.ne.s32.totalorder %s99, %s101
      %p108 = scmp.eq.s32.totalorder %s28, 1
      %p109 = por %p107, %p108
      %p110 = scmp.ne.s32.totalorder %s101, %s102
      %p111 = scmp.eq.s32.totalorder %s28, 0
      %p112 = por %p110, %p111
      %p113 = scmp.ne.s32.totalorder %s101, %s102
      %p114 = scmp.eq.s32.totalorder %s29, 1
      %p115 = por %p113, %p114
      %p117 = scmp.ne.s32.totalorder %s102, %s116
      %p118 = scmp.eq.s32.totalorder %s29, 0
      %p119 = por %p117, %p118
      %s121 = sadd.s32 %s120, 1
      %p124 = scmp.eq.s32.totalorder %s23, 1
      %p125 = scmp.ne.s32.totalorder %s120, %s122
      %p126 = scmp.eq.s32.totalorder %s23, 0
      %p127 = por %p125, %p126
      %p128 = scmp.ne.s32.totalorder %s120, %s122
      %p129 = scmp.eq.s32.totalorder %s28, 1
      %p130 = por %p128, %p129
      %p131 = scmp.ne.s32.totalorder %s122, %s123
      %p132 = scmp.eq.s32.totalorder %s28, 0
      %p133 = por %p131, %p132
      %p134 = scmp.ne.s32.totalorder %s122, %s123
      %p135 = scmp.eq.s32.totalorder %s29, 1
      %p136 = por %p134, %p135
      %p138 = scmp.ne.s32.totalorder %s123, %s137
      %p139 = scmp.eq.s32.totalorder %s29, 0
      %p140 = por %p138, %p139
      %s142 = sadd.s32 %s141, 1
      %p145 = scmp.eq.s32.totalorder %s23, 1
      %p146 = scmp.ne.s32.totalorder %s141, %s143
      %p147 = scmp.eq.s32.totalorder %s23, 0
      %p148 = por %p146, %p147
      %p149 = scmp.ne.s32.totalorder %s141, %s143
      %p150 = scmp.eq.s32.totalorder %s28, 1
      %p151 = por %p149, %p150
      %p152 = scmp.ne.s32.totalorder %s143, %s144
      %p153 = scmp.eq.s32.totalorder %s28, 0
      %p154 = por %p152, %p153
      %p155 = scmp.ne.s32.totalorder %s143, %s144
      %p156 = scmp.eq.s32.totalorder %s29, 1
      %p157 = por %p155, %p156
      %p159 = scmp.ne.s32.totalorder %s144, %s158
      %p160 = scmp.eq.s32.totalorder %s29, 0
      %p161 = por %p159, %p160
      %s163 = sadd.s32 %s162, 1
      %p166 = scmp.eq.s32.totalorder %s23, 1
      %p167 = scmp.ne.s32.totalorder %s162, %s164
      %p168 = scmp.eq.s32.totalorder %s23, 0
      %p169 = por %p167, %p168
      %p170 = scmp.ne.s32.totalorder %s162, %s164
      %p171 = scmp.eq.s32.totalorder %s28, 1
      %p172 = por %p170, %p171
      %p173 = scmp.ne.s32.totalorder %s164, %s165
      %p174 = scmp.eq.s32.totalorder %s28, 0
      %p175 = por %p173, %p174
      %p176 = scmp.ne.s32.totalorder %s164, %s165
      %p177 = scmp.eq.s32.totalorder %s29, 1
      %p178 = por %p176, %p177
      %p180 = scmp.ne.s32.totalorder %s165, %s179
      %p181 = scmp.eq.s32.totalorder %s29, 0
      %p182 = por %p180, %p181
      %s184 = sadd.s32 %s183, 1
      %p187 = scmp.eq.s32.totalorder %s23, 1
      %p188 = scmp.ne.s32.totalorder %s183, %s185
      %p189 = scmp.eq.s32.totalorder %s23, 0
      %p190 = por %p188, %p189
      %p191 = scmp.ne.s32.totalorder %s183, %s185
      %p192 = scmp.eq.s32.totalorder %s28, 1
      %p193 = por %p191, %p192
      %p194 = scmp.ne.s32.totalorder %s185, %s186
      %p195 = scmp.eq.s32.totalorder %s28, 0
      %p196 = por %p194, %p195
      %p197 = scmp.ne.s32.totalorder %s185, %s186
      %p198 = scmp.eq.s32.totalorder %s29, 1
      %p199 = por %p197, %p198
      %p201 = scmp.ne.s32.totalorder %s186, %s200
      %p202 = scmp.eq.s32.totalorder %s29, 0
      %p203 = por %p201, %p202
      %s205 = sadd.s32 %s204, 1
      %p208 = scmp.eq.s32.totalorder %s23, 1
      %p209 = scmp.ne.s32.totalorder %s204, %s206
      %p210 = scmp.eq.s32.totalorder %s23, 0
      %p211 = por %p209, %p210
      %p212 = scmp.ne.s32.totalorder %s204, %s206
      %p213 = scmp.eq.s32.totalorder %s28, 1
      %p214 = por %p212, %p213
      %p215 = scmp.ne.s32.totalorder %s206, %s207
      %p216 = scmp.eq.s32.totalorder %s28, 0
      %p217 = por %p215, %p216
      %p218 = scmp.ne.s32.totalorder %s206, %s207
      %p219 = scmp.eq.s32.totalorder %s29, 1
      %p220 = por %p218, %p219
      %p222 = scmp.ne.s32.totalorder %s207, %s221
      %p223 = scmp.eq.s32.totalorder %s29, 0
      %p224 = por %p222, %p223
      %s226 = sadd.s32 %s225, 1
      %p229 = scmp.eq.s32.totalorder %s23, 1
      %p230 = scmp.ne.s32.totalorder %s225, %s227
      %p231 = scmp.eq.s32.totalorder %s23, 0
      %p232 = por %p230, %p231
      %p233 = scmp.ne.s32.totalorder %s225, %s227
      %p234 = scmp.eq.s32.totalorder %s28, 1
      %p235 = por %p233, %p234
      %p236 = scmp.ne.s32.totalorder %s227, %s228
      %p237 = scmp.eq.s32.totalorder %s28, 0
      %p238 = por %p236, %p237
      %p239 = scmp.ne.s32.totalorder %s227, %s228
      %p240 = scmp.eq.s32.totalorder %s29, 1
      %p241 = por %p239, %p240
      %p243 = scmp.ne.s32.totalorder %s228, %s242
      %p244 = scmp.eq.s32.totalorder %s29, 0
      %p245 = por %p243, %p244
      %s247 = sadd.s32 %s246, 1
      %p250 = scmp.eq.s32.totalorder %s23, 1
      %p251 = scmp.ne.s32.totalorder %s246, %s248
      %p252 = scmp.eq.s32.totalorder %s23, 0
      %p253 = por %p251, %p252
      %p254 = scmp.ne.s32.totalorder %s246, %s248
      %p255 = scmp.eq.s32.totalorder %s28, 1
      %p256 = por %p254, %p255
      %p257 = scmp.ne.s32.totalorder %s248, %s249
      %p258 = scmp.eq.s32.totalorder %s28, 0
      %p259 = por %p257, %p258
      %p260 = scmp.ne.s32.totalorder %s248, %s249
      %p261 = scmp.eq.s32.totalorder %s29, 1
      %p262 = por %p260, %p261
      %p264 = scmp.ne.s32.totalorder %s249, %s263
      %p265 = scmp.eq.s32.totalorder %s29, 0
      %p266 = por %p264, %p265
      %s268 = sadd.s32 %s267, 1
      %p271 = scmp.eq.s32.totalorder %s23, 1
      %p272 = scmp.ne.s32.totalorder %s267, %s269
      %p273 = scmp.eq.s32.totalorder %s23, 0
      %p274 = por %p272, %p273
      %p275 = scmp.ne.s32.totalorder %s267, %s269
      %p276 = scmp.eq.s32.totalorder %s28, 1
      %p277 = por %p275, %p276
      %p278 = scmp.ne.s32.totalorder %s269, %s270
      %p279 = scmp.eq.s32.totalorder %s28, 0
      %p280 = por %p278, %p279
      %p281 = scmp.ne.s32.totalorder %s269, %s270
      %p282 = scmp.eq.s32.totalorder %s29, 1
      %p283 = por %p281, %p282
      %p285 = scmp.ne.s32.totalorder %s270, %s284
      %p286 = scmp.eq.s32.totalorder %s29, 0
      %p287 = por %p285, %p286
      %s289 = sadd.s32 %s288, 1
      %p292 = scmp.eq.s32.totalorder %s23, 1
      %p293 = scmp.ne.s32.totalorder %s288, %s290
      %p294 = scmp.eq.s32.totalorder %s23, 0
      %p295 = por %p293, %p294
      %p296 = scmp.ne.s32.totalorder %s288, %s290
      %p297 = scmp.eq.s32.totalorder %s28, 1
      %p298 = por %p296, %p297
      %p299 = scmp.ne.s32.totalorder %s290, %s291
      %p300 = scmp.eq.s32.totalorder %s28, 0
      %p301 = por %p299, %p300
      %p302 = scmp.ne.s32.totalorder %s290, %s291
      %p303 = scmp.eq.s32.totalorder %s29, 1
      %p304 = por %p302, %p303
      %p306 = scmp.ne.s32.totalorder %s291, %s305
      %p307 = scmp.eq.s32.totalorder %s29, 0
      %p308 = por %p306, %p307
      %s309 = ssub.s32 %s23, %s30
      %p310 = scmp.eq.s32.totalorder %s309, 0
      %s312 = sadd.s32 %s311, 1
      %s313 = scalar_select %p310, %s311, %s312
      %p316 = pneg %p310
      %p317 = scmp.eq.s32.totalorder %s23, 1
      %p318 = por %p316, %p317
      %p319 = scmp.ne.s32.totalorder %s311, %s314
      %p320 = scmp.eq.s32.totalorder %s23, 0
      %p321 = por %p319, %p320
      %p322 = scmp.ne.s32.totalorder %s311, %s314
      %p323 = scmp.eq.s32.totalorder %s28, 1
      %p324 = por %p322, %p323
      %p325 = scmp.ne.s32.totalorder %s314, %s315
      %p326 = scmp.eq.s32.totalorder %s28, 0
      %p327 = por %p325, %p326
      %p328 = scmp.ne.s32.totalorder %s314, %s315
      %p329 = scmp.eq.s32.totalorder %s29, 1
      %p330 = por %p328, %p329
      %p332 = scmp.ne.s32.totalorder %s315, %s331
      %p333 = scmp.eq.s32.totalorder %s29, 0
      %p334 = por %p332, %p333
      %p335 = scmp.le.s32.totalorder 1, %s23
      %p336 = scmp.lt.s32.totalorder %s23, 3
      %p337 = pnand %p335, %p336
      %p338 = pneg %p337
      // Predicated region
      $region9: #{tpu_custom_call.1} parent=5 // pred_check
        _
      $region10: #{tpu_custom_call.1} parent=5 // pred_check_branch
        %340 = sbr.rel (%p337) target = $region12
      $region11: #{tpu_custom_call.1} parent=5 // pred_region
        %s341 = ssub.s32 %s23, 1
        // Predicated region
        $region13: #{tpu_custom_call.1} parent=11 // pred_check
          %p342 = pneg %p70
        $region14: #{tpu_custom_call.1} parent=11 // pred_check_branch
          %344 = sbr.rel (%p342) target = $region16
        $region15: #{tpu_custom_call.1} parent=11 // pred_region
          _
        $region16: #{tpu_custom_call.1} parent=11 // pred_fallthru
          _
        // Predicated region
        $region17: #{tpu_custom_call.1} parent=11 // pred_check
          %p345 = pneg %p91
        $region18: #{tpu_custom_call.1} parent=11 // pred_check_branch
          %347 = sbr.rel (%p345) target = $region20
        $region19: #{tpu_custom_call.1} parent=11 // pred_region
          _
        $region20: #{tpu_custom_call.1} parent=11 // pred_fallthru
          _
        // Predicated region
        $region21: #{tpu_custom_call.1} parent=11 // pred_check
          %p348 = pneg %p112
        $region22: #{tpu_custom_call.1} parent=11 // pred_check_branch
          %350 = sbr.rel (%p348) target = $region24
        $region23: #{tpu_custom_call.1} parent=11 // pred_region
          _
        $region24: #{tpu_custom_call.1} parent=11 // pred_fallthru
          _
        // Predicated region
        $region25: #{tpu_custom_call.1} parent=11 // pred_check
          %p351 = pneg %p133
        $region26: #{tpu_custom_call.1} parent=11 // pred_check_branch
          %353 = sbr.rel (%p351) target = $region28
        $region27: #{tpu_custom_call.1} parent=11 // pred_region
          _
        $region28: #{tpu_custom_call.1} parent=11 // pred_fallthru
          _
        // Predicated region
        $region29: #{tpu_custom_call.1} parent=11 // pred_check
          %p354 = pneg %p154
        $region30: #{tpu_custom_call.1} parent=11 // pred_check_branch
          %356 = sbr.rel (%p354) target = $region32
        $region31: #{tpu_custom_call.1} parent=11 // pred_region
          _
        $region32: #{tpu_custom_call.1} parent=11 // pred_fallthru
          _
        // Predicated region
        $region33: #{tpu_custom_call.1} parent=11 // pred_check
          %p357 = pneg %p175
        $region34: #{tpu_custom_call.1} parent=11 // pred_check_branch
          %359 = sbr.rel (%p357) target = $region36
        $region35: #{tpu_custom_call.1} parent=11 // pred_region
          _
        $region36: #{tpu_custom_call.1} parent=11 // pred_fallthru
          _
        // Predicated region
        $region37: #{tpu_custom_call.1} parent=11 // pred_check
          %p360 = pneg %p196
        $region38: #{tpu_custom_call.1} parent=11 // pred_check_branch
          %362 = sbr.rel (%p360) target = $region40
        $region39: #{tpu_custom_call.1} parent=11 // pred_region
          %s364 = ssub.s32 256, 256
          %365 = vsyncadd [#allocation4], %s364
          %s366 = sshll.u32 [#allocation3], 4
          %s367 = int_to_ptr.vmem [resolvable:$true] %s366
          %372 = dma.hbm_to_vmem [thread:$0]  %s7, 256, %s367, [#allocation4], 64, 64, 4
        $region40: #{tpu_custom_call.1} parent=11 // pred_fallthru
          _
        // Predicated region
        $region41: #{tpu_custom_call.1} parent=11 // pred_check
          %p373 = pneg %p217
        $region42: #{tpu_custom_call.1} parent=11 // pred_check_branch
          %375 = sbr.rel (%p373) target = $region44
        $region43: #{tpu_custom_call.1} parent=11 // pred_region
          _
        $region44: #{tpu_custom_call.1} parent=11 // pred_fallthru
          _
        // Predicated region
        $region45: #{tpu_custom_call.1} parent=11 // pred_check
          %p376 = pneg %p238
        $region46: #{tpu_custom_call.1} parent=11 // pred_check_branch
          %378 = sbr.rel (%p376) target = $region48
        $region47: #{tpu_custom_call.1} parent=11 // pred_region
          _
        $region48: #{tpu_custom_call.1} parent=11 // pred_fallthru
          _
        // Predicated region
        $region49: #{tpu_custom_call.1} parent=11 // pred_check
          %p379 = pneg %p259
        $region50: #{tpu_custom_call.1} parent=11 // pred_check_branch
          %381 = sbr.rel (%p379) target = $region52
        $region51: #{tpu_custom_call.1} parent=11 // pred_region
          _
        $region52: #{tpu_custom_call.1} parent=11 // pred_fallthru
          _
        // Predicated region
        $region53: #{tpu_custom_call.1} parent=11 // pred_check
          %p382 = pneg %p280
        $region54: #{tpu_custom_call.1} parent=11 // pred_check_branch
          %384 = sbr.rel (%p382) target = $region56
        $region55: #{tpu_custom_call.1} parent=11 // pred_region
          _
        $region56: #{tpu_custom_call.1} parent=11 // pred_fallthru
          _
        // Predicated region
        $region57: #{tpu_custom_call.1} parent=11 // pred_check
          %p385 = pneg %p301
        $region58: #{tpu_custom_call.1} parent=11 // pred_check_branch
          %387 = sbr.rel (%p385) target = $region60
        $region59: #{tpu_custom_call.1} parent=11 // pred_region
          _
        $region60: #{tpu_custom_call.1} parent=11 // pred_fallthru
          _
      $region12: #{tpu_custom_call.1} parent=5 // pred_fallthru
        _
      %p388 = scmp.lt.s32.totalorder %s23, 2
      // Predicated region
      $region61: #{tpu_custom_call.1} parent=5 // pred_check
        %p389 = pneg %p388
      $region62: #{tpu_custom_call.1} parent=5 // pred_check_branch
        %391 = sbr.rel (%p389) target = $region64
      $region63: #{tpu_custom_call.1} parent=5 // pred_region
        // Predicated region
        $region65: #{tpu_custom_call.1} parent=63 // pred_check
          %p392 = pneg %p43
        $region66: #{tpu_custom_call.1} parent=63 // pred_check_branch
          %394 = sbr.rel (%p392) target = $region68
        $region67: #{tpu_custom_call.1} parent=63 // pred_region
          %p395 = scmp.lt.s32.totalorder %s23, 1
          %s396 = scalar_select %p395, %s23, 1
          %s397 = smul.addr %s396, 8
          %s398 = scalar_lea.vmem %s0, %s397
        $region68: #{tpu_custom_call.1} parent=63 // pred_fallthru
          _
      $region64: #{tpu_custom_call.1} parent=5 // pred_fallthru
        _
      %p399 = scmp.le.s32.totalorder 1, %s23
      %p400 = scmp.lt.s32.totalorder %s23, 3
      %p401 = pnand %p399, %p400
      %p402 = pneg %p401
      // Predicated region
      $region69: #{tpu_custom_call.1} parent=5 // pred_check
        _
      $region70: #{tpu_custom_call.1} parent=5 // pred_check_branch
        %404 = sbr.rel (%p401) target = $region72
      $region71: #{tpu_custom_call.1} parent=5 // pred_region
        %s405 = ssub.s32 %s23, 1
        // Predicated region
        $region73: #{tpu_custom_call.1} parent=71 // pred_check
          %p406 = pneg %p196
        $region74: #{tpu_custom_call.1} parent=71 // pred_check_branch
          %408 = sbr.rel (%p406) target = $region76
        $region75: #{tpu_custom_call.1} parent=71 // pred_region
          %409 = dma.done [#allocation4], 256
        $region76: #{tpu_custom_call.1} parent=71 // pred_fallthru
          _
        %p410 = scmp.lt.s32.totalorder %s28, 1
        %s411 = scalar_select %p410, %s28, 1
        %s412 = smul.addr %s411, 8
        %s413 = scalar_lea.vmem %s0, %s412
        %p414 = pneg %p49
        %p415 = pneg %p46
        %p416 = pneg %p70
        %p417 = pneg %p67
        %p418 = pneg %p91
        %p419 = pneg %p88
        %p420 = pneg %p112
        %p421 = pneg %p109
        %p422 = pneg %p133
        %p423 = pneg %p130
        %p424 = pneg %p154
        %p425 = pneg %p151
        %p426 = pneg %p175
        %p427 = pneg %p172
        %p428 = pneg %p196
        %p429 = pneg %p193
        %p430 = pneg %p217
        %p431 = pneg %p214
        %p432 = pneg %p238
        %p433 = pneg %p235
        %p434 = pneg %p259
        %p435 = pneg %p256
        %p436 = pneg %p280
        %p437 = pneg %p277
        %p438 = pneg %p301
        %p439 = pneg %p298
        %p440 = pneg %p327
        %p441 = pneg %p324
        %s442 = sand.u32 %s314, 1
        %s443 = scalar_lea.sflag [#allocation5], %s442
        %s444 = sand.u32 %s314, 1
        %s445 = smul.addr %s444, 8
        %s446 = scalar_lea.vmem [#allocation6], %s445
        %p447 = scmp.lt.s32.totalorder %s28, 1
        %s448 = scalar_select %p447, %s28, 1
        %s449 = smul.addr %s448, 8
        %s450 = scalar_lea.vmem %s0, %s449
        %v452 = vld [vmem:[%s450] sm:$0xff]
        %v453 = vpack.c.bf16 %v452, %v452
        %v454 = vld [vmem:[%s1] sm:$0xf]
        %v455 = vld [vmem:[%s1 + $0x4] sm:$0xf]
        %v456 = vld [vmem:[%s1 + $0x8] sm:$0xf]
        %v457 = vld [vmem:[%s1 + $0xc] sm:$0xf]
        %v458 = vld [vmem:[%s2] sm:$0x1]
        %v460 = vlaneseq
        %v461 = vshrl.u32 %v460, 7
        %v462 = vsub.s32 0, %v461
        %v463 = vrot.slane %v458, %v462
        %v469 = vunpack.c.l.b16 %v454
        %v470 = vunpack.c.l.b16 %v455
        %v471 = vunpack.c.l.b16 %v456
        %v472 = vunpack.c.l.b16 %v457
        %v473 = vpack.c.b16 %v470, %v469
        %v474 = vpack.c.b16 %v472, %v471
        %vm477 = vcmask 261120
        %v479 = vsel %vm477, %v453, 0
        %481 = vmatprep.subr.bf16.mxu0 0
        %482 = vmatpush1.bf16.msra.mxu0 %v473
        %483 = vmatprep.subr.bf16.mxu0 0
        %484 = vmatpush1.bf16.msra.mxu0 %v474
        %485 = vmatprep.subr.bf16.mxu0 0
        %486 = vmatpush1.bf16.msra.mxu0 0
        %487 = vmatprep.subr.bf16.mxu0 0
        %488 = vmatpush1.bf16.msra.mxu0 0
        %489 = vmatprep.subr.bf16.mxu0 0
        %490 = vmatpush1.bf16.msra.mxu0 0
        %491 = vmatprep.subr.bf16.mxu0 0
        %492 = vmatpush1.bf16.msra.mxu0 0
        %493 = vmatprep.subr.bf16.mxu0 0
        %494 = vmatpush1.bf16.msra.mxu0 0
        %495 = vmatprep.subr.bf16.mxu0 0
        %496 = vmatpush1.bf16.msra.mxu0 0
        %497 = vmatprep.subr.bf16.mxu0 0
        %498 = vmatpush1.bf16.msra.mxu0 0
        %499 = vmatprep.subr.bf16.mxu0 0
        %500 = vmatpush1.bf16.msra.mxu0 0
        %501 = vmatprep.subr.bf16.mxu0 0
        %502 = vmatpush1.bf16.msra.mxu0 0
        %503 = vmatprep.subr.bf16.mxu0 0
        %504 = vmatpush1.bf16.msra.mxu0 0
        %505 = vmatprep.subr.bf16.mxu0 0
        %506 = vmatpush1.bf16.msra.mxu0 0
        %507 = vmatprep.subr.bf16.mxu0 0
        %508 = vmatpush1.bf16.msra.mxu0 0
        %509 = vmatprep.subr.bf16.mxu0 0
        %510 = vmatpush1.bf16.msra.mxu0 0
        %511 = vmatprep.subr.bf16.mxu0 0
        %512 = vmatpush1.bf16.msra.mxu0 0
        %513 = vmatprep.mubr.bf16.mxu0 0
        %514 = vmatmul.mubr.bf16.gmra.mrb[0].mxu0 %v479
        %v515 = vpop.f32.mrb[0].mxu0
        %v516 = vadd.f32 %v463, %v515
        %v517 = vpop.f32.mrb[0].mxu0
        %v518 = vpop.f32.mrb[0].mxu0
        %v519 = vpop.f32.mrb[0].mxu0
        %520 = vdwg.mxu0
        %v521 = vpack.c.bf16 %v516, %v516
        %523 = vrot.lane.b32.xlu0 %v521, 96
        %v524 = vpop.permute.xlu0 %523
        %vm525 = vcmask 64512
        %v527 = vsel %vm525, %v521, 0
        %v530 = vsel %vm525, %v524, 0
        %532 = vmatprep.subr.bf16.mxu0 0
        %533 = vmatpush1.bf16.xpose.msra.mxu0 %v530
        %534 = vmatprep.subr.bf16.mxu0 0
        %535 = vmatpush1.bf16.xpose.msra.mxu0 0
        %536 = vmatprep.subr.bf16.mxu0 0
        %537 = vmatpush1.bf16.xpose.msra.mxu0 0
        %538 = vmatprep.subr.bf16.mxu0 0
        %539 = vmatpush1.bf16.xpose.msra.mxu0 0
        %540 = vmatprep.subr.bf16.mxu0 0
        %541 = vmatpush1.bf16.xpose.msra.mxu0 0
        %542 = vmatprep.subr.bf16.mxu0 0
        %543 = vmatpush1.bf16.xpose.msra.mxu0 0
        %544 = vmatprep.subr.bf16.mxu0 0
        %545 = vmatpush1.bf16.xpose.msra.mxu0 0
        %546 = vmatprep.subr.bf16.mxu0 0
        %547 = vmatpush1.bf16.xpose.msra.mxu0 0
        %548 = vmatprep.subr.bf16.mxu0 0
        %549 = vmatpush1.bf16.xpose.msra.mxu0 0
        %550 = vmatprep.subr.bf16.mxu0 0
        %551 = vmatpush1.bf16.xpose.msra.mxu0 0
        %552 = vmatprep.subr.bf16.mxu0 0
        %553 = vmatpush1.bf16.xpose.msra.mxu0 0
        %554 = vmatprep.subr.bf16.mxu0 0
        %555 = vmatpush1.bf16.xpose.msra.mxu0 0
        %556 = vmatprep.subr.bf16.mxu0 0
        %557 = vmatpush1.bf16.xpose.msra.mxu0 0
        %558 = vmatprep.subr.bf16.mxu0 0
        %559 = vmatpush1.bf16.xpose.msra.mxu0 0
        %560 = vmatprep.subr.bf16.mxu0 0
        %561 = vmatpush1.bf16.xpose.msra.mxu0 0
        %562 = vmatprep.subr.bf16.mxu0 0
        %563 = vmatpush1.bf16.xpose.msra.mxu0 0
        %564 = vmatprep.mubr.bf16.mxu0 0
        %565 = vmatmul.mubr.bf16.gmra.mrb[0].mxu0 %v527
        %v566 = vpop.f32.mrb[0].mxu0
        %v567 = vadd.f32 0.0, %v566
        %v568 = vpop.f32.mrb[0].mxu0
        %v569 = vpop.f32.mrb[0].mxu0
        %v570 = vpop.f32.mrb[0].mxu0
        %571 = vdwg.mxu0
        %v572 = vsel %vm525, %v567, -inf
        %573 = vmax.xlane.f32.xlu0 %v572
        %v574 = vpop.xlane.xlu0 %573
        %v575 = vsub.f32 %v567, %v574
        %v576 = vpack.c.bf16 %v575, %v575
        %v578 = vmul.bf16 %v576, 1069105081
        %v579 = vpow.bf16.pop %v578
        %v580 = vunpack.c.l.bf16 %v579
        %v581 = vsel %vm525, %v580, 0.0
        %582 = vadd.xlane.f32.xlu0 %v581
        %v583 = vpop.xlane.xlu0 %582
        %584 = vrot.lane.b32.xlu0 %v521, 64
        %v585 = vpop.permute.xlu0 %584
        %v587 = vsel %vm525, %v579, 0
        %vm589 = vcmask 1043456
        %v591 = vsel %vm589, %v585, 0
        %593 = vmatprep.subr.bf16.mxu0 0
        %594 = vmatpush1.bf16.msra.mxu0 %v591
        %595 = vmatprep.subr.bf16.mxu0 0
        %596 = vmatpush1.bf16.msra.mxu0 0
        %597 = vmatprep.subr.bf16.mxu0 0
        %598 = vmatpush1.bf16.msra.mxu0 0
        %599 = vmatprep.subr.bf16.mxu0 0
        %600 = vmatpush1.bf16.msra.mxu0 0
        %601 = vmatprep.subr.bf16.mxu0 0
        %602 = vmatpush1.bf16.msra.mxu0 0
        %603 = vmatprep.subr.bf16.mxu0 0
        %604 = vmatpush1.bf16.msra.mxu0 0
        %605 = vmatprep.subr.bf16.mxu0 0
        %606 = vmatpush1.bf16.msra.mxu0 0
        %607 = vmatprep.subr.bf16.mxu0 0
        %608 = vmatpush1.bf16.msra.mxu0 0
        %609 = vmatprep.subr.bf16.mxu0 0
        %610 = vmatpush1.bf16.msra.mxu0 0
        %611 = vmatprep.subr.bf16.mxu0 0
        %612 = vmatpush1.bf16.msra.mxu0 0
        %613 = vmatprep.subr.bf16.mxu0 0
        %614 = vmatpush1.bf16.msra.mxu0 0
        %615 = vmatprep.subr.bf16.mxu0 0
        %616 = vmatpush1.bf16.msra.mxu0 0
        %617 = vmatprep.subr.bf16.mxu0 0
        %618 = vmatpush1.bf16.msra.mxu0 0
        %619 = vmatprep.subr.bf16.mxu0 0
        %620 = vmatpush1.bf16.msra.mxu0 0
        %621 = vmatprep.subr.bf16.mxu0 0
        %622 = vmatpush1.bf16.msra.mxu0 0
        %623 = vmatprep.subr.bf16.mxu0 0
        %624 = vmatpush1.bf16.msra.mxu0 0
        %625 = vmatprep.mubr.bf16.mxu0 0
        %626 = vmatmul.mubr.bf16.gmra.mrb[0].mxu0 %v587
        %v627 = vpop.f32.mrb[0].mxu0
        %v628 = vadd.f32 0.0, %v627
        %v629 = vpop.f32.mrb[0].mxu0
        %v630 = vpop.f32.mrb[0].mxu0
        %v631 = vpop.f32.mrb[0].mxu0
        %632 = vdwg.mxu0
        %v633 = vrcp.pop %v583
        %v634 = vmul.f32 %v628, %v633
        %635 = vst.msk [vmem:[#allocation2] sm:$0xff] %vm525, %v634
        %636 = vrot.lane.b32.xlu0 %v521, 120
        %v637 = vpop.permute.xlu0 %636
        %638 = vrot.lane.b32.xlu0 %v521, 88
        %v639 = vpop.permute.xlu0 %638
        %v641 = vsel %vm525, %v637, 0
        %v644 = vsel %vm525, %v639, 0
        %646 = vmatprep.subr.bf16.mxu0 0
        %647 = vmatpush1.bf16.xpose.msra.mxu0 %v644
        %648 = vmatprep.subr.bf16.mxu0 0
        %649 = vmatpush1.bf16.xpose.msra.mxu0 0
        %650 = vmatprep.subr.bf16.mxu0 0
        %651 = vmatpush1.bf16.xpose.msra.mxu0 0
        %652 = vmatprep.subr.bf16.mxu0 0
        %653 = vmatpush1.bf16.xpose.msra.mxu0 0
        %654 = vmatprep.subr.bf16.mxu0 0
        %655 = vmatpush1.bf16.xpose.msra.mxu0 0
        %656 = vmatprep.subr.bf16.mxu0 0
        %657 = vmatpush1.bf16.xpose.msra.mxu0 0
        %658 = vmatprep.subr.bf16.mxu0 0
        %659 = vmatpush1.bf16.xpose.msra.mxu0 0
        %660 = vmatprep.subr.bf16.mxu0 0
        %661 = vmatpush1.bf16.xpose.msra.mxu0 0
        %662 = vmatprep.subr.bf16.mxu0 0
        %663 = vmatpush1.bf16.xpose.msra.mxu0 0
        %664 = vmatprep.subr.bf16.mxu0 0
        %665 = vmatpush1.bf16.xpose.msra.mxu0 0
        %666 = vmatprep.subr.bf16.mxu0 0
        %667 = vmatpush1.bf16.xpose.msra.mxu0 0
        %668 = vmatprep.subr.bf16.mxu0 0
        %669 = vmatpush1.bf16.xpose.msra.mxu0 0
        %670 = vmatprep.subr.bf16.mxu0 0
        %671 = vmatpush1.bf16.xpose.msra.mxu0 0
        %672 = vmatprep.subr.bf16.mxu0 0
        %673 = vmatpush1.bf16.xpose.msra.mxu0 0
        %674 = vmatprep.subr.bf16.mxu0 0
        %675 = vmatpush1.bf16.xpose.msra.mxu0 0
        %676 = vmatprep.subr.bf16.mxu0 0
        %677 = vmatpush1.bf16.xpose.msra.mxu0 0
        %678 = vmatprep.mubr.bf16.mxu0 0
        %679 = vmatmul.mubr.bf16.gmra.mrb[0].mxu0 %v641
        %v680 = vpop.f32.mrb[0].mxu0
        %v681 = vadd.f32 0.0, %v680
        %v682 = vpop.f32.mrb[0].mxu0
        %v683 = vpop.f32.mrb[0].mxu0
        %v684 = vpop.f32.mrb[0].mxu0
        %685 = vdwg.mxu0
        %v686 = vsel %vm525, %v681, -inf
        %687 = vmax.xlane.f32.xlu0 %v686
        %v688 = vpop.xlane.xlu0 %687
        %v689 = vsub.f32 %v681, %v688
        %v690 = vpack.c.bf16 %v689, %v689
        %v692 = vmul.bf16 %v690, 1069105081
        %v693 = vpow.bf16.pop %v692
        %v694 = vunpack.c.l.bf16 %v693
        %v695 = vsel %vm525, %v694, 0.0
        %696 = vadd.xlane.f32.xlu0 %v695
        %v697 = vpop.xlane.xlu0 %696
        %698 = vrot.lane.b32.xlu0 %v521, 56
        %v699 = vpop.permute.xlu0 %698
        %v701 = vsel %vm525, %v693, 0
        %v704 = vsel %vm589, %v699, 0
        %706 = vmatprep.subr.bf16.mxu0 0
        %707 = vmatpush1.bf16.msra.mxu0 %v704
        %708 = vmatprep.subr.bf16.mxu0 0
        %709 = vmatpush1.bf16.msra.mxu0 0
        %710 = vmatprep.subr.bf16.mxu0 0
        %711 = vmatpush1.bf16.msra.mxu0 0
        %712 = vmatprep.subr.bf16.mxu0 0
        %713 = vmatpush1.bf16.msra.mxu0 0
        %714 = vmatprep.subr.bf16.mxu0 0
        %715 = vmatpush1.bf16.msra.mxu0 0
        %716 = vmatprep.subr.bf16.mxu0 0
        %717 = vmatpush1.bf16.msra.mxu0 0
        %718 = vmatprep.subr.bf16.mxu0 0
        %719 = vmatpush1.bf16.msra.mxu0 0
        %720 = vmatprep.subr.bf16.mxu0 0
        %721 = vmatpush1.bf16.msra.mxu0 0
        %722 = vmatprep.subr.bf16.mxu0 0
        %723 = vmatpush1.bf16.msra.mxu0 0
        %724 = vmatprep.subr.bf16.mxu0 0
        %725 = vmatpush1.bf16.msra.mxu0 0
        %726 = vmatprep.subr.bf16.mxu0 0
        %727 = vmatpush1.bf16.msra.mxu0 0
        %728 = vmatprep.subr.bf16.mxu0 0
        %729 = vmatpush1.bf16.msra.mxu0 0
        %730 = vmatprep.subr.bf16.mxu0 0
        %731 = vmatpush1.bf16.msra.mxu0 0
        %732 = vmatprep.subr.bf16.mxu0 0
        %733 = vmatpush1.bf16.msra.mxu0 0
        %734 = vmatprep.subr.bf16.mxu0 0
        %735 = vmatpush1.bf16.msra.mxu0 0
        %736 = vmatprep.subr.bf16.mxu0 0
        %737 = vmatpush1.bf16.msra.mxu0 0
        %738 = vmatprep.mubr.bf16.mxu0 0
        %739 = vmatmul.mubr.bf16.gmra.mrb[0].mxu0 %v701
        %v740 = vpop.f32.mrb[0].mxu0
        %v741 = vadd.f32 0.0, %v740
        %v742 = vpop.f32.mrb[0].mxu0
        %v743 = vpop.f32.mrb[0].mxu0
        %v744 = vpop.f32.mrb[0].mxu0
        %745 = vdwg.mxu0
        %v746 = vrcp.pop %v697
        %v747 = vmul.f32 %v741, %v746
        %749 = vrot.lane.b32.xlu0 %v747, 8
        %v750 = vpop.permute.xlu0 %749
        %vm752 = vcmask 130112
        %753 = vst.msk [vmem:[#allocation2] sm:$0xff] %vm752, %v750
        %754 = vrot.lane.b32.xlu0 %v521, 112
        %v755 = vpop.permute.xlu0 %754
        %756 = vrot.lane.b32.xlu0 %v521, 80
        %v757 = vpop.permute.xlu0 %756
        %v759 = vsel %vm525, %v755, 0
        %v762 = vsel %vm525, %v757, 0
        %764 = vmatprep.subr.bf16.mxu0 0
        %765 = vmatpush1.bf16.xpose.msra.mxu0 %v762
        %766 = vmatprep.subr.bf16.mxu0 0
        %767 = vmatpush1.bf16.xpose.msra.mxu0 0
        %768 = vmatprep.subr.bf16.mxu0 0
        %769 = vmatpush1.bf16.xpose.msra.mxu0 0
        %770 = vmatprep.subr.bf16.mxu0 0
        %771 = vmatpush1.bf16.xpose.msra.mxu0 0
        %772 = vmatprep.subr.bf16.mxu0 0
        %773 = vmatpush1.bf16.xpose.msra.mxu0 0
        %774 = vmatprep.subr.bf16.mxu0 0
        %775 = vmatpush1.bf16.xpose.msra.mxu0 0
        %776 = vmatprep.subr.bf16.mxu0 0
        %777 = vmatpush1.bf16.xpose.msra.mxu0 0
        %778 = vmatprep.subr.bf16.mxu0 0
        %779 = vmatpush1.bf16.xpose.msra.mxu0 0
        %780 = vmatprep.subr.bf16.mxu0 0
        %781 = vmatpush1.bf16.xpose.msra.mxu0 0
        %782 = vmatprep.subr.bf16.mxu0 0
        %783 = vmatpush1.bf16.xpose.msra.mxu0 0
        %784 = vmatprep.subr.bf16.mxu0 0
        %785 = vmatpush1.bf16.xpose.msra.mxu0 0
        %786 = vmatprep.subr.bf16.mxu0 0
        %787 = vmatpush1.bf16.xpose.msra.mxu0 0
        %788 = vmatprep.subr.bf16.mxu0 0
        %789 = vmatpush1.bf16.xpose.msra.mxu0 0
        %790 = vmatprep.subr.bf16.mxu0 0
        %791 = vmatpush1.bf16.xpose.msra.mxu0 0
        %792 = vmatprep.subr.bf16.mxu0 0
        %793 = vmatpush1.bf16.xpose.msra.mxu0 0
        %794 = vmatprep.subr.bf16.mxu0 0
        %795 = vmatpush1.bf16.xpose.msra.mxu0 0
        %796 = vmatprep.mubr.bf16.mxu0 0
        %797 = vmatmul.mubr.bf16.gmra.mrb[0].mxu0 %v759
        %v798 = vpop.f32.mrb[0].mxu0
        %v799 = vadd.f32 0.0, %v798
        %v800 = vpop.f32.mrb[0].mxu0
        %v801 = vpop.f32.mrb[0].mxu0
        %v802 = vpop.f32.mrb[0].mxu0
        %803 = vdwg.mxu0
        %v804 = vsel %vm525, %v799, -inf
        %805 = vmax.xlane.f32.xlu0 %v804
        %v806 = vpop.xlane.xlu0 %805
        %v807 = vsub.f32 %v799, %v806
        %v808 = vpack.c.bf16 %v807, %v807
        %v810 = vmul.bf16 %v808, 1069105081
        %v811 = vpow.bf16.pop %v810
        %v812 = vunpack.c.l.bf16 %v811
        %v813 = vsel %vm525, %v812, 0.0
        %814 = vadd.xlane.f32.xlu0 %v813
        %v815 = vpop.xlane.xlu0 %814
        %816 = vrot.lane.b32.xlu0 %v521, 48
        %v817 = vpop.permute.xlu0 %816
        %v819 = vsel %vm525, %v811, 0
        %v822 = vsel %vm589, %v817, 0
        %824 = vmatprep.subr.bf16.mxu0 0
        %825 = vmatpush1.bf16.msra.mxu0 %v822
        %826 = vmatprep.subr.bf16.mxu0 0
        %827 = vmatpush1.bf16.msra.mxu0 0
        %828 = vmatprep.subr.bf16.mxu0 0
        %829 = vmatpush1.bf16.msra.mxu0 0
        %830 = vmatprep.subr.bf16.mxu0 0
        %831 = vmatpush1.bf16.msra.mxu0 0
        %832 = vmatprep.subr.bf16.mxu0 0
        %833 = vmatpush1.bf16.msra.mxu0 0
        %834 = vmatprep.subr.bf16.mxu0 0
        %835 = vmatpush1.bf16.msra.mxu0 0
        %836 = vmatprep.subr.bf16.mxu0 0
        %837 = vmatpush1.bf16.msra.mxu0 0
        %838 = vmatprep.subr.bf16.mxu0 0
        %839 = vmatpush1.bf16.msra.mxu0 0
        %840 = vmatprep.subr.bf16.mxu0 0
        %841 = vmatpush1.bf16.msra.mxu0 0
        %842 = vmatprep.subr.bf16.mxu0 0
        %843 = vmatpush1.bf16.msra.mxu0 0
        %844 = vmatprep.subr.bf16.mxu0 0
        %845 = vmatpush1.bf16.msra.mxu0 0
        %846 = vmatprep.subr.bf16.mxu0 0
        %847 = vmatpush1.bf16.msra.mxu0 0
        %848 = vmatprep.subr.bf16.mxu0 0
        %849 = vmatpush1.bf16.msra.mxu0 0
        %850 = vmatprep.subr.bf16.mxu0 0
        %851 = vmatpush1.bf16.msra.mxu0 0
        %852 = vmatprep.subr.bf16.mxu0 0
        %853 = vmatpush1.bf16.msra.mxu0 0
        %854 = vmatprep.subr.bf16.mxu0 0
        %855 = vmatpush1.bf16.msra.mxu0 0
        %856 = vmatprep.mubr.bf16.mxu0 0
        %857 = vmatmul.mubr.bf16.gmra.mrb[0].mxu0 %v819
        %v858 = vpop.f32.mrb[0].mxu0
        %v859 = vadd.f32 0.0, %v858
        %v860 = vpop.f32.mrb[0].mxu0
        %v861 = vpop.f32.mrb[0].mxu0
        %v862 = vpop.f32.mrb[0].mxu0
        %863 = vdwg.mxu0
        %v864 = vrcp.pop %v815
        %v865 = vmul.f32 %v859, %v864
        %867 = vrot.lane.b32.xlu0 %v865, 16
        %v868 = vpop.permute.xlu0 %867
        %vm870 = vcmask 195712
        %871 = vst.msk [vmem:[#allocation2] sm:$0xff] %vm870, %v868
        %872 = vrot.lane.b32.xlu0 %v521, 104
        %v873 = vpop.permute.xlu0 %872
        %874 = vrot.lane.b32.xlu0 %v521, 72
        %v875 = vpop.permute.xlu0 %874
        %v877 = vsel %vm525, %v873, 0
        %v880 = vsel %vm525, %v875, 0
        %882 = vmatprep.subr.bf16.mxu0 0
        %883 = vmatpush1.bf16.xpose.msra.mxu0 %v880
        %884 = vmatprep.subr.bf16.mxu0 0
        %885 = vmatpush1.bf16.xpose.msra.mxu0 0
        %886 = vmatprep.subr.bf16.mxu0 0
        %887 = vmatpush1.bf16.xpose.msra.mxu0 0
        %888 = vmatprep.subr.bf16.mxu0 0
        %889 = vmatpush1.bf16.xpose.msra.mxu0 0
        %890 = vmatprep.subr.bf16.mxu0 0
        %891 = vmatpush1.bf16.xpose.msra.mxu0 0
        %892 = vmatprep.subr.bf16.mxu0 0
        %893 = vmatpush1.bf16.xpose.msra.mxu0 0
        %894 = vmatprep.subr.bf16.mxu0 0
        %895 = vmatpush1.bf16.xpose.msra.mxu0 0
        %896 = vmatprep.subr.bf16.mxu0 0
        %897 = vmatpush1.bf16.xpose.msra.mxu0 0
        %898 = vmatprep.subr.bf16.mxu0 0
        %899 = vmatpush1.bf16.xpose.msra.mxu0 0
        %900 = vmatprep.subr.bf16.mxu0 0
        %901 = vmatpush1.bf16.xpose.msra.mxu0 0
        %902 = vmatprep.subr.bf16.mxu0 0
        %903 = vmatpush1.bf16.xpose.msra.mxu0 0
        %904 = vmatprep.subr.bf16.mxu0 0
        %905 = vmatpush1.bf16.xpose.msra.mxu0 0
        %906 = vmatprep.subr.bf16.mxu0 0
        %907 = vmatpush1.bf16.xpose.msra.mxu0 0
        %908 = vmatprep.subr.bf16.mxu0 0
        %909 = vmatpush1.bf16.xpose.msra.mxu0 0
        %910 = vmatprep.subr.bf16.mxu0 0
        %911 = vmatpush1.bf16.xpose.msra.mxu0 0
        %912 = vmatprep.subr.bf16.mxu0 0
        %913 = vmatpush1.bf16.xpose.msra.mxu0 0
        %914 = vmatprep.mubr.bf16.mxu0 0
        %915 = vmatmul.mubr.bf16.gmra.mrb[0].mxu0 %v877
        %v916 = vpop.f32.mrb[0].mxu0
        %v917 = vadd.f32 0.0, %v916
        %v918 = vpop.f32.mrb[0].mxu0
        %v919 = vpop.f32.mrb[0].mxu0
        %v920 = vpop.f32.mrb[0].mxu0
        %921 = vdwg.mxu0
        %v922 = vsel %vm525, %v917, -inf
        %923 = vmax.xlane.f32.xlu0 %v922
        %v924 = vpop.xlane.xlu0 %923
        %v925 = vsub.f32 %v917, %v924
        %v926 = vpack.c.bf16 %v925, %v925
        %v928 = vmul.bf16 %v926, 1069105081
        %v929 = vpow.bf16.pop %v928
        %v930 = vunpack.c.l.bf16 %v929
        %v931 = vsel %vm525, %v930, 0.0
        %932 = vadd.xlane.f32.xlu0 %v931
        %v933 = vpop.xlane.xlu0 %932
        %934 = vrot.lane.b32.xlu0 %v521, 40
        %v935 = vpop.permute.xlu0 %934
        %v937 = vsel %vm525, %v929, 0
        %v940 = vsel %vm589, %v935, 0
        %942 = vmatprep.subr.bf16.mxu0 0
        %943 = vmatpush1.bf16.msra.mxu0 %v940
        %944 = vmatprep.subr.bf16.mxu0 0
        %945 = vmatpush1.bf16.msra.mxu0 0
        %946 = vmatprep.subr.bf16.mxu0 0
        %947 = vmatpush1.bf16.msra.mxu0 0
        %948 = vmatprep.subr.bf16.mxu0 0
        %949 = vmatpush1.bf16.msra.mxu0 0
        %950 = vmatprep.subr.bf16.mxu0 0
        %951 = vmatpush1.bf16.msra.mxu0 0
        %952 = vmatprep.subr.bf16.mxu0 0
        %953 = vmatpush1.bf16.msra.mxu0 0
        %954 = vmatprep.subr.bf16.mxu0 0
        %955 = vmatpush1.bf16.msra.mxu0 0
        %956 = vmatprep.subr.bf16.mxu0 0
        %957 = vmatpush1.bf16.msra.mxu0 0
        %958 = vmatprep.subr.bf16.mxu0 0
        %959 = vmatpush1.bf16.msra.mxu0 0
        %960 = vmatprep.subr.bf16.mxu0 0
        %961 = vmatpush1.bf16.msra.mxu0 0
        %962 = vmatprep.subr.bf16.mxu0 0
        %963 = vmatpush1.bf16.msra.mxu0 0
        %964 = vmatprep.subr.bf16.mxu0 0
        %965 = vmatpush1.bf16.msra.mxu0 0
        %966 = vmatprep.subr.bf16.mxu0 0
        %967 = vmatpush1.bf16.msra.mxu0 0
        %968 = vmatprep.subr.bf16.mxu0 0
        %969 = vmatpush1.bf16.msra.mxu0 0
        %970 = vmatprep.subr.bf16.mxu0 0
        %971 = vmatpush1.bf16.msra.mxu0 0
        %972 = vmatprep.subr.bf16.mxu0 0
        %973 = vmatpush1.bf16.msra.mxu0 0
        %974 = vmatprep.mubr.bf16.mxu0 0
        %975 = vmatmul.mubr.bf16.gmra.mrb[0].mxu0 %v937
        %v976 = vpop.f32.mrb[0].mxu0
        %v977 = vadd.f32 0.0, %v976
        %v978 = vpop.f32.mrb[0].mxu0
        %v979 = vpop.f32.mrb[0].mxu0
        %v980 = vpop.f32.mrb[0].mxu0
        %981 = vdwg.mxu0
        %v982 = vrcp.pop %v933
        %v983 = vmul.f32 %v977, %v982
        %985 = vrot.lane.b32.xlu0 %v983, 24
        %v986 = vpop.permute.xlu0 %985
        %vm988 = vcmask 261312
        %989 = vst.msk [vmem:[#allocation2] sm:$0xff] %vm988, %v986
        %v990 = vld [vmem:[#allocation2] sm:$0xff]
        %v991 = vpack.c.bf16 %v990, %v990
        %v992 = vld [vmem:[%s3] sm:$0xf]
        %v993 = vld [vmem:[%s3 + $0x4] sm:$0xf]
        %v994 = vld [vmem:[%s3 + $0x8] sm:$0xf]
        %v995 = vld [vmem:[%s3 + $0xc] sm:$0xf]
        %v996 = vld [vmem:[%s4] sm:$0x1]
        %v998 = vlaneseq
        %v999 = vshrl.u32 %v998, 7
        %v1000 = vsub.s32 0, %v999
        %v1001 = vrot.slane %v996, %v1000
        %v1007 = vunpack.c.l.b16 %v992
        %v1008 = vunpack.c.l.b16 %v993
        %v1009 = vunpack.c.l.b16 %v994
        %v1010 = vunpack.c.l.b16 %v995
        %v1011 = vpack.c.b16 %v1008, %v1007
        %v1012 = vpack.c.b16 %v1010, %v1009
        %v1016 = vsel %vm477, %v991, 0
        %1018 = vmatprep.subr.bf16.mxu0 0
        %1019 = vmatpush1.bf16.msra.mxu0 %v1011
        %1020 = vmatprep.subr.bf16.mxu0 0
        %1021 = vmatpush1.bf16.msra.mxu0 %v1012
        %1022 = vmatprep.subr.bf16.mxu0 0
        %1023 = vmatpush1.bf16.msra.mxu0 0
        %1024 = vmatprep.subr.bf16.mxu0 0
        %1025 = vmatpush1.bf16.msra.mxu0 0
        %1026 = vmatprep.subr.bf16.mxu0 0
        %1027 = vmatpush1.bf16.msra.mxu0 0
        %1028 = vmatprep.subr.bf16.mxu0 0
        %1029 = vmatpush1.bf16.msra.mxu0 0
        %1030 = vmatprep.subr.bf16.mxu0 0
        %1031 = vmatpush1.bf16.msra.mxu0 0
        %1032 = vmatprep.subr.bf16.mxu0 0
        %1033 = vmatpush1.bf16.msra.mxu0 0
        %1034 = vmatprep.subr.bf16.mxu0 0
        %1035 = vmatpush1.bf16.msra.mxu0 0
        %1036 = vmatprep.subr.bf16.mxu0 0
        %1037 = vmatpush1.bf16.msra.mxu0 0
        %1038 = vmatprep.subr.bf16.mxu0 0
        %1039 = vmatpush1.bf16.msra.mxu0 0
        %1040 = vmatprep.subr.bf16.mxu0 0
        %1041 = vmatpush1.bf16.msra.mxu0 0
        %1042 = vmatprep.subr.bf16.mxu0 0
        %1043 = vmatpush1.bf16.msra.mxu0 0
        %1044 = vmatprep.subr.bf16.mxu0 0
        %1045 = vmatpush1.bf16.msra.mxu0 0
        %1046 = vmatprep.subr.bf16.mxu0 0
        %1047 = vmatpush1.bf16.msra.mxu0 0
        %1048 = vmatprep.subr.bf16.mxu0 0
        %1049 = vmatpush1.bf16.msra.mxu0 0
        %1050 = vmatprep.mubr.bf16.mxu0 0
        %1051 = vmatmul.mubr.bf16.gmra.mrb[0].mxu0 %v1016
        %v1052 = vpop.f32.mrb[0].mxu0
        %v1053 = vadd.f32 %v1001, %v1052
        %v1054 = vpop.f32.mrb[0].mxu0
        %v1055 = vpop.f32.mrb[0].mxu0
        %v1056 = vpop.f32.mrb[0].mxu0
        %1057 = vdwg.mxu0
        %v1058 = vadd.f32 %v452, %v1053
        %v1059 = vsel %vm477, %v1058, 0.0
        %1060 = vadd.xlane.f32.xlu0 %v1059
        %v1061 = vpop.xlane.xlu0 %1060
        %v1062 = vrcp.pop 32.0
        %v1063 = vmul.f32 %v1061, %v1062
        %v1064 = vmul.f32 %v1058, %v1058
        %v1065 = vsel %vm477, %v1064, 0.0
        %1066 = vadd.xlane.f32.xlu0 %v1065
        %v1067 = vpop.xlane.xlu0 %1066
        %v1068 = vmul.f32 %v1067, %v1062
        %v1069 = vmul.f32 %v1063, %v1063
        %v1070 = vsub.f32 %v1068, %v1069
        %v1071 = vmax.f32 %v1070, 0.0
        %v1072 = vsub.f32 %v1058, %v1063
        %v1073 = vadd.f32 %v1071, 1e-05
        %v1074 = vrsqrt.pop %v1073
        %v1075 = vmul.f32 %v1072, %v1074
        %v1076 = vld [vmem:[%s5] sm:$0x1]
        %v1078 = vlaneseq
        %v1079 = vshrl.u32 %v1078, 7
        %v1080 = vsub.s32 0, %v1079
        %v1081 = vrot.slane %v1076, %v1080
        %v1083 = vmul.f32 %v1075, %v1081
        %v1084 = vld [vmem:[%s6] sm:$0x1]
        %v1086 = vlaneseq
        %v1087 = vshrl.u32 %v1086, 7
        %v1088 = vsub.s32 0, %v1087
        %v1089 = vrot.slane %v1084, %v1088
        %v1091 = vadd.f32 %v1083, %v1089
        %v1092 = vpack.c.bf16 %v1091, %v1091
        %v1093 = vld [vmem:[#allocation3] sm:$0xf]
        %v1094 = vld [vmem:[#allocation3 + $0x4] sm:$0xf]
        %v1095 = vld [vmem:[#allocation3 + $0x8] sm:$0xf]
        %v1096 = vld [vmem:[#allocation3 + $0xc] sm:$0xf]
        %v1097 = vld [vmem:[%s8] sm:$0x1]
        %v1099 = vlaneseq
        %v1100 = vshrl.u32 %v1099, 7
        %v1101 = vsub.s32 0, %v1100
        %v1102 = vrot.slane %v1097, %v1101
        %v1108 = vunpack.c.l.b16 %v1093
        %v1109 = vunpack.c.l.b16 %v1094
        %v1110 = vunpack.c.l.b16 %v1095
        %v1111 = vunpack.c.l.b16 %v1096
        %v1112 = vpack.c.b16 %v1109, %v1108
        %v1113 = vpack.c.b16 %v1111, %v1110
        %v1117 = vsel %vm477, %v1092, 0
        %1119 = vmatprep.subr.bf16.mxu0 0
        %1120 = vmatpush1.bf16.msra.mxu0 %v1112
        %1121 = vmatprep.subr.bf16.mxu0 0
        %1122 = vmatpush1.bf16.msra.mxu0 %v1113
        %1123 = vmatprep.subr.bf16.mxu0 0
        %1124 = vmatpush1.bf16.msra.mxu0 0
        %1125 = vmatprep.subr.bf16.mxu0 0
        %1126 = vmatpush1.bf16.msra.mxu0 0
        %1127 = vmatprep.subr.bf16.mxu0 0
        %1128 = vmatpush1.bf16.msra.mxu0 0
        %1129 = vmatprep.subr.bf16.mxu0 0
        %1130 = vmatpush1.bf16.msra.mxu0 0
        %1131 = vmatprep.subr.bf16.mxu0 0
        %1132 = vmatpush1.bf16.msra.mxu0 0
        %1133 = vmatprep.subr.bf16.mxu0 0
        %1134 = vmatpush1.bf16.msra.mxu0 0
        %1135 = vmatprep.subr.bf16.mxu0 0
        %1136 = vmatpush1.bf16.msra.mxu0 0
        %1137 = vmatprep.subr.bf16.mxu0 0
        %1138 = vmatpush1.bf16.msra.mxu0 0
        %1139 = vmatprep.subr.bf16.mxu0 0
        %1140 = vmatpush1.bf16.msra.mxu0 0
        %1141 = vmatprep.subr.bf16.mxu0 0
        %1142 = vmatpush1.bf16.msra.mxu0 0
        %1143 = vmatprep.subr.bf16.mxu0 0
        %1144 = vmatpush1.bf16.msra.mxu0 0
        %1145 = vmatprep.subr.bf16.mxu0 0
        %1146 = vmatpush1.bf16.msra.mxu0 0
        %1147 = vmatprep.subr.bf16.mxu0 0
        %1148 = vmatpush1.bf16.msra.mxu0 0
        %1149 = vmatprep.subr.bf16.mxu0 0
        %1150 = vmatpush1.bf16.msra.mxu0 0
        %1151 = vmatprep.mubr.bf16.mxu0 0
        %1152 = vmatmul.mubr.bf16.gmra.mrb[0].mxu0 %v1117
        %v1153 = vpop.f32.mrb[0].mxu0
        %v1154 = vadd.f32 %v1102, %v1153
        %v1155 = vpop.f32.mrb[0].mxu0
        %v1156 = vpop.f32.mrb[0].mxu0
        %v1157 = vpop.f32.mrb[0].mxu0
        %1158 = vdwg.mxu0
        %v1159 = vmax.f32 %v1154, 0.0
        %v1160 = vpack.c.bf16 %v1159, %v1159
        %v1161 = vld [vmem:[%s9] sm:$0xf]
        %v1162 = vld [vmem:[%s9 + $0x4] sm:$0xf]
        %v1163 = vld [vmem:[%s9 + $0x8] sm:$0xf]
        %v1164 = vld [vmem:[%s9 + $0xc] sm:$0xf]
        %v1165 = vld [vmem:[%s9 + $0x10] sm:$0xf]
        %v1166 = vld [vmem:[%s9 + $0x14] sm:$0xf]
        %v1167 = vld [vmem:[%s9 + $0x18] sm:$0xf]
        %v1168 = vld [vmem:[%s9 + $0x1c] sm:$0xf]
        %v1169 = vld [vmem:[%s10] sm:$0x1]
        %v1171 = vlaneseq
        %v1172 = vshrl.u32 %v1171, 7
        %v1173 = vsub.s32 0, %v1172
        %v1174 = vrot.slane %v1169, %v1173
        %v1184 = vunpack.c.l.b16 %v1161
        %v1185 = vunpack.c.l.b16 %v1162
        %v1186 = vunpack.c.l.b16 %v1163
        %v1187 = vunpack.c.l.b16 %v1164
        %v1188 = vunpack.c.l.b16 %v1165
        %v1189 = vunpack.c.l.b16 %v1166
        %v1190 = vunpack.c.l.b16 %v1167
        %v1191 = vunpack.c.l.b16 %v1168
        %v1192 = vpack.c.b16 %v1185, %v1184
        %v1193 = vpack.c.b16 %v1187, %v1186
        %v1194 = vpack.c.b16 %v1189, %v1188
        %v1195 = vpack.c.b16 %v1191, %v1190
        %vm1200 = vcmask 523264
        %v1202 = vsel %vm1200, %v1160, 0
        %1204 = vmatprep.subr.bf16.mxu0 0
        %1205 = vmatpush1.bf16.msra.mxu0 %v1192
        %1206 = vmatprep.subr.bf16.mxu0 0
        %1207 = vmatpush1.bf16.msra.mxu0 %v1193
        %1208 = vmatprep.subr.bf16.mxu0 0
        %1209 = vmatpush1.bf16.msra.mxu0 %v1194
        %1210 = vmatprep.subr.bf16.mxu0 0
        %1211 = vmatpush1.bf16.msra.mxu0 %v1195
        %1212 = vmatprep.subr.bf16.mxu0 0
        %1213 = vmatpush1.bf16.msra.mxu0 0
        %1214 = vmatprep.subr.bf16.mxu0 0
        %1215 = vmatpush1.bf16.msra.mxu0 0
        %1216 = vmatprep.subr.bf16.mxu0 0
        %1217 = vmatpush1.bf16.msra.mxu0 0
        %1218 = vmatprep.subr.bf16.mxu0 0
        %1219 = vmatpush1.bf16.msra.mxu0 0
        %1220 = vmatprep.subr.bf16.mxu0 0
        %1221 = vmatpush1.bf16.msra.mxu0 0
        %1222 = vmatprep.subr.bf16.mxu0 0
        %1223 = vmatpush1.bf16.msra.mxu0 0
        %1224 = vmatprep.subr.bf16.mxu0 0
        %1225 = vmatpush1.bf16.msra.mxu0 0
        %1226 = vmatprep.subr.bf16.mxu0 0
        %1227 = vmatpush1.bf16.msra.mxu0 0
        %1228 = vmatprep.subr.bf16.mxu0 0
        %1229 = vmatpush1.bf16.msra.mxu0 0
        %1230 = vmatprep.subr.bf16.mxu0 0
        %1231 = vmatpush1.bf16.msra.mxu0 0
        %1232 = vmatprep.subr.bf16.mxu0 0
        %1233 = vmatpush1.bf16.msra.mxu0 0
        %1234 = vmatprep.subr.bf16.mxu0 0
        %1235 = vmatpush1.bf16.msra.mxu0 0
        %1236 = vmatprep.mubr.bf16.mxu0 0
        %1237 = vmatmul.mubr.bf16.gmra.mrb[0].mxu0 %v1202
        %v1238 = vpop.f32.mrb[0].mxu0
        %v1239 = vadd.f32 %v1174, %v1238
        %v1240 = vpop.f32.mrb[0].mxu0
        %v1241 = vpop.f32.mrb[0].mxu0
        %v1242 = vpop.f32.mrb[0].mxu0
        %1243 = vdwg.mxu0
        %v1244 = vadd.f32 %v1091, %v1239
        %v1245 = vsel %vm477, %v1244, 0.0
        %1246 = vadd.xlane.f32.xlu0 %v1245
        %v1247 = vpop.xlane.xlu0 %1246
        %v1248 = vmul.f32 %v1247, %v1062
        %v1249 = vmul.f32 %v1244, %v1244
        %v1250 = vsel %vm477, %v1249, 0.0
        %1251 = vadd.xlane.f32.xlu0 %v1250
        %v1252 = vpop.xlane.xlu0 %1251
        %v1253 = vmul.f32 %v1252, %v1062
        %v1254 = vmul.f32 %v1248, %v1248
        %v1255 = vsub.f32 %v1253, %v1254
        %v1256 = vmax.f32 %v1255, 0.0
        %v1257 = vsub.f32 %v1244, %v1248
        %v1258 = vadd.f32 %v1256, 1e-05
        %v1259 = vrsqrt.pop %v1258
        %v1260 = vmul.f32 %v1257, %v1259
        %v1261 = vld [vmem:[%s11] sm:$0x1]
        %v1263 = vlaneseq
        %v1264 = vshrl.u32 %v1263, 7
        %v1265 = vsub.s32 0, %v1264
        %v1266 = vrot.slane %v1261, %v1265
        %v1268 = vmul.f32 %v1260, %v1266
        %v1269 = vld [vmem:[%s12] sm:$0x1]
        %v1271 = vlaneseq
        %v1272 = vshrl.u32 %v1271, 7
        %v1273 = vsub.s32 0, %v1272
        %v1274 = vrot.slane %v1269, %v1273
        %v1276 = vadd.f32 %v1268, %v1274
        %1277 = vst.msk [vmem:[%s446] sm:$0xff] %vm477, %v1276
        %s1278 = sand.u32 %s314, 1
        %s1279 = scalar_lea.sflag [#allocation5], %s1278
        %s1280 = sand.u32 %s314, 1
        %s1281 = smul.addr %s1280, 8
        %s1282 = scalar_lea.vmem [#allocation6], %s1281
        // Predicated region
        $region77: #{tpu_custom_call.1} parent=71 // pred_check
          %p1283 = pneg %p324
        $region78: #{tpu_custom_call.1} parent=71 // pred_check_branch
          %1285 = sbr.rel (%p1283) target = $region80
        $region79: #{tpu_custom_call.1} parent=71 // pred_region
          %s1287 = ssub.s32 128, 128
          %1288 = vsyncadd %s1279, %s1287
          %s1289 = smul.addr %s28, 128
          %s1290 = scalar_lea.hbm %s13, %s1289
          %s1292 = sshll.u32 %s1282, 4
          %s1293 = int_to_ptr.vmem [resolvable:$true] %s1292
          %1295 = dma.vmem_to_hbm [thread:$0]  %s1293, 128, %s1290, %s1279
        $region80: #{tpu_custom_call.1} parent=71 // pred_fallthru
          _
      $region72: #{tpu_custom_call.1} parent=5 // pred_fallthru
        _
      %p1296 = scmp.le.s32.totalorder 2, %s23
      // Predicated region
      $region81: #{tpu_custom_call.1} parent=5 // pred_check
        %p1297 = pneg %p1296
      $region82: #{tpu_custom_call.1} parent=5 // pred_check_branch
        %1299 = sbr.rel (%p1297) target = $region84
      $region83: #{tpu_custom_call.1} parent=5 // pred_region
        %s1300 = ssub.s32 %s23, 2
        // Predicated region
        $region85: #{tpu_custom_call.1} parent=83 // pred_check
          %p1301 = pneg %p330
        $region86: #{tpu_custom_call.1} parent=83 // pred_check_branch
          %1303 = sbr.rel (%p1301) target = $region88
        $region87: #{tpu_custom_call.1} parent=83 // pred_region
          %s1304 = sand.u32 %s315, 1
          %s1305 = scalar_lea.sflag [#allocation5], %s1304
          %s1306 = sand.u32 %s315, 1
          %s1307 = smul.addr %s1306, 8
          %s1308 = scalar_lea.vmem [#allocation6], %s1307
          %1309 = dma.done %s1305, 128
        $region88: #{tpu_custom_call.1} parent=83 // pred_fallthru
          _
      $region84: #{tpu_custom_call.1} parent=5 // pred_fallthru
        _
    $region6: #{tpu_custom_call.1} parent=1 // loop_footer
      %s27 = sadd.s32 1, %s23
    $region7: #{tpu_custom_call.1} parent=1 // loop_footer_branch
      %22 = sbr.rel target = $region3
    $region8: #{tpu_custom_call.1} parent=1 // loop_exit
      _
    %1310 = vsyncpa [#allocation4], 1
    %s1311 = scalar_lea.sflag [#allocation4], 1
    %1312 = vsyncpa %s1311, 1
    %1313 = vsyncpa [#allocation5], 1
    %s1314 = scalar_lea.sflag [#allocation5], 1
    %1315 = vsyncpa %s1314, 1

// kernel: tpu_custom_call.1
$region0: #{tpu_custom_call.1}
  #allocation0 [shape = 'u32[]', space=smem, size = 0x4, offset = 0x4, fixed_abs, tag = 'smem constant byte address 0x4 - core index']
  #allocation1 [shape = 'u32[144,128]{1,0:T(1,128)}', space=vmem, size = 0x12000, scoped, tag = 'internal scratch']
  #allocation2 [shape = 'f32[8,32]{1,0:T(8,128)}', space=vmem, size = 0x1000, scoped, tag = 'scratch operand']
  %s0 = inlined_call_operand.vmem [shape: f32[2,8,32], index: 0, kind: input, shape index: {}]
  %s1 = inlined_call_operand.vmem [shape: bf16[32,96], index: 1, kind: input, shape index: {}]
  %s2 = inlined_call_operand.vmem [shape: f32[1,96], index: 2, kind: input, shape index: {}]
  %s3 = inlined_call_operand.vmem [shape: bf16[32,32], index: 3, kind: input, shape index: {}]
  %s4 = inlined_call_operand.vmem [shape: f32[1,32], index: 4, kind: input, shape index: {}]
  %s5 = inlined_call_operand.vmem [shape: f32[1,32], index: 5, kind: input, shape index: {}]
  %s6 = inlined_call_operand.vmem [shape: f32[1,32], index: 6, kind: input, shape index: {}]
  %s7 = inlined_call_operand.hbm [shape: bf16[32,64], index: 7, kind: input, shape index: {}]
  %s8 = inlined_call_operand.vmem [shape: f32[1,64], index: 8, kind: input, shape index: {}]
  %s9 = inlined_call_operand.vmem [shape: bf16[64,32], index: 9, kind: input, shape index: {}]
  %s10 = inlined_call_operand.vmem [shape: f32[1,32], index: 10, kind: input, shape index: {}]
  %s11 = inlined_call_operand.vmem [shape: f32[1,32], index: 11, kind: input, shape index: {}]
  %s12 = inlined_call_operand.vmem [shape: f32[1,32], index: 12, kind: input, shape index: {}]
  %s13 = inlined_call_operand.hbm [shape: f32[2,8,32], index: 13, kind: output, shape index: {}]
  %s14 = sld [smem:[#allocation0]]
  $region89: #{tpu_custom_call.1} parent=0
    _
  %s16 = ssub.s32 1, %s14
  %s17 = scalar_select 0, %s16, %s14
  $region1: #{tpu_custom_call.1} parent=0
    #allocation3 [shape = 'u8[8192]{0}', space=vmem, size = 0x2000, scoped, tag = 'input window, operand 7, single buffered']
    #allocation4 [shape = 's32[2]{0}', space=sflag, size = 0x8, scoped, tag = 'scoped memory for tpu_custom_call.1']
    #allocation5 [shape = 's32[2]{0}', space=sflag, size = 0x8, scoped, tag = 'scoped memory for tpu_custom_call.1']
    #allocation6 [shape = 'u8[8192]{0}', space=vmem, size = 0x2000, scoped, tag = 'output window, operand 0']
    %18 = vsyncpa [#allocation4], 0
    %19 = vsyncpa [#allocation5], 0
    %s20 = scalar_lea.sflag [#allocation5], 1
    %21 = vsyncpa %s20, 0
    loop: start=0, step=1, limit=4
    $region2: #{tpu_custom_call.1} parent=1 // loop_pre_header
      _
    $region3: #{tpu_custom_call.1} parent=1 // loop_header
      %s23 = sphi 0, %s27
      %p24 = scmp.ge.s32.totalorder %s23, 4
      %s33 = sphi 0, %s35
      %s36 = sphi 0, %s33
      %s37 = sphi 0, %s36
      %s53 = sphi 0, %s37
      %s57 = sphi 0, %s57
      %s59 = sphi 0, %s57
      %s60 = sphi 0, %s59
      %s74 = sphi 0, %s60
      %s78 = sphi 0, %s78
      %s80 = sphi 0, %s78
      %s81 = sphi 0, %s80
      %s95 = sphi 0, %s81
      %s99 = sphi 0, %s99
      %s101 = sphi 0, %s99
      %s102 = sphi 0, %s101
      %s116 = sphi 0, %s102
      %s120 = sphi 0, %s120
      %s122 = sphi 0, %s120
      %s123 = sphi 0, %s122
      %s137 = sphi 0, %s123
      %s141 = sphi 0, %s141
      %s143 = sphi 0, %s141
      %s144 = sphi 0, %s143
      %s158 = sphi 0, %s144
      %s162 = sphi 0, %s162
      %s164 = sphi 0, %s162
      %s165 = sphi 0, %s164
      %s179 = sphi 0, %s165
      %s183 = sphi 0, %s183
      %s185 = sphi 0, %s183
      %s186 = sphi 0, %s185
      %s200 = sphi 0, %s186
      %s204 = sphi 0, %s204
      %s206 = sphi 0, %s204
      %s207 = sphi 0, %s206
      %s221 = sphi 0, %s207
      %s225 = sphi 0, %s225
      %s227 = sphi 0, %s225
      %s228 = sphi 0, %s227
      %s242 = sphi 0, %s228
      %s246 = sphi 0, %s246
      %s248 = sphi 0, %s246
      %s249 = sphi 0, %s248
      %s263 = sphi 0, %s249
      %s267 = sphi 0, %s267
      %s269 = sphi 0, %s267
      %s270 = sphi 0, %s269
      %s284 = sphi 0, %s270
      %s288 = sphi 0, %s288
      %s290 = sphi 0, %s288
      %s291 = sphi 0, %s290
      %s305 = sphi 0, %s291
      %s311 = sphi 0, %s313
      %s314 = sphi 0, %s311
      %s315 = sphi 0, %s314
      %s331 = sphi 0, %s315
    $region4: #{tpu_custom_call.1} parent=1 // loop_header_branch
      %26 = sbr.rel (%p24) target = $region8
    $region5: #{tpu_custom_call.1} parent=1 // loop_body
      %s28 = ssub.s32 %s23, 1
      %s29 = ssub.s32 %s23, 2
      %s30 = sadd.s32 %s23, 1
      %s31 = ssub.s32 %s23, %s30
      %p32 = scmp.eq.s32.totalorder %s31, 0
      %s34 = sadd.s32 %s33, 1
      %s35 = scalar_select %p32, %s33, %s34
      %p38 = pneg %p32
      %p39 = scmp.eq.s32.totalorder %s23, 1
      %p40 = por %p38, %p39
      %p41 = scmp.ne.s32.totalorder %s33, %s36
      %p42 = scmp.eq.s32.totalorder %s23, 0
      %p43 = por %p41, %p42
      %p44 = scmp.ne.s32.totalorder %s33, %s36
      %p45 = scmp.eq.s32.totalorder %s28, 1
      %p46 = por %p44, %p45
      %p47 = scmp.ne.s32.totalorder %s36, %s37
      %p48 = scmp.eq.s32.totalorder %s28, 0
      %p49 = por %p47, %p48
      %p50 = scmp.ne.s32.totalorder %s36, %s37
      %p51 = scmp.eq.s32.totalorder %s29, 1
      %p52 = por %p50, %p51
      %p54 = scmp.ne.s32.totalorder %s37, %s53
      %p55 = scmp.eq.s32.totalorder %s29, 0
      %p56 = por %p54, %p55
      %s58 = sadd.s32 %s57, 1
      %p61 = scmp.eq.s32.totalorder %s23, 1
      %p62 = scmp.ne.s32.totalorder %s57, %s59
      %p63 = scmp.eq.s32.totalorder %s23, 0
      %p64 = por %p62, %p63
      %p65 = scmp.ne.s32.totalorder %s57, %s59
      %p66 = scmp.eq.s32.totalorder %s28, 1
      %p67 = por %p65, %p66
      %p68 = scmp.ne.s32.totalorder %s59, %s60
      %p69 = scmp.eq.s32.totalorder %s28, 0
      %p70 = por %p68, %p69
      %p71 = scmp.ne.s32.totalorder %s59, %s60
      %p72 = scmp.eq.s32.totalorder %s29, 1
      %p73 = por %p71, %p72
      %p75 = scmp.ne.s32.totalorder %s60, %s74
      %p76 = scmp.eq.s32.totalorder %s29, 0
      %p77 = por %p75, %p76
      %s79 = sadd.s32 %s78, 1
      %p82 = scmp.eq.s32.totalorder %s23, 1
      %p83 = scmp.ne.s32.totalorder %s78, %s80
      %p84 = scmp.eq.s32.totalorder %s23, 0
      %p85 = por %p83, %p84
      %p86 = scmp.ne.s32.totalorder %s78, %s80
      %p87 = scmp.eq.s32.totalorder %s28, 1
      %p88 = por %p86, %p87
      %p89 = scmp.ne.s32.totalorder %s80, %s81
      %p90 = scmp.eq.s32.totalorder %s28, 0
      %p91 = por %p89, %p90
      %p92 = scmp.ne.s32.totalorder %s80, %s81
      %p93 = scmp.eq.s32.totalorder %s29, 1
      %p94 = por %p92, %p93
      %p96 = scmp.ne.s32.totalorder %s81, %s95
      %p97 = scmp.eq.s32.totalorder %s29, 0
      %p98 = por %p96, %p97
      %s100 = sadd.s32 %s99, 1
      %p103 = scmp.eq.s32.totalorder %s23, 1
      %p104 = scmp.ne.s32.totalorder %s99, %s101
      %p105 = scmp.eq.s32.totalorder %s23, 0
      %p106 = por %p104, %p105
      %p107 = scmp.ne.s32.totalorder %s99, %s101
      %p108 = scmp.eq.s32.totalorder %s28, 1
      %p109 = por %p107, %p108
      %p110 = scmp.ne.s32.totalorder %s101, %s102
      %p111 = scmp.eq.s32.totalorder %s28, 0
      %p112 = por %p110, %p111
      %p113 = scmp.ne.s32.totalorder %s101, %s102
      %p114 = scmp.eq.s32.totalorder %s29, 1
      %p115 = por %p113, %p114
      %p117 = scmp.ne.s32.totalorder %s102, %s116
      %p118 = scmp.eq.s32.totalorder %s29, 0
      %p119 = por %p117, %p118
      %s121 = sadd.s32 %s120, 1
      %p124 = scmp.eq.s32.totalorder %s23, 1
      %p125 = scmp.ne.s32.totalorder %s120, %s122
      %p126 = scmp.eq.s32.totalorder %s23, 0
      %p127 = por %p125, %p126
      %p128 = scmp.ne.s32.totalorder %s120, %s122
      %p129 = scmp.eq.s32.totalorder %s28, 1
      %p130 = por %p128, %p129
      %p131 = scmp.ne.s32.totalorder %s122, %s123
      %p132 = scmp.eq.s32.totalorder %s28, 0
      %p133 = por %p131, %p132
      %p134 = scmp.ne.s32.totalorder %s122, %s123
      %p135 = scmp.eq.s32.totalorder %s29, 1
      %p136 = por %p134, %p135
      %p138 = scmp.ne.s32.totalorder %s123, %s137
      %p139 = scmp.eq.s32.totalorder %s29, 0
      %p140 = por %p138, %p139
      %s142 = sadd.s32 %s141, 1
      %p145 = scmp.eq.s32.totalorder %s23, 1
      %p146 = scmp.ne.s32.totalorder %s141, %s143
      %p147 = scmp.eq.s32.totalorder %s23, 0
      %p148 = por %p146, %p147
      %p149 = scmp.ne.s32.totalorder %s141, %s143
      %p150 = scmp.eq.s32.totalorder %s28, 1
      %p151 = por %p149, %p150
      %p152 = scmp.ne.s32.totalorder %s143, %s144
      %p153 = scmp.eq.s32.totalorder %s28, 0
      %p154 = por %p152, %p153
      %p155 = scmp.ne.s32.totalorder %s143, %s144
      %p156 = scmp.eq.s32.totalorder %s29, 1
      %p157 = por %p155, %p156
      %p159 = scmp.ne.s32.totalorder %s144, %s158
      %p160 = scmp.eq.s32.totalorder %s29, 0
      %p161 = por %p159, %p160
      %s163 = sadd.s32 %s162, 1
      %p166 = scmp.eq.s32.totalorder %s23, 1
      %p167 = scmp.ne.s32.totalorder %s162, %s164
      %p168 = scmp.eq.s32.totalorder %s23, 0
      %p169 = por %p167, %p168
      %p170 = scmp.ne.s32.totalorder %s162, %s164
      %p171 = scmp.eq.s32.totalorder %s28, 1
      %p172 = por %p170, %p171
      %p173 = scmp.ne.s32.totalorder %s164, %s165
      %p174 = scmp.eq.s32.totalorder %s28, 0
      %p175 = por %p173, %p174
      %p176 = scmp.ne.s32.totalorder %s164, %s165
      %p177 = scmp.eq.s32.totalorder %s29, 1
      %p178 = por %p176, %p177
      %p180 = scmp.ne.s32.totalorder %s165, %s179
      %p181 = scmp.eq.s32.totalorder %s29, 0
      %p182 = por %p180, %p181
      %s184 = sadd.s32 %s183, 1
      %p187 = scmp.eq.s32.totalorder %s23, 1
      %p188 = scmp.ne.s32.totalorder %s183, %s185
      %p189 = scmp.eq.s32.totalorder %s23, 0
      %p190 = por %p188, %p189
      %p191 = scmp.ne.s32.totalorder %s183, %s185
      %p192 = scmp.eq.s32.totalorder %s28, 1
      %p193 = por %p191, %p192
      %p194 = scmp.ne.s32.totalorder %s185, %s186
      %p195 = scmp.eq.s32.totalorder %s28, 0
      %p196 = por %p194, %p195
      %p197 = scmp.ne.s32.totalorder %s185, %s186
      %p198 = scmp.eq.s32.totalorder %s29, 1
      %p199 = por %p197, %p198
      %p201 = scmp.ne.s32.totalorder %s186, %s200
      %p202 = scmp.eq.s32.totalorder %s29, 0
      %p203 = por %p201, %p202
      %s205 = sadd.s32 %s204, 1
      %p208 = scmp.eq.s32.totalorder %s23, 1
      %p209 = scmp.ne.s32.totalorder %s204, %s206
      %p210 = scmp.eq.s32.totalorder %s23, 0
      %p211 = por %p209, %p210
      %p212 = scmp.ne.s32.totalorder %s204, %s206
      %p213 = scmp.eq.s32.totalorder %s28, 1
      %p214 = por %p212, %p213
      %p215 = scmp.ne.s32.totalorder %s206, %s207
      %p216 = scmp.eq.s32.totalorder %s28, 0
      %p217 = por %p215, %p216
      %p218 = scmp.ne.s32.totalorder %s206, %s207
      %p219 = scmp.eq.s32.totalorder %s29, 1
      %p220 = por %p218, %p219
      %p222 = scmp.ne.s32.totalorder %s207, %s221
      %p223 = scmp.eq.s32.totalorder %s29, 0
      %p224 = por %p222, %p223
      %s226 = sadd.s32 %s225, 1
      %p229 = scmp.eq.s32.totalorder %s23, 1
      %p230 = scmp.ne.s32.totalorder %s225, %s227
      %p231 = scmp.eq.s32.totalorder %s23, 0
      %p232 = por %p230, %p231
      %p233 = scmp.ne.s32.totalorder %s225, %s227
      %p234 = scmp.eq.s32.totalorder %s28, 1
      %p235 = por %p233, %p234
      %p236 = scmp.ne.s32.totalorder %s227, %s228
      %p237 = scmp.eq.s32.totalorder %s28, 0
      %p238 = por %p236, %p237
      %p239 = scmp.ne.s32.totalorder %s227, %s228
      %p240 = scmp.eq.s32.totalorder %s29, 1
      %p241 = por %p239, %p240
      %p243 = scmp.ne.s32.totalorder %s228, %s242
      %p244 = scmp.eq.s32.totalorder %s29, 0
      %p245 = por %p243, %p244
      %s247 = sadd.s32 %s246, 1
      %p250 = scmp.eq.s32.totalorder %s23, 1
      %p251 = scmp.ne.s32.totalorder %s246, %s248
      %p252 = scmp.eq.s32.totalorder %s23, 0
      %p253 = por %p251, %p252
      %p254 = scmp.ne.s32.totalorder %s246, %s248
      %p255 = scmp.eq.s32.totalorder %s28, 1
      %p256 = por %p254, %p255
      %p257 = scmp.ne.s32.totalorder %s248, %s249
      %p258 = scmp.eq.s32.totalorder %s28, 0
      %p259 = por %p257, %p258
      %p260 = scmp.ne.s32.totalorder %s248, %s249
      %p261 = scmp.eq.s32.totalorder %s29, 1
      %p262 = por %p260, %p261
      %p264 = scmp.ne.s32.totalorder %s249, %s263
      %p265 = scmp.eq.s32.totalorder %s29, 0
      %p266 = por %p264, %p265
      %s268 = sadd.s32 %s267, 1
      %p271 = scmp.eq.s32.totalorder %s23, 1
      %p272 = scmp.ne.s32.totalorder %s267, %s269
      %p273 = scmp.eq.s32.totalorder %s23, 0
      %p274 = por %p272, %p273
      %p275 = scmp.ne.s32.totalorder %s267, %s269
      %p276 = scmp.eq.s32.totalorder %s28, 1
      %p277 = por %p275, %p276
      %p278 = scmp.ne.s32.totalorder %s269, %s270
      %p279 = scmp.eq.s32.totalorder %s28, 0
      %p280 = por %p278, %p279
      %p281 = scmp.ne.s32.totalorder %s269, %s270
      %p282 = scmp.eq.s32.totalorder %s29, 1
      %p283 = por %p281, %p282
      %p285 = scmp.ne.s32.totalorder %s270, %s284
      %p286 = scmp.eq.s32.totalorder %s29, 0
      %p287 = por %p285, %p286
      %s289 = sadd.s32 %s288, 1
      %p292 = scmp.eq.s32.totalorder %s23, 1
      %p293 = scmp.ne.s32.totalorder %s288, %s290
      %p294 = scmp.eq.s32.totalorder %s23, 0
      %p295 = por %p293, %p294
      %p296 = scmp.ne.s32.totalorder %s288, %s290
      %p297 = scmp.eq.s32.totalorder %s28, 1
      %p298 = por %p296, %p297
      %p299 = scmp.ne.s32.totalorder %s290, %s291
      %p300 = scmp.eq.s32.totalorder %s28, 0
      %p301 = por %p299, %p300
      %p302 = scmp.ne.s32.totalorder %s290, %s291
      %p303 = scmp.eq.s32.totalorder %s29, 1
      %p304 = por %p302, %p303
      %p306 = scmp.ne.s32.totalorder %s291, %s305
      %p307 = scmp.eq.s32.totalorder %s29, 0
      %p308 = por %p306, %p307
      %s309 = ssub.s32 %s23, %s30
      %p310 = scmp.eq.s32.totalorder %s309, 0
      %s312 = sadd.s32 %s311, 1
      %s313 = scalar_select %p310, %s311, %s312
      %p316 = pneg %p310
      %p317 = scmp.eq.s32.totalorder %s23, 1
      %p318 = por %p316, %p317
      %p319 = scmp.ne.s32.totalorder %s311, %s314
      %p320 = scmp.eq.s32.totalorder %s23, 0
      %p321 = por %p319, %p320
      %p322 = scmp.ne.s32.totalorder %s311, %s314
      %p323 = scmp.eq.s32.totalorder %s28, 1
      %p324 = por %p322, %p323
      %p325 = scmp.ne.s32.totalorder %s314, %s315
      %p326 = scmp.eq.s32.totalorder %s28, 0
      %p327 = por %p325, %p326
      %p328 = scmp.ne.s32.totalorder %s314, %s315
      %p329 = scmp.eq.s32.totalorder %s29, 1
      %p330 = por %p328, %p329
      %p332 = scmp.ne.s32.totalorder %s315, %s331
      %p333 = scmp.eq.s32.totalorder %s29, 0
      %p334 = por %p332, %p333
      %p335 = scmp.le.s32.totalorder 1, %s23
      %p336 = scmp.lt.s32.totalorder %s23, 3
      %p337 = pnand %p335, %p336
      %p338 = pneg %p337
      // Predicated region
      $region9: #{tpu_custom_call.1} parent=5 // pred_check
        _
      $region10: #{tpu_custom_call.1} parent=5 // pred_check_branch
        %340 = sbr.rel (%p337) target = $region12
      $region11: #{tpu_custom_call.1} parent=5 // pred_region
        %s341 = ssub.s32 %s23, 1
        // Predicated region
        $region13: #{tpu_custom_call.1} parent=11 // pred_check
          %p342 = pneg %p70
        $region14: #{tpu_custom_call.1} parent=11 // pred_check_branch
          %344 = sbr.rel (%p342) target = $region16
        $region15: #{tpu_custom_call.1} parent=11 // pred_region
          _
        $region16: #{tpu_custom_call.1} parent=11 // pred_fallthru
          _
        // Predicated region
        $region17: #{tpu_custom_call.1} parent=11 // pred_check
          %p345 = pneg %p91
        $region18: #{tpu_custom_call.1} parent=11 // pred_check_branch
          %347 = sbr.rel (%p345) target = $region20
        $region19: #{tpu_custom_call.1} parent=11 // pred_region
          _
        $region20: #{tpu_custom_call.1} parent=11 // pred_fallthru
          _
        // Predicated region
        $region21: #{tpu_custom_call.1} parent=11 // pred_check
          %p348 = pneg %p112
        $region22: #{tpu_custom_call.1} parent=11 // pred_check_branch
          %350 = sbr.rel (%p348) target = $region24
        $region23: #{tpu_custom_call.1} parent=11 // pred_region
          _
        $region24: #{tpu_custom_call.1} parent=11 // pred_fallthru
          _
        // Predicated region
        $region25: #{tpu_custom_call.1} parent=11 // pred_check
          %p351 = pneg %p133
        $region26: #{tpu_custom_call.1} parent=11 // pred_check_branch
          %353 = sbr.rel (%p351) target = $region28
        $region27: #{tpu_custom_call.1} parent=11 // pred_region
          _
        $region28: #{tpu_custom_call.1} parent=11 // pred_fallthru
          _
        // Predicated region
        $region29: #{tpu_custom_call.1} parent=11 // pred_check
          %p354 = pneg %p154
        $region30: #{tpu_custom_call.1} parent=11 // pred_check_branch
          %356 = sbr.rel (%p354) target = $region32
        $region31: #{tpu_custom_call.1} parent=11 // pred_region
          _
        $region32: #{tpu_custom_call.1} parent=11 // pred_fallthru
          _
        // Predicated region
        $region33: #{tpu_custom_call.1} parent=11 // pred_check
          %p357 = pneg %p175
        $region34: #{tpu_custom_call.1} parent=11 // pred_check_branch
          %359 = sbr.rel (%p357) target = $region36
        $region35: #{tpu_custom_call.1} parent=11 // pred_region
          _
        $region36: #{tpu_custom_call.1} parent=11 // pred_fallthru
          _
        // Predicated region
        $region37: #{tpu_custom_call.1} parent=11 // pred_check
          %p360 = pneg %p196
        $region38: #{tpu_custom_call.1} parent=11 // pred_check_branch
          %362 = sbr.rel (%p360) target = $region40
        $region39: #{tpu_custom_call.1} parent=11 // pred_region
          %s364 = ssub.s32 256, 256
          %365 = vsyncadd [#allocation4], %s364
          %s366 = sshll.u32 [#allocation3], 4
          %s367 = int_to_ptr.vmem [resolvable:$true] %s366
          %372 = dma.hbm_to_vmem [thread:$0]  %s7, 256, %s367, [#allocation4], 64, 64, 4
        $region40: #{tpu_custom_call.1} parent=11 // pred_fallthru
          _
        // Predicated region
        $region41: #{tpu_custom_call.1} parent=11 // pred_check
          %p373 = pneg %p217
        $region42: #{tpu_custom_call.1} parent=11 // pred_check_branch
          %375 = sbr.rel (%p373) target = $region44
        $region43: #{tpu_custom_call.1} parent=11 // pred_region
          _
        $region44: #{tpu_custom_call.1} parent=11 // pred_fallthru
          _
        // Predicated region
        $region45: #{tpu_custom_call.1} parent=11 // pred_check
          %p376 = pneg %p238
        $region46: #{tpu_custom_call.1} parent=11 // pred_check_branch
          %378 = sbr.rel (%p376) target = $region48
        $region47: #{tpu_custom_call.1} parent=11 // pred_region
          _
        $region48: #{tpu_custom_call.1} parent=11 // pred_fallthru
          _
        // Predicated region
        $region49: #{tpu_custom_call.1} parent=11 // pred_check
          %p379 = pneg %p259
        $region50: #{tpu_custom_call.1} parent=11 // pred_check_branch
          %381 = sbr.rel (%p379) target = $region52
        $region51: #{tpu_custom_call.1} parent=11 // pred_region
          _
        $region52: #{tpu_custom_call.1} parent=11 // pred_fallthru
          _
        // Predicated region
        $region53: #{tpu_custom_call.1} parent=11 // pred_check
          %p382 = pneg %p280
        $region54: #{tpu_custom_call.1} parent=11 // pred_check_branch
          %384 = sbr.rel (%p382) target = $region56
        $region55: #{tpu_custom_call.1} parent=11 // pred_region
          _
        $region56: #{tpu_custom_call.1} parent=11 // pred_fallthru
          _
        // Predicated region
        $region57: #{tpu_custom_call.1} parent=11 // pred_check
          %p385 = pneg %p301
        $region58: #{tpu_custom_call.1} parent=11 // pred_check_branch
          %387 = sbr.rel (%p385) target = $region60
        $region59: #{tpu_custom_call.1} parent=11 // pred_region
          _
        $region60: #{tpu_custom_call.1} parent=11 // pred_fallthru
          _
      $region12: #{tpu_custom_call.1} parent=5 // pred_fallthru
        _
      %p388 = scmp.lt.s32.totalorder %s23, 2
      // Predicated region
      $region61: #{tpu_custom_call.1} parent=5 // pred_check
        %p389 = pneg %p388
      $region62: #{tpu_custom_call.1} parent=5 // pred_check_branch
        %391 = sbr.rel (%p389) target = $region64
      $region63: #{tpu_custom_call.1} parent=5 // pred_region
        // Predicated region
        $region65: #{tpu_custom_call.1} parent=63 // pred_check
          %p392 = pneg %p43
        $region66: #{tpu_custom_call.1} parent=63 // pred_check_branch
          %394 = sbr.rel (%p392) target = $region68
        $region67: #{tpu_custom_call.1} parent=63 // pred_region
          %p395 = scmp.lt.s32.totalorder %s23, 1
          %s396 = scalar_select %p395, %s23, 1
          %s397 = smul.addr %s396, 8
          %s398 = scalar_lea.vmem %s0, %s397
        $region68: #{tpu_custom_call.1} parent=63 // pred_fallthru
          _
      $region64: #{tpu_custom_call.1} parent=5 // pred_fallthru
        _
      %p399 = scmp.le.s32.totalorder 1, %s23
      %p400 = scmp.lt.s32.totalorder %s23, 3
      %p401 = pnand %p399, %p400
      %p402 = pneg %p401
      // Predicated region
      $region69: #{tpu_custom_call.1} parent=5 // pred_check
        _
      $region70: #{tpu_custom_call.1} parent=5 // pred_check_branch
        %404 = sbr.rel (%p401) target = $region72
      $region71: #{tpu_custom_call.1} parent=5 // pred_region
        %s405 = ssub.s32 %s23, 1
        // Predicated region
        $region73: #{tpu_custom_call.1} parent=71 // pred_check
          %p406 = pneg %p196
        $region74: #{tpu_custom_call.1} parent=71 // pred_check_branch
          %408 = sbr.rel (%p406) target = $region76
        $region75: #{tpu_custom_call.1} parent=71 // pred_region
          %409 = dma.done [#allocation4], 256
        $region76: #{tpu_custom_call.1} parent=71 // pred_fallthru
          _
        %p410 = scmp.lt.s32.totalorder %s28, 1
        %s411 = scalar_select %p410, %s28, 1
        %s412 = smul.addr %s411, 8
        %s413 = scalar_lea.vmem %s0, %s412
        %p414 = pneg %p49
        %p415 = pneg %p46
        %p416 = pneg %p70
        %p417 = pneg %p67
        %p418 = pneg %p91
        %p419 = pneg %p88
        %p420 = pneg %p112
        %p421 = pneg %p109
        %p422 = pneg %p133
        %p423 = pneg %p130
        %p424 = pneg %p154
        %p425 = pneg %p151
        %p426 = pneg %p175
        %p427 = pneg %p172
        %p428 = pneg %p196
        %p429 = pneg %p193
        %p430 = pneg %p217
        %p431 = pneg %p214
        %p432 = pneg %p238
        %p433 = pneg %p235
        %p434 = pneg %p259
        %p435 = pneg %p256
        %p436 = pneg %p280
        %p437 = pneg %p277
        %p438 = pneg %p301
        %p439 = pneg %p298
        %p440 = pneg %p327
        %p441 = pneg %p324
        %s442 = sand.u32 %s314, 1
        %s443 = scalar_lea.sflag [#allocation5], %s442
        %s444 = sand.u32 %s314, 1
        %s445 = smul.addr %s444, 8
        %s446 = scalar_lea.vmem [#allocation6], %s445
        %p447 = scmp.lt.s32.totalorder %s28, 1
        %s448 = scalar_select %p447, %s28, 1
        %s449 = smul.addr %s448, 8
        %s450 = scalar_lea.vmem %s0, %s449
        %v452 = vld [vmem:[%s450] sm:$0xff]
        %v453 = vpack.c.bf16 %v452, %v452
        %v454 = vld [vmem:[%s1] sm:$0xf]
        %v455 = vld [vmem:[%s1 + $0x4] sm:$0xf]
        %v456 = vld [vmem:[%s1 + $0x8] sm:$0xf]
        %v457 = vld [vmem:[%s1 + $0xc] sm:$0xf]
        %v458 = vld [vmem:[%s2] sm:$0x1]
        %v460 = vlaneseq
        %v461 = vshrl.u32 %v460, 7
        %v462 = vsub.s32 0, %v461
        %v463 = vrot.slane %v458, %v462
        %v469 = vunpack.c.l.b16 %v454
        %v470 = vunpack.c.l.b16 %v455
        %v471 = vunpack.c.l.b16 %v456
        %v472 = vunpack.c.l.b16 %v457
        %v473 = vpack.c.b16 %v470, %v469
        %v474 = vpack.c.b16 %v472, %v471
        %vm477 = vcmask 261120
        %v479 = vsel %vm477, %v453, 0
        %481 = vmatprep.subr.bf16.mxu0 0
        %482 = vmatpush1.bf16.msra.mxu0 %v473
        %483 = vmatprep.subr.bf16.mxu0 0
        %484 = vmatpush1.bf16.msra.mxu0 %v474
        %485 = vmatprep.subr.bf16.mxu0 0
        %486 = vmatpush1.bf16.msra.mxu0 0
        %487 = vmatprep.subr.bf16.mxu0 0
        %488 = vmatpush1.bf16.msra.mxu0 0
        %489 = vmatprep.subr.bf16.mxu0 0
        %490 = vmatpush1.bf16.msra.mxu0 0
        %491 = vmatprep.subr.bf16.mxu0 0
        %492 = vmatpush1.bf16.msra.mxu0 0
        %493 = vmatprep.subr.bf16.mxu0 0
        %494 = vmatpush1.bf16.msra.mxu0 0
        %495 = vmatprep.subr.bf16.mxu0 0
        %496 = vmatpush1.bf16.msra.mxu0 0
        %497 = vmatprep.subr.bf16.mxu0 0
        %498 = vmatpush1.bf16.msra.mxu0 0
        %499 = vmatprep.subr.bf16.mxu0 0
        %500 = vmatpush1.bf16.msra.mxu0 0
        %501 = vmatprep.subr.bf16.mxu0 0
        %502 = vmatpush1.bf16.msra.mxu0 0
        %503 = vmatprep.subr.bf16.mxu0 0
        %504 = vmatpush1.bf16.msra.mxu0 0
        %505 = vmatprep.subr.bf16.mxu0 0
        %506 = vmatpush1.bf16.msra.mxu0 0
        %507 = vmatprep.subr.bf16.mxu0 0
        %508 = vmatpush1.bf16.msra.mxu0 0
        %509 = vmatprep.subr.bf16.mxu0 0
        %510 = vmatpush1.bf16.msra.mxu0 0
        %511 = vmatprep.subr.bf16.mxu0 0
        %512 = vmatpush1.bf16.msra.mxu0 0
        %513 = vmatprep.mubr.bf16.mxu0 0
        %514 = vmatmul.mubr.bf16.gmra.mrb[0].mxu0 %v479
        %v515 = vpop.f32.mrb[0].mxu0
        %v516 = vadd.f32 %v463, %v515
        %v517 = vpop.f32.mrb[0].mxu0
        %v518 = vpop.f32.mrb[0].mxu0
        %v519 = vpop.f32.mrb[0].mxu0
        %520 = vdwg.mxu0
        %v521 = vpack.c.bf16 %v516, %v516
        %523 = vrot.lane.b32.xlu0 %v521, 96
        %v524 = vpop.permute.xlu0 %523
        %vm525 = vcmask 64512
        %v527 = vsel %vm525, %v521, 0
        %v530 = vsel %vm525, %v524, 0
        %532 = vmatprep.subr.bf16.mxu0 0
        %533 = vmatpush1.bf16.xpose.msra.mxu0 %v530
        %534 = vmatprep.subr.bf16.mxu0 0
        %535 = vmatpush1.bf16.xpose.msra.mxu0 0
        %536 = vmatprep.subr.bf16.mxu0 0
        %537 = vmatpush1.bf16.xpose.msra.mxu0 0
        %538 = vmatprep.subr.bf16.mxu0 0
        %539 = vmatpush1.bf16.xpose.msra.mxu0 0
        %540 = vmatprep.subr.bf16.mxu0 0
        %541 = vmatpush1.bf16.xpose.msra.mxu0 0
        %542 = vmatprep.subr.bf16.mxu0 0
        %543 = vmatpush1.bf16.xpose.msra.mxu0 0
        %544 = vmatprep.subr.bf16.mxu0 0
        %545 = vmatpush1.bf16.xpose.msra.mxu0 0
        %546 = vmatprep.subr.bf16.mxu0 0
        %547 = vmatpush1.bf16.xpose.msra.mxu0 0
        %548 = vmatprep.subr.bf16.mxu0 0
        %549 = vmatpush1.bf16.xpose.msra.mxu0 0
        %550 = vmatprep.subr.bf16.mxu0 0
        %551 = vmatpush1.bf16.xpose.msra.mxu0 0
        %552 = vmatprep.subr.bf16.mxu0 0
        %553 = vmatpush1.bf16.xpose.msra.mxu0 0
        %554 = vmatprep.subr.bf16.mxu0 0
        %555 = vmatpush1.bf16.xpose.msra.mxu0 0
        %556 = vmatprep.subr.bf16.mxu0 0
        %557 = vmatpush1.bf16.xpose.msra.mxu0 0
        %558 = vmatprep.subr.bf16.mxu0 0
        %559 = vmatpush1.bf16.xpose.msra.mxu0 0
        %560 = vmatprep.subr.bf16.mxu0 0
        %561 = vmatpush1.bf16.xpose.msra.mxu0 0
        %562 = vmatprep.subr.bf16.mxu0 0
        %563 = vmatpush1.bf16.xpose.msra.mxu0 0
        %564 = vmatprep.mubr.bf16.mxu0 0
        %565 = vmatmul.mubr.bf16.gmra.mrb[0].mxu0 %v527
        %v566 = vpop.f32.mrb[0].mxu0
        %v567 = vadd.f32 0.0, %v566
        %v568 = vpop.f32.mrb[0].mxu0
        %v569 = vpop.f32.mrb[0].mxu0
        %v570 = vpop.f32.mrb[0].mxu0
        %571 = vdwg.mxu0
        %v572 = vsel %vm525, %v567, -inf
        %573 = vmax.xlane.f32.xlu0 %v572
        %v574 = vpop.xlane.xlu0 %573
        %v575 = vsub.f32 %v567, %v574
        %v576 = vpack.c.bf16 %v575, %v575
        %v578 = vmul.bf16 %v576, 1069105081
        %v579 = vpow.bf16.pop %v578
        %v580 = vunpack.c.l.bf16 %v579
        %v581 = vsel %vm525, %v580, 0.0
        %582 = vadd.xlane.f32.xlu0 %v581
        %v583 = vpop.xlane.xlu0 %582
        %584 = vrot.lane.b32.xlu0 %v521, 64
        %v585 = vpop.permute.xlu0 %584
        %v587 = vsel %vm525, %v579, 0
        %vm589 = vcmask 1043456
        %v591 = vsel %vm589, %v585, 0
        %593 = vmatprep.subr.bf16.mxu0 0
        %594 = vmatpush1.bf16.msra.mxu0 %v591
        %595 = vmatprep.subr.bf16.mxu0 0
        %596 = vmatpush1.bf16.msra.mxu0 0
        %597 = vmatprep.subr.bf16.mxu0 0
        %598 = vmatpush1.bf16.msra.mxu0 0
        %599 = vmatprep.subr.bf16.mxu0 0
        %600 = vmatpush1.bf16.msra.mxu0 0
        %601 = vmatprep.subr.bf16.mxu0 0
        %602 = vmatpush1.bf16.msra.mxu0 0
        %603 = vmatprep.subr.bf16.mxu0 0
        %604 = vmatpush1.bf16.msra.mxu0 0
        %605 = vmatprep.subr.bf16.mxu0 0
        %606 = vmatpush1.bf16.msra.mxu0 0
        %607 = vmatprep.subr.bf16.mxu0 0
        %608 = vmatpush1.bf16.msra.mxu0 0
        %609 = vmatprep.subr.bf16.mxu0 0
        %610 = vmatpush1.bf16.msra.mxu0 0
        %611 = vmatprep.subr.bf16.mxu0 0
        %612 = vmatpush1.bf16.msra.mxu0 0
        %613 = vmatprep.subr.bf16.mxu0 0
        %614 = vmatpush1.bf16.msra.mxu0 0
        %615 = vmatprep.subr.bf16.mxu0 0
        %616 = vmatpush1.bf16.msra.mxu0 0
        %617 = vmatprep.subr.bf16.mxu0 0
        %618 = vmatpush1.bf16.msra.mxu0 0
        %619 = vmatprep.subr.bf16.mxu0 0
        %620 = vmatpush1.bf16.msra.mxu0 0
        %621 = vmatprep.subr.bf16.mxu0 0
        %622 = vmatpush1.bf16.msra.mxu0 0
        %623 = vmatprep.subr.bf16.mxu0 0
        %624 = vmatpush1.bf16.msra.mxu0 0
        %625 = vmatprep.mubr.bf16.mxu0 0
        %626 = vmatmul.mubr.bf16.gmra.mrb[0].mxu0 %v587
        %v627 = vpop.f32.mrb[0].mxu0
        %v628 = vadd.f32 0.0, %v627
        %v629 = vpop.f32.mrb[0].mxu0
        %v630 = vpop.f32.mrb[0].mxu0
        %v631 = vpop.f32.mrb[0].mxu0
        %632 = vdwg.mxu0
        %v633 = vrcp.pop %v583
        %v634 = vmul.f32 %v628, %v633
        %635 = vst.msk [vmem:[#allocation2] sm:$0xff] %vm525, %v634
        %636 = vrot.lane.b32.xlu0 %v521, 120
        %v637 = vpop.permute.xlu0 %636
        %638 = vrot.lane.b32.xlu0 %v521, 88
        %v639 = vpop.permute.xlu0 %638
        %v641 = vsel %vm525, %v637, 0
        %v644 = vsel %vm525, %v639, 0
        %646 = vmatprep.subr.bf16.mxu0 0
        %647 = vmatpush1.bf16.xpose.msra.mxu0 %v644
        %648 = vmatprep.subr.bf16.mxu0 0
        %649 = vmatpush1.bf16.xpose.msra.mxu0 0
        %650 = vmatprep.subr.bf16.mxu0 0
        %651 = vmatpush1.bf16.xpose.msra.mxu0 0
        %652 = vmatprep.subr.bf16.mxu0 0
        %653 = vmatpush1.bf16.xpose.msra.mxu0 0
        %654 = vmatprep.subr.bf16.mxu0 0
        %655 = vmatpush1.bf16.xpose.msra.mxu0 0
        %656 = vmatprep.subr.bf16.mxu0 0
        %657 = vmatpush1.bf16.xpose.msra.mxu0 0
        %658 = vmatprep.subr.bf16.mxu0 0
        %659 = vmatpush1.bf16.xpose.msra.mxu0 0
        %660 = vmatprep.subr.bf16.mxu0 0
        %661 = vmatpush1.bf16.xpose.msra.mxu0 0
        %662 = vmatprep.subr.bf16.mxu0 0
        %663 = vmatpush1.bf16.xpose.msra.mxu0 0
        %664 = vmatprep.subr.bf16.mxu0 0
        %665 = vmatpush1.bf16.xpose.msra.mxu0 0
        %666 = vmatprep.subr.bf16.mxu0 0
        %667 = vmatpush1.bf16.xpose.msra.mxu0 0
        %668 = vmatprep.subr.bf16.mxu0 0
        %669 = vmatpush1.bf16.xpose.msra.mxu0 0
        %670 = vmatprep.subr.bf16.mxu0 0
        %671 = vmatpush1.bf16.xpose.msra.mxu0 0
        %672 = vmatprep.subr.bf16.mxu0 0
        %673 = vmatpush1.bf16.xpose.msra.mxu0 0
        %674 = vmatprep.subr.bf16.mxu0 0
        %675 = vmatpush1.bf16.xpose.msra.mxu0 0
        %676 = vmatprep.subr.bf16.mxu0 0
        %677 = vmatpush1.bf16.xpose.msra.mxu0 0
        %678 = vmatprep.mubr.bf16.mxu0 0
        %679 = vmatmul.mubr.bf16.gmra.mrb[0].mxu0 %v641
        %v680 = vpop.f32.mrb[0].mxu0
        %v681 = vadd.f32 0.0, %v680
        %v682 = vpop.f32.mrb[0].mxu0
        %v683 = vpop.f32.mrb[0].mxu0
        %v684 = vpop.f32.mrb[0].mxu0
        %685 = vdwg.mxu0
        %v686 = vsel %vm525, %v681, -inf
        %687 = vmax.xlane.f32.xlu0 %v686
        %v688 = vpop.xlane.xlu0 %687
        %v689 = vsub.f32 %v681, %v688
        %v690 = vpack.c.bf16 %v689, %v689
        %v692 = vmul.bf16 %v690, 1069105081
        %v693 = vpow.bf16.pop %v692
        %v694 = vunpack.c.l.bf16 %v693
        %v695 = vsel %vm525, %v694, 0.0
        %696 = vadd.xlane.f32.xlu0 %v695
        %v697 = vpop.xlane.xlu0 %696
        %698 = vrot.lane.b32.xlu0 %v521, 56
        %v699 = vpop.permute.xlu0 %698
        %v701 = vsel %vm525, %v693, 0
        %v704 = vsel %vm589, %v699, 0
        %706 = vmatprep.subr.bf16.mxu0 0
        %707 = vmatpush1.bf16.msra.mxu0 %v704
        %708 = vmatprep.subr.bf16.mxu0 0
        %709 = vmatpush1.bf16.msra.mxu0 0
        %710 = vmatprep.subr.bf16.mxu0 0
        %711 = vmatpush1.bf16.msra.mxu0 0
        %712 = vmatprep.subr.bf16.mxu0 0
        %713 = vmatpush1.bf16.msra.mxu0 0
        %714 = vmatprep.subr.bf16.mxu0 0
        %715 = vmatpush1.bf16.msra.mxu0 0
        %716 = vmatprep.subr.bf16.mxu0 0
        %717 = vmatpush1.bf16.msra.mxu0 0
        %718 = vmatprep.subr.bf16.mxu0 0
        %719 = vmatpush1.bf16.msra.mxu0 0
        %720 = vmatprep.subr.bf16.mxu0 0
        %721 = vmatpush1.bf16.msra.mxu0 0
        %722 = vmatprep.subr.bf16.mxu0 0
        %723 = vmatpush1.bf16.msra.mxu0 0
        %724 = vmatprep.subr.bf16.mxu0 0
        %725 = vmatpush1.bf16.msra.mxu0 0
        %726 = vmatprep.subr.bf16.mxu0 0
        %727 = vmatpush1.bf16.msra.mxu0 0
        %728 = vmatprep.subr.bf16.mxu0 0
        %729 = vmatpush1.bf16.msra.mxu0 0
        %730 = vmatprep.subr.bf16.mxu0 0
        %731 = vmatpush1.bf16.msra.mxu0 0
        %732 = vmatprep.subr.bf16.mxu0 0
        %733 = vmatpush1.bf16.msra.mxu0 0
        %734 = vmatprep.subr.bf16.mxu0 0
        %735 = vmatpush1.bf16.msra.mxu0 0
        %736 = vmatprep.subr.bf16.mxu0 0
        %737 = vmatpush1.bf16.msra.mxu0 0
        %738 = vmatprep.mubr.bf16.mxu0 0
        %739 = vmatmul.mubr.bf16.gmra.mrb[0].mxu0 %v701
        %v740 = vpop.f32.mrb[0].mxu0
        %v741 = vadd.f32 0.0, %v740
        %v742 = vpop.f32.mrb[0].mxu0
        %v743 = vpop.f32.mrb[0].mxu0
        %v744 = vpop.f32.mrb[0].mxu0
        %745 = vdwg.mxu0
        %v746 = vrcp.pop %v697
        %v747 = vmul.f32 %v741, %v746
        %749 = vrot.lane.b32.xlu0 %v747, 8
        %v750 = vpop.permute.xlu0 %749
        %vm752 = vcmask 130112
        %753 = vst.msk [vmem:[#allocation2] sm:$0xff] %vm752, %v750
        %754 = vrot.lane.b32.xlu0 %v521, 112
        %v755 = vpop.permute.xlu0 %754
        %756 = vrot.lane.b32.xlu0 %v521, 80
        %v757 = vpop.permute.xlu0 %756
        %v759 = vsel %vm525, %v755, 0
        %v762 = vsel %vm525, %v757, 0
        %764 = vmatprep.subr.bf16.mxu0 0
        %765 = vmatpush1.bf16.xpose.msra.mxu0 %v762
        %766 = vmatprep.subr.bf16.mxu0 0
        %767 = vmatpush1.bf16.xpose.msra.mxu0 0
        %768 = vmatprep.subr.bf16.mxu0 0
        %769 = vmatpush1.bf16.xpose.msra.mxu0 0
        %770 = vmatprep.subr.bf16.mxu0 0
        %771 = vmatpush1.bf16.xpose.msra.mxu0 0
        %772 = vmatprep.subr.bf16.mxu0 0
        %773 = vmatpush1.bf16.xpose.msra.mxu0 0
        %774 = vmatprep.subr.bf16.mxu0 0
        %775 = vmatpush1.bf16.xpose.msra.mxu0 0
        %776 = vmatprep.subr.bf16.mxu0 0
        %777 = vmatpush1.bf16.xpose.msra.mxu0 0
        %778 = vmatprep.subr.bf16.mxu0 0
        %779 = vmatpush1.bf16.xpose.msra.mxu0 0
        %780 = vmatprep.subr.bf16.mxu0 0
        %781 = vmatpush1.bf16.xpose.msra.mxu0 0
        %782 = vmatprep.subr.bf16.mxu0 0
        %783 = vmatpush1.bf16.xpose.msra.mxu0 0
        %784 = vmatprep.subr.bf16.mxu0 0
        %785 = vmatpush1.bf16.xpose.msra.mxu0 0
        %786 = vmatprep.subr.bf16.mxu0 0
        %787 = vmatpush1.bf16.xpose.msra.mxu0 0
        %788 = vmatprep.subr.bf16.mxu0 0
        %789 = vmatpush1.bf16.xpose.msra.mxu0 0
        %790 = vmatprep.subr.bf16.mxu0 0
        %791 = vmatpush1.bf16.xpose.msra.mxu0 0
        %792 = vmatprep.subr.bf16.mxu0 0
        %793 = vmatpush1.bf16.xpose.msra.mxu0 0
        %794 = vmatprep.subr.bf16.mxu0 0
        %795 = vmatpush1.bf16.xpose.msra.mxu0 0
        %796 = vmatprep.mubr.bf16.mxu0 0
        %797 = vmatmul.mubr.bf16.gmra.mrb[0].mxu0 %v759
        %v798 = vpop.f32.mrb[0].mxu0
        %v799 = vadd.f32 0.0, %v798
        %v800 = vpop.f32.mrb[0].mxu0
        %v801 = vpop.f32.mrb[0].mxu0
        %v802 = vpop.f32.mrb[0].mxu0
        %803 = vdwg.mxu0
        %v804 = vsel %vm525, %v799, -inf
        %805 = vmax.xlane.f32.xlu0 %v804
        %v806 = vpop.xlane.xlu0 %805
        %v807 = vsub.f32 %v799, %v806
        %v808 = vpack.c.bf16 %v807, %v807
        %v810 = vmul.bf16 %v808, 1069105081
        %v811 = vpow.bf16.pop %v810
        %v812 = vunpack.c.l.bf16 %v811
        %v813 = vsel %vm525, %v812, 0.0
        %814 = vadd.xlane.f32.xlu0 %v813
        %v815 = vpop.xlane.xlu0 %814
        %816 = vrot.lane.b32.xlu0 %v521, 48
        %v817 = vpop.permute.xlu0 %816
        %v819 = vsel %vm525, %v811, 0
        %v822 = vsel %vm589, %v817, 0
        %824 = vmatprep.subr.bf16.mxu0 0
        %825 = vmatpush1.bf16.msra.mxu0 %v822
        %826 = vmatprep.subr.bf16.mxu0 0
        %827 = vmatpush1.bf16.msra.mxu0 0
        %828 = vmatprep.subr.bf16.mxu0 0
        %829 = vmatpush1.bf16.msra.mxu0 0
        %830 = vmatprep.subr.bf16.mxu0 0
        %831 = vmatpush1.bf16.msra.mxu0 0
        %832 = vmatprep.subr.bf16.mxu0 0
        %833 = vmatpush1.bf16.msra.mxu0 0
        %834 = vmatprep.subr.bf16.mxu0 0
        %835 = vmatpush1.bf16.msra.mxu0 0
        %836 = vmatprep.subr.bf16.mxu0 0
        %837 = vmatpush1.bf16.msra.mxu0 0
        %838 = vmatprep.subr.bf16.mxu0 0
        %839 = vmatpush1.bf16.msra.mxu0 0
        %840 = vmatprep.subr.bf16.mxu0 0
        %841 = vmatpush1.bf16.msra.mxu0 0
        %842 = vmatprep.subr.bf16.mxu0 0
        %843 = vmatpush1.bf16.msra.mxu0 0
        %844 = vmatprep.subr.bf16.mxu0 0
        %845 = vmatpush1.bf16.msra.mxu0 0
        %846 = vmatprep.subr.bf16.mxu0 0
        %847 = vmatpush1.bf16.msra.mxu0 0
        %848 = vmatprep.subr.bf16.mxu0 0
        %849 = vmatpush1.bf16.msra.mxu0 0
        %850 = vmatprep.subr.bf16.mxu0 0
        %851 = vmatpush1.bf16.msra.mxu0 0
        %852 = vmatprep.subr.bf16.mxu0 0
        %853 = vmatpush1.bf16.msra.mxu0 0
        %854 = vmatprep.subr.bf16.mxu0 0
        %855 = vmatpush1.bf16.msra.mxu0 0
        %856 = vmatprep.mubr.bf16.mxu0 0
        %857 = vmatmul.mubr.bf16.gmra.mrb[0].mxu0 %v819
        %v858 = vpop.f32.mrb[0].mxu0
        %v859 = vadd.f32 0.0, %v858
        %v860 = vpop.f32.mrb[0].mxu0
        %v861 = vpop.f32.mrb[0].mxu0
        %v862 = vpop.f32.mrb[0].mxu0
        %863 = vdwg.mxu0
        %v864 = vrcp.pop %v815
        %v865 = vmul.f32 %v859, %v864
        %867 = vrot.lane.b32.xlu0 %v865, 16
        %v868 = vpop.permute.xlu0 %867
        %vm870 = vcmask 195712
        %871 = vst.msk [vmem:[#allocation2] sm:$0xff] %vm870, %v868
        %872 = vrot.lane.b32.xlu0 %v521, 104
        %v873 = vpop.permute.xlu0 %872
        %874 = vrot.lane.b32.xlu0 %v521, 72
        %v875 = vpop.permute.xlu0 %874
        %v877 = vsel %vm525, %v873, 0
        %v880 = vsel %vm525, %v875, 0
        %882 = vmatprep.subr.bf16.mxu0 0
        %883 = vmatpush1.bf16.xpose.msra.mxu0 %v880
        %884 = vmatprep.subr.bf16.mxu0 0
        %885 = vmatpush1.bf16.xpose.msra.mxu0 0
        %886 = vmatprep.subr.bf16.mxu0 0
        %887 = vmatpush1.bf16.xpose.msra.mxu0 0
        %888 = vmatprep.subr.bf16.mxu0 0
        %889 = vmatpush1.bf16.xpose.msra.mxu0 0
        %890 = vmatprep.subr.bf16.mxu0 0
        %891 = vmatpush1.bf16.xpose.msra.mxu0 0
        %892 = vmatprep.subr.bf16.mxu0 0
        %893 = vmatpush1.bf16.xpose.msra.mxu0 0
        %894 = vmatprep.subr.bf16.mxu0 0
        %895 = vmatpush1.bf16.xpose.msra.mxu0 0
        %896 = vmatprep.subr.bf16.mxu0 0
        %897 = vmatpush1.bf16.xpose.msra.mxu0 0
        %898 = vmatprep.subr.bf16.mxu0 0
        %899 = vmatpush1.bf16.xpose.msra.mxu0 0
        %900 = vmatprep.subr.bf16.mxu0 0
        %901 = vmatpush1.bf16.xpose.msra.mxu0 0
        %902 = vmatprep.subr.bf16.mxu0 0
        %903 = vmatpush1.bf16.xpose.msra.mxu0 0
        %904 = vmatprep.subr.bf16.mxu0 0
        %905 = vmatpush1.bf16.xpose.msra.mxu0 0
        %906 = vmatprep.subr.bf16.mxu0 0
        %907 = vmatpush1.bf16.xpose.msra.mxu0 0
        %908 = vmatprep.subr.bf16.mxu0 0
        %909 = vmatpush1.bf16.xpose.msra.mxu0 0
        %910 = vmatprep.subr.bf16.mxu0 0
        %911 = vmatpush1.bf16.xpose.msra.mxu0 0
        %912 = vmatprep.subr.bf16.mxu0 0
        %913 = vmatpush1.bf16.xpose.msra.mxu0 0
        %914 = vmatprep.mubr.bf16.mxu0 0
        %915 = vmatmul.mubr.bf16.gmra.mrb[0].mxu0 %v877
        %v916 = vpop.f32.mrb[0].mxu0
        %v917 = vadd.f32 0.0, %v916
        %v918 = vpop.f32.mrb[0].mxu0
        %v919 = vpop.f32.mrb[0].mxu0
        %v920 = vpop.f32.mrb[0].mxu0
        %921 = vdwg.mxu0
        %v922 = vsel %vm525, %v917, -inf
        %923 = vmax.xlane.f32.xlu0 %v922
        %v924 = vpop.xlane.xlu0 %923
        %v925 = vsub.f32 %v917, %v924
        %v926 = vpack.c.bf16 %v925, %v925
        %v928 = vmul.bf16 %v926, 1069105081
        %v929 = vpow.bf16.pop %v928
        %v930 = vunpack.c.l.bf16 %v929
        %v931 = vsel %vm525, %v930, 0.0
        %932 = vadd.xlane.f32.xlu0 %v931
        %v933 = vpop.xlane.xlu0 %932
        %934 = vrot.lane.b32.xlu0 %v521, 40
        %v935 = vpop.permute.xlu0 %934
        %v937 = vsel %vm525, %v929, 0
        %v940 = vsel %vm589, %v935, 0
        %942 = vmatprep.subr.bf16.mxu0 0
        %943 = vmatpush1.bf16.msra.mxu0 %v940
        %944 = vmatprep.subr.bf16.mxu0 0
        %945 = vmatpush1.bf16.msra.mxu0 0
        %946 = vmatprep.subr.bf16.mxu0 0
        %947 = vmatpush1.bf16.msra.mxu0 0
        %948 = vmatprep.subr.bf16.mxu0 0
        %949 = vmatpush1.bf16.msra.mxu0 0
        %950 = vmatprep.subr.bf16.mxu0 0
        %951 = vmatpush1.bf16.msra.mxu0 0
        %952 = vmatprep.subr.bf16.mxu0 0
        %953 = vmatpush1.bf16.msra.mxu0 0
        %954 = vmatprep.subr.bf16.mxu0 0
        %955 = vmatpush1.bf16.msra.mxu0 0
        %956 = vmatprep.subr.bf16.mxu0 0
        %957 = vmatpush1.bf16.msra.mxu0 0
        %958 = vmatprep.subr.bf16.mxu0 0
        %959 = vmatpush1.bf16.msra.mxu0 0
        %960 = vmatprep.subr.bf16.mxu0 0
        %961 = vmatpush1.bf16.msra.mxu0 0
        %962 = vmatprep.subr.bf16.mxu0 0
        %963 = vmatpush1.bf16.msra.mxu0 0
        %964 = vmatprep.subr.bf16.mxu0 0
        %965 = vmatpush1.bf16.msra.mxu0 0
        %966 = vmatprep.subr.bf16.mxu0 0
        %967 = vmatpush1.bf16.msra.mxu0 0
        %968 = vmatprep.subr.bf16.mxu0 0
        %969 = vmatpush1.bf16.msra.mxu0 0
        %970 = vmatprep.subr.bf16.mxu0 0
        %971 = vmatpush1.bf16.msra.mxu0 0
        %972 = vmatprep.subr.bf16.mxu0 0
        %973 = vmatpush1.bf16.msra.mxu0 0
        %974 = vmatprep.mubr.bf16.mxu0 0
        %975 = vmatmul.mubr.bf16.gmra.mrb[0].mxu0 %v937
        %v976 = vpop.f32.mrb[0].mxu0
        %v977 = vadd.f32 0.0, %v976
        %v978 = vpop.f32.mrb[0].mxu0
        %v979 = vpop.f32.mrb[0].mxu0
        %v980 = vpop.f32.mrb[0].mxu0
        %981 = vdwg.mxu0
        %v982 = vrcp.pop %v933
        %v983 = vmul.f32 %v977, %v982
        %985 = vrot.lane.b32.xlu0 %v983, 24
        %v986 = vpop.permute.xlu0 %985
        %vm988 = vcmask 261312
        %989 = vst.msk [vmem:[#allocation2] sm:$0xff] %vm988, %v986
        %v990 = vld [vmem:[#allocation2] sm:$0xff]
        %v991 = vpack.c.bf16 %v990, %v990
        %v992 = vld [vmem:[%s3] sm:$0xf]
        %v993 = vld [vmem:[%s3 + $0x4] sm:$0xf]
        %v994 = vld [vmem:[%s3 + $0x8] sm:$0xf]
        %v995 = vld [vmem:[%s3 + $0xc] sm:$0xf]
        %v996 = vld [vmem:[%s4] sm:$0x1]
        %v998 = vlaneseq
        %v999 = vshrl.u32 %v998, 7
        %v1000 = vsub.s32 0, %v999
        %v1001 = vrot.slane %v996, %v1000
        %v1007 = vunpack.c.l.b16 %v992
        %v1008 = vunpack.c.l.b16 %v993
        %v1009 = vunpack.c.l.b16 %v994
        %v1010 = vunpack.c.l.b16 %v995
        %v1011 = vpack.c.b16 %v1008, %v1007
        %v1012 = vpack.c.b16 %v1010, %v1009
        %v1016 = vsel %vm477, %v991, 0
        %1018 = vmatprep.subr.bf16.mxu0 0
        %1019 = vmatpush1.bf16.msra.mxu0 %v1011
        %1020 = vmatprep.subr.bf16.mxu0 0
        %1021 = vmatpush1.bf16.msra.mxu0 %v1012
        %1022 = vmatprep.subr.bf16.mxu0 0
        %1023 = vmatpush1.bf16.msra.mxu0 0
        %1024 = vmatprep.subr.bf16.mxu0 0
        %1025 = vmatpush1.bf16.msra.mxu0 0
        %1026 = vmatprep.subr.bf16.mxu0 0
        %1027 = vmatpush1.bf16.msra.mxu0 0
        %1028 = vmatprep.subr.bf16.mxu0 0
        %1029 = vmatpush1.bf16.msra.mxu0 0
        %1030 = vmatprep.subr.bf16.mxu0 0
        %1031 = vmatpush1.bf16.msra.mxu0 0
        %1032 = vmatprep.subr.bf16.mxu0 0
        %1033 = vmatpush1.bf16.msra.mxu0 0
        %1034 = vmatprep.subr.bf16.mxu0 0
        %1035 = vmatpush1.bf16.msra.mxu0 0
        %1036 = vmatprep.subr.bf16.mxu0 0
        %1037 = vmatpush1.bf16.msra.mxu0 0
        %1038 = vmatprep.subr.bf16.mxu0 0
        %1039 = vmatpush1.bf16.msra.mxu0 0
        %1040 = vmatprep.subr.bf16.mxu0 0
        %1041 = vmatpush1.bf16.msra.mxu0 0
        %1042 = vmatprep.subr.bf16.mxu0 0
        %1043 = vmatpush1.bf16.msra.mxu0 0
        %1044 = vmatprep.subr.bf16.mxu0 0
        %1045 = vmatpush1.bf16.msra.mxu0 0
        %1046 = vmatprep.subr.bf16.mxu0 0
        %1047 = vmatpush1.bf16.msra.mxu0 0
        %1048 = vmatprep.subr.bf16.mxu0 0
        %1049 = vmatpush1.bf16.msra.mxu0 0
        %1050 = vmatprep.mubr.bf16.mxu0 0
        %1051 = vmatmul.mubr.bf16.gmra.mrb[0].mxu0 %v1016
        %v1052 = vpop.f32.mrb[0].mxu0
        %v1053 = vadd.f32 %v1001, %v1052
        %v1054 = vpop.f32.mrb[0].mxu0
        %v1055 = vpop.f32.mrb[0].mxu0
        %v1056 = vpop.f32.mrb[0].mxu0
        %1057 = vdwg.mxu0
        %v1058 = vadd.f32 %v452, %v1053
        %v1059 = vsel %vm477, %v1058, 0.0
        %1060 = vadd.xlane.f32.xlu0 %v1059
        %v1061 = vpop.xlane.xlu0 %1060
        %v1062 = vrcp.pop 32.0
        %v1063 = vmul.f32 %v1061, %v1062
        %v1064 = vmul.f32 %v1058, %v1058
        %v1065 = vsel %vm477, %v1064, 0.0
        %1066 = vadd.xlane.f32.xlu0 %v1065
        %v1067 = vpop.xlane.xlu0 %1066
        %v1068 = vmul.f32 %v1067, %v1062
        %v1069 = vmul.f32 %v1063, %v1063
        %v1070 = vsub.f32 %v1068, %v1069
        %v1071 = vmax.f32 %v1070, 0.0
        %v1072 = vsub.f32 %v1058, %v1063
        %v1073 = vadd.f32 %v1071, 1e-05
        %v1074 = vrsqrt.pop %v1073
        %v1075 = vmul.f32 %v1072, %v1074
        %v1076 = vld [vmem:[%s5] sm:$0x1]
        %v1078 = vlaneseq
        %v1079 = vshrl.u32 %v1078, 7
        %v1080 = vsub.s32 0, %v1079
        %v1081 = vrot.slane %v1076, %v1080
        %v1083 = vmul.f32 %v1075, %v1081
        %v1084 = vld [vmem:[%s6] sm:$0x1]
        %v1086 = vlaneseq
        %v1087 = vshrl.u32 %v1086, 7
        %v1088 = vsub.s32 0, %v1087
        %v1089 = vrot.slane %v1084, %v1088
        %v1091 = vadd.f32 %v1083, %v1089
        %v1092 = vpack.c.bf16 %v1091, %v1091
        %v1093 = vld [vmem:[#allocation3] sm:$0xf]
        %v1094 = vld [vmem:[#allocation3 + $0x4] sm:$0xf]
        %v1095 = vld [vmem:[#allocation3 + $0x8] sm:$0xf]
        %v1096 = vld [vmem:[#allocation3 + $0xc] sm:$0xf]
        %v1097 = vld [vmem:[%s8] sm:$0x1]
        %v1099 = vlaneseq
        %v1100 = vshrl.u32 %v1099, 7
        %v1101 = vsub.s32 0, %v1100
        %v1102 = vrot.slane %v1097, %v1101
        %v1108 = vunpack.c.l.b16 %v1093
        %v1109 = vunpack.c.l.b16 %v1094
        %v1110 = vunpack.c.l.b16 %v1095
        %v1111 = vunpack.c.l.b16 %v1096
        %v1112 = vpack.c.b16 %v1109, %v1108
        %v1113 = vpack.c.b16 %v1111, %v1110
        %v1117 = vsel %vm477, %v1092, 0
        %1119 = vmatprep.subr.bf16.mxu0 0
        %1120 = vmatpush1.bf16.msra.mxu0 %v1112
        %1121 = vmatprep.subr.bf16.mxu0 0
        %1122 = vmatpush1.bf16.msra.mxu0 %v1113
        %1123 = vmatprep.subr.bf16.mxu0 0
        %1124 = vmatpush1.bf16.msra.mxu0 0
        %1125 = vmatprep.subr.bf16.mxu0 0
        %1126 = vmatpush1.bf16.msra.mxu0 0
        %1127 = vmatprep.subr.bf16.mxu0 0
        %1128 = vmatpush1.bf16.msra.mxu0 0
        %1129 = vmatprep.subr.bf16.mxu0 0
        %1130 = vmatpush1.bf16.msra.mxu0 0
        %1131 = vmatprep.subr.bf16.mxu0 0
        %1132 = vmatpush1.bf16.msra.mxu0 0
        %1133 = vmatprep.subr.bf16.mxu0 0
        %1134 = vmatpush1.bf16.msra.mxu0 0
        %1135 = vmatprep.subr.bf16.mxu0 0
        %1136 = vmatpush1.bf16.msra.mxu0 0
        %1137 = vmatprep.subr.bf16.mxu0 0
        %1138 = vmatpush1.bf16.msra.mxu0 0
        %1139 = vmatprep.subr.bf16.mxu0 0
        %1140 = vmatpush1.bf16.msra.mxu0 0
        %1141 = vmatprep.subr.bf16.mxu0 0
        %1142 = vmatpush1.bf16.msra.mxu0 0
        %1143 = vmatprep.subr.bf16.mxu0 0
        %1144 = vmatpush1.bf16.msra.mxu0 0
        %1145 = vmatprep.subr.bf16.mxu0 0
        %1146 = vmatpush1.bf16.msra.mxu0 0
        %1147 = vmatprep.subr.bf16.mxu0 0
        %1148 = vmatpush1.bf16.msra.mxu0 0
        %1149 = vmatprep.subr.bf16.mxu0 0
        %1150 = vmatpush1.bf16.msra.mxu0 0
        %1151 = vmatprep.mubr.bf16.mxu0 0
        %1152 = vmatmul.mubr.bf16.gmra.mrb[0].mxu0 %v1117
        %v1153 = vpop.f32.mrb[0].mxu0
        %v1154 = vadd.f32 %v1102, %v1153
        %v1155 = vpop.f32.mrb[0].mxu0
        %v1156 = vpop.f32.mrb[0].mxu0
        %v1157 = vpop.f32.mrb[0].mxu0
        %1158 = vdwg.mxu0
        %v1159 = vmax.f32 %v1154, 0.0
        %v1160 = vpack.c.bf16 %v1159, %v1159
        %v1161 = vld [vmem:[%s9] sm:$0xf]
        %v1162 = vld [vmem:[%s9 + $0x4] sm:$0xf]
        %v1163 = vld [vmem:[%s9 + $0x8] sm:$0xf]
        %v1164 = vld [vmem:[%s9 + $0xc] sm:$0xf]
        %v1165 = vld [vmem:[%s9 + $0x10] sm:$0xf]
        %v1166 = vld [vmem:[%s9 + $0x14] sm:$0xf]
        %v1167 = vld [vmem:[%s9 + $0x18] sm:$0xf]
        %v1168 = vld [vmem:[%s9 + $0x1c] sm:$0xf]
        %v1169 = vld [vmem:[%s10] sm:$0x1]
        %v1171 = vlaneseq
        %v1172 = vshrl.u32 %v1171, 7
        %v1173 = vsub.s32 0, %v1172
        %v1174 = vrot.slane %v1169, %v1173
        %v1184 = vunpack.c.l.b16 %v1161
        %v1185 = vunpack.c.l.b16 %v1162
        %v1186 = vunpack.c.l.b16 %v1163
        %v1187 = vunpack.c.l.b16 %v1164
        %v1188 = vunpack.c.l.b16 %v1165
        %v1189 = vunpack.c.l.b16 %v1166
        %v1190 = vunpack.c.l.b16 %v1167
        %v1191 = vunpack.c.l.b16 %v1168
        %v1192 = vpack.c.b16 %v1185, %v1184
        %v1193 = vpack.c.b16 %v1187, %v1186
        %v1194 = vpack.c.b16 %v1189, %v1188
        %v1195 = vpack.c.b16 %v1191, %v1190
        %vm1200 = vcmask 523264
        %v1202 = vsel %vm1200, %v1160, 0
        %1204 = vmatprep.subr.bf16.mxu0 0
        %1205 = vmatpush1.bf16.msra.mxu0 %v1192
        %1206 = vmatprep.subr.bf16.mxu0 0
        %1207 = vmatpush1.bf16.msra.mxu0 %v1193
        %1208 = vmatprep.subr.bf16.mxu0 0
        %1209 = vmatpush1.bf16.msra.mxu0 %v1194
        %1210 = vmatprep.subr.bf16.mxu0 0
        %1211 = vmatpush1.bf16.msra.mxu0 %v1195
        %1212 = vmatprep.subr.bf16.mxu0 0
        %1213 = vmatpush1.bf16.msra.mxu0 0
        %1214 = vmatprep.subr.bf16.mxu0 0
        %1215 = vmatpush1.bf16.msra.mxu0 0
        %1216 = vmatprep.subr.bf16.mxu0 0
        %1217 = vmatpush1.bf16.msra.mxu0 0
        %1218 = vmatprep.subr.bf16.mxu0 0
        %1219 = vmatpush1.bf16.msra.mxu0 0
        %1220 = vmatprep.subr.bf16.mxu0 0
        %1221 = vmatpush1.bf16.msra.mxu0 0
        %1222 = vmatprep.subr.bf16.mxu0 0
        %1223 = vmatpush1.bf16.msra.mxu0 0
        %1224 = vmatprep.subr.bf16.mxu0 0
        %1225 = vmatpush1.bf16.msra.mxu0 0
        %1226 = vmatprep.subr.bf16.mxu0 0
        %1227 = vmatpush1.bf16.msra.mxu0 0
        %1228 = vmatprep.subr.bf16.mxu0 0
        %1229 = vmatpush1.bf16.msra.mxu0 0
        %1230 = vmatprep.subr.bf16.mxu0 0
        %1231 = vmatpush1.bf16.msra.mxu0 0
        %1232 = vmatprep.subr.bf16.mxu0 0
        %1233 = vmatpush1.bf16.msra.mxu0 0
        %1234 = vmatprep.subr.bf16.mxu0 0
        %1235 = vmatpush1.bf16.msra.mxu0 0
        %1236 = vmatprep.mubr.bf16.mxu0 0
        %1237 = vmatmul.mubr.bf16.gmra.mrb[0].mxu0 %v1202
        %v1238 = vpop.f32.mrb[0].mxu0
        %v1239 = vadd.f32 %v1174, %v1238
        %v1240 = vpop.f32.mrb[0].mxu0
        %v1241 = vpop.f32.mrb[0].mxu0
        %v1242 = vpop.f32.mrb[0].mxu0
        %1243 = vdwg.mxu0
        %v1244 = vadd.f32 %v1091, %v1239
        %v1245 = vsel %vm477, %v1244, 0.0
        %1246 = vadd.xlane.f32.xlu0 %v1245
        %v1247 = vpop.xlane.xlu0 %1246
        %v1248 = vmul.f32 %v1247, %v1062
        %v1249 = vmul.f32 %v1244, %v1244
        %v1250 = vsel %vm477, %v1249, 0.0
        %1251 = vadd.xlane.f32.xlu0 %v1250
        %v1252 = vpop.xlane.xlu0 %1251
        %v1253 = vmul.f32 %v1252, %v1062
        %v1254 = vmul.f32 %v1248, %v1248
        %v1255 = vsub.f32 %v1253, %v1254
        %v1256 = vmax.f32 %v1255, 0.0
        %v1257 = vsub.f32 %v1244, %v1248
        %v1258 = vadd.f32 %v1256, 1e-05
        %v1259 = vrsqrt.pop %v1258
        %v1260 = vmul.f32 %v1257, %v1259
        %v1261 = vld [vmem:[%s11] sm:$0x1]
        %v1263 = vlaneseq
        %v1264 = vshrl.u32 %v1263, 7
        %v1265 = vsub.s32 0, %v1264
        %v1266 = vrot.slane %v1261, %v1265
        %v1268 = vmul.f32 %v1260, %v1266
        %v1269 = vld [vmem:[%s12] sm:$0x1]
        %v1271 = vlaneseq
        %v1272 = vshrl.u32 %v1271, 7
        %v1273 = vsub.s32 0, %v1272
        %v1274 = vrot.slane %v1269, %v1273
        %v1276 = vadd.f32 %v1268, %v1274
        %1277 = vst.msk [vmem:[%s446] sm:$0xff] %vm477, %v1276
        %s1278 = sand.u32 %s314, 1
        %s1279 = scalar_lea.sflag [#allocation5], %s1278
        %s1280 = sand.u32 %s314, 1
        %s1281 = smul.addr %s1280, 8
        %s1282 = scalar_lea.vmem [#allocation6], %s1281
        // Predicated region
        $region77: #{tpu_custom_call.1} parent=71 // pred_check
          %p1283 = pneg %p324
        $region78: #{tpu_custom_call.1} parent=71 // pred_check_branch
          %1285 = sbr.rel (%p1283) target = $region80
        $region79: #{tpu_custom_call.1} parent=71 // pred_region
          %s1287 = ssub.s32 128, 128
          %1288 = vsyncadd %s1279, %s1287
          %s1289 = smul.addr %s28, 128
          %s1290 = scalar_lea.hbm %s13, %s1289
          %s1292 = sshll.u32 %s1282, 4
          %s1293 = int_to_ptr.vmem [resolvable:$true] %s1292
          %1295 = dma.vmem_to_hbm [thread:$0]  %s1293, 128, %s1290, %s1279
        $region80: #{tpu_custom_call.1} parent=71 // pred_fallthru
          _
      $region72: #{tpu_custom_call.1} parent=5 // pred_fallthru
        _
      %p1296 = scmp.le.s32.totalorder 2, %s23
      // Predicated region
      $region81: #{tpu_custom_call.1} parent=5 // pred_check
        %p1297 = pneg %p1296
      $region82: #{tpu_custom_call.1} parent=5 // pred_check_branch
        %1299 = sbr.rel (%p1297) target = $region84
      $region83: #{tpu_custom_call.1} parent=5 // pred_region
        %s1300 = ssub.s32 %s23, 2
        // Predicated region
        $region85: #{tpu_custom_call.1} parent=83 // pred_check
          %p1301 = pneg %p330
        $region86: #{tpu_custom_call.1} parent=83 // pred_check_branch
          %1303 = sbr.rel (%p1301) target = $region88
        $region87: #{tpu_custom_call.1} parent=83 // pred_region
          %s1304 = sand.u32 %s315, 1
          %s1305 = scalar_lea.sflag [#allocation5], %s1304
          %s1306 = sand.u32 %s315, 1
          %s1307 = smul.addr %s1306, 8
          %s1308 = scalar_lea.vmem [#allocation6], %s1307
          %1309 = dma.done %s1305, 128
        $region88: #{tpu_custom_call.1} parent=83 // pred_fallthru
          _
      $region84: #{tpu_custom_call.1} parent=5 // pred_fallthru
        _
    $region6: #{tpu_custom_call.1} parent=1 // loop_footer
      %s27 = sadd.s32 1, %s23
    $region7: #{tpu_custom_call.1} parent=1 // loop_footer_branch
      %22 = sbr.rel target = $region3
    $region8: #{tpu_custom_call.1} parent=1 // loop_exit
      _
    %1310 = vsyncpa [#allocation4], 1
    %s1311 = scalar_lea.sflag [#allocation4], 1
    %1312 = vsyncpa %s1311, 1
    %1313 = vsyncpa [#allocation5], 1
    %s1314 = scalar_lea.sflag [#allocation5], 1
    %1315 = vsyncpa %s1314, 1

</llo_original>
